<compile_context>
chip_gen: v7x
topology: tpu7x:2x2x1
jax: 0.10.0
libtpu: 0.0.40
codegen_flags: <defaults>
</compile_context>

<pallas_src>
import jax
import jax.numpy as jnp
from jax import lax
from jax.experimental import pallas as pl
# (pallas.tpu helpers are not needed: the whole forward is one un-gridded
#  pallas_call whose operands default to whole-array VMEM blocks.)

# ------------------------------ model configuration ------------------------------
B = 2                    # batch
S = 8                    # spectral_size (conv in_channels)
P = 4                    # patch_size -> spatial P x P
DIM = 32                 # transformer dim == conv2d_out
HEADS = 2
DIM_HEADS = DIM          # dim_heads = dim (as in the module)
INNER = HEADS * DIM_HEADS            # 64
MLP_DIM = 8
NUM_CLASSES = 8
HID = 2 * DIM                        # classifier hidden width
KH = KW = 5
PAD = 2
PP = P + 2 * PAD                     # padded spatial extent = 8
N_PIX = P * P                        # 16
N_TOK = N_PIX + 1                    # cls + pixels = 17
LN_EPS = 1e-5
BN_EPS = 1e-5
ATTN_SCALE = DIM_HEADS ** (-0.5)
SQRT1_2 = 0.7071067811865476


# =============================== the fused kernel =================================
def hsinet_kernel(
    x_rows_ref,                 # (B*PP*PP, S)   padded pixels, channels last
    wconv_ref,                  # (KH*KW*S, DIM) im2col weight, (di, dj, s) row order
    cscale_ref, cshift_ref,     # (1, DIM)       conv bias + BatchNorm2d(eval) folded
    cls_ref,                    # (1, DIM)
    pos_ref,                    # (N_TOK, DIM)
    pscale_ref,                 # (1, 1)
    ln1g_ref, ln1b_ref,         # (1, DIM)
    wq_ref, wk_ref, wv_ref,     # (DIM, INNER)   pre-split qkv weights
    wo_ref,                     # (INNER, DIM)
    bo_ref,                     # (1, DIM)
    ln2g_ref, ln2b_ref,         # (1, DIM)
    w1_ref, b1_ref,             # (DIM, MLP_DIM), (1, MLP_DIM)
    w2_ref, b2_ref,             # (MLP_DIM, DIM), (1, DIM)
    wc1_ref, bc1_ref,           # (DIM, HID), (1, HID)
    bns_ref, bnsh_ref,          # (1, HID)       BatchNorm1d(eval) folded
    wc2_ref, bc2_ref,           # (HID, NUM_CLASSES), (1, NUM_CLASSES)
    out_ref,                    # (B, NUM_CLASSES)
):
    # ---- conv 5x5 (padding 2) as one im2col matmul built from shifted row views ----
    # x_rows[m, s] = x_padded[b, s, i', j']  with m = b*PP*PP + i'*PP + j'
    # patch column block k = di*KW + dj needs rows (m + di*PP + dj) for every m.
    x_rows = x_rows_ref[...]                                  # (128, S)
    cols = []
    for di in range(KH):
        for dj in range(KW):
            off = di * PP + dj
            if off == 0:
                cols.append(x_rows)
            else:   # circular shift "up" by `off`; wrapped rows are never used
                cols.append(jnp.concatenate([x_rows[off:, :], x_rows[:off, :]], axis=0))
    patches = jnp.concatenate(cols, axis=1)                   # (128, 25*S)
    conv = jnp.dot(patches, wconv_ref[...],
                   preferred_element_type=jnp.float32)        # (128, DIM)
    feat = jnp.maximum(conv * cscale_ref[...] + cshift_ref[...], 0.0)   # BN(eval)+ReLU

    # ---- tokens: [cls, 16 valid pixels (row-major)] per batch + scaled pos-emb ----
    pos = pos_ref[...] * pscale_ref[...]                      # (N_TOK, DIM)
    blocks = []
    for b in range(B):
        rows = [cls_ref[...]]
        for i in range(P):
            r0 = b * PP * PP + i * PP                         # valid pixels (i, 0..P-1)
            rows.append(feat[r0:r0 + P, :])
        blocks.append(jnp.concatenate(rows, axis=0) + pos)    # (N_TOK, DIM)
    x = jnp.concatenate(blocks, axis=0)                       # (B*N_TOK, DIM) = (34, 32)

    def layer_norm(t, g_ref, b_ref):
        mu = jnp.mean(t, axis=-1, keepdims=True)
        var = jnp.mean((t - mu) ** 2, axis=-1, keepdims=True)
        return (t - mu) * lax.rsqrt(var + LN_EPS) * g_ref[...] + b_ref[...]

    # ---- transformer layer (depth = 1): x += Attn(LN1(x)); x += MLP(LN2(x)) ----
    xn = layer_norm(x, ln1g_ref, ln1b_ref)                    # (34, DIM)
    q_all = jnp.dot(xn, wq_ref[...], preferred_element_type=jnp.float32)   # (34, INNER)
    k_all = jnp.dot(xn, wk_ref[...], preferred_element_type=jnp.float32)
    v_all = jnp.dot(xn, wv_ref[...], preferred_element_type=jnp.float32)

    batch_outs = []
    for b in range(B):                                        # static, B = 2
        r0, r1 = b * N_TOK, (b + 1) * N_TOK
        qb, kb, vb = q_all[r0:r1, :], k_all[r0:r1, :], v_all[r0:r1, :]
        head_outs = []
        for h in range(HEADS):                                # static, HEADS = 2
            c0, c1 = h * DIM_HEADS, (h + 1) * DIM_HEADS
            qh, kh, vh = qb[:, c0:c1], kb[:, c0:c1], vb[:, c0:c1]
            dots = lax.dot_general(qh, kh, (((1,), (1,)), ((), ())),
                                   preferred_element_type=jnp.float32) * ATTN_SCALE
            dots = dots - jnp.max(dots, axis=-1, keepdims=True)
            e = jnp.exp(dots)
            attn = e * pl.reciprocal(jnp.sum(e, axis=-1, keepdims=True), approx=True)
            head_outs.append(jnp.dot(attn, vh, preferred_element_type=jnp.float32))
        batch_outs.append(jnp.concatenate(head_outs, axis=1))  # (N_TOK, INNER)
    attn_cat = jnp.concatenate(batch_outs, axis=0)              # (34, INNER)
    # single output projection over all batches/heads
    x = x + jnp.dot(attn_cat, wo_ref[...],
                    preferred_element_type=jnp.float32) + bo_ref[...]

    xn2 = layer_norm(x, ln2g_ref, ln2b_ref)
    h1 = jnp.dot(xn2, w1_ref[...], preferred_element_type=jnp.float32) + b1_ref[...]
    h1 = 0.5 * h1 * (1.0 + lax.erf(h1 * SQRT1_2))               # exact nn.GELU()
    x = x + jnp.dot(h1, w2_ref[...], preferred_element_type=jnp.float32) + b2_ref[...]

    # ---- center-token logit (token index N_TOK // 2, as in the PyTorch model) ----
    c = N_TOK // 2
    logit = jnp.concatenate(
        [x[b * N_TOK + c: b * N_TOK + c + 1, :] for b in range(B)], axis=0)   # (B, DIM)

    # ---- classifier MLP: Linear -> BN1d(eval) -> [Dropout=id] -> ReLU -> Linear ----
    h = jnp.dot(logit, wc1_ref[...], preferred_element_type=jnp.float32) + bc1_ref[...]
    h = jnp.maximum(h * bns_ref[...] + bnsh_ref[...], 0.0)
    out_ref[...] = jnp.dot(h, wc2_ref[...],
                           preferred_element_type=jnp.float32) + bc2_ref[...]


# ============================== wrapper / parameters ===============================
def prepare_kernel_params(p):
    """One-time fold/transpose of PyTorch-layout params into kernel-friendly layouts."""
    kp = {}
    # conv2d_features: Conv2d(S, DIM, 5, pad=2) weight (OIHW) -> im2col (di,dj,s) rows
    kp["wconv"] = jnp.transpose(p["conv_w"], (2, 3, 1, 0)).reshape(KH * KW * S, DIM)
    s2 = p["bn2_g"] / jnp.sqrt(p["bn2_rv"] + BN_EPS)
    kp["cscale"] = s2[None, :]
    kp["cshift"] = ((p["conv_b"] - p["bn2_rm"]) * s2 + p["bn2_b"])[None, :]
    # tokens
    kp["cls"] = p["cls_token"].reshape(1, DIM)
    kp["pos"] = p["pos_emb"].reshape(N_TOK, DIM)
    kp["pos_scale"] = p["pos_scale"].reshape(1, 1)
    # transformer layer
    kp["ln1_g"], kp["ln1_b"] = p["ln1_g"][None, :], p["ln1_b"][None, :]
    kp["wq"] = p["wqkv"][0:INNER, :].T                       # (DIM, INNER)
    kp["wk"] = p["wqkv"][INNER:2 * INNER, :].T
    kp["wv"] = p["wqkv"][2 * INNER:3 * INNER, :].T
    kp["wo"] = p["wo"].T                                      # (INNER, DIM)
    kp["bo"] = p["bo"][None, :]
    kp["ln2_g"], kp["ln2_b"] = p["ln2_g"][None, :], p["ln2_b"][None, :]
    kp["w1"], kp["b1"] = p["w1"].T, p["b1"][None, :]
    kp["w2"], kp["b2"] = p["w2"].T, p["b2"][None, :]
    # classifier MLP (+ folded BatchNorm1d eval)
    kp["wc1"], kp["bc1"] = p["fc1_w"].T, p["fc1_b"][None, :]
    s1 = p["bn1_g"] / jnp.sqrt(p["bn1_rv"] + BN_EPS)
    kp["bn_scale"] = s1[None, :]
    kp["bn_shift"] = (p["bn1_b"] - p["bn1_rm"] * s1)[None, :]
    kp["wc2"], kp["bc2"] = p["fc2_w"].T, p["fc2_b"][None, :]
    return {k: v.astype(jnp.float32) for k, v in kp.items()}


@jax.jit
def hsinet_forward(x, kp):
    """x: (B, S, P, P) NCHW.  Returns (logits, None, None) like the PyTorch forward."""
    # TODO(synk): left/right auxiliary branches (token-mean outputs) and train-mode
    #             dropout/BatchNorm are not implemented; inference path for x only.
    # Only JAX-side glue: a single pad + transpose + reshape fusion (2 KiB array).
    xp = jnp.pad(x, ((0, 0), (0, 0), (PAD, PAD), (PAD, PAD)))           # (B, S, PP, PP)
    x_rows = jnp.transpose(xp, (0, 2, 3, 1)).reshape(B * PP * PP, S)    # (128, S)
    logits = pl.pallas_call(
        hsinet_kernel,
        out_shape=jax.ShapeDtypeStruct((B, NUM_CLASSES), jnp.float32),
    )(x_rows, kp["wconv"], kp["cscale"], kp["cshift"],
      kp["cls"], kp["pos"], kp["pos_scale"],
      kp["ln1_g"], kp["ln1_b"], kp["wq"], kp["wk"], kp["wv"], kp["wo"], kp["bo"],
      kp["ln2_g"], kp["ln2_b"], kp["w1"], kp["b1"], kp["w2"], kp["b2"],
      kp["wc1"], kp["bc1"], kp["bn_scale"], kp["bn_shift"], kp["wc2"], kp["bc2"])
    return logits, None, None


def init_params(key):
    """PyTorch-layout parameters (eval-mode running stats included)."""
    ks = list(jax.random.split(key, 32))
    nrm = lambda k, shp, std=0.05: (jax.random.normal(k, shp) * std).astype(jnp.float32)
    uni = lambda k, shp: jax.random.uniform(k, shp, jnp.float32, 0.5, 1.5)
    p = {}
    p["conv_w"] = nrm(ks[0], (DIM, S, KH, KW))              # OIHW
    p["conv_b"] = nrm(ks[1], (DIM,))
    p["bn2_g"], p["bn2_b"] = 1.0 + nrm(ks[2], (DIM,), 0.1), nrm(ks[3], (DIM,), 0.1)
    p["bn2_rm"], p["bn2_rv"] = nrm(ks[4], (DIM,), 0.1), uni(ks[5], (DIM,))
    p["cls_token"] = nrm(ks[6], (1, 1, DIM), 1.0)
    p["pos_emb"] = nrm(ks[7], (1, N_TOK, DIM), 1.0)
    p["pos_scale"] = jnp.full((1,), 0.01, jnp.float32)
    p["ln1_g"], p["ln1_b"] = 1.0 + nrm(ks[8], (DIM,), 0.1), nrm(ks[9], (DIM,), 0.1)
    p["wqkv"] = nrm(ks[10], (3 * INNER, DIM))               # to_qkv (bias=False)
    p["wo"], p["bo"] = nrm(ks[11], (DIM, INNER)), nrm(ks[12], (DIM,))
    p["ln2_g"], p["ln2_b"] = 1.0 + nrm(ks[13], (DIM,), 0.1), nrm(ks[14], (DIM,), 0.1)
    p["w1"], p["b1"] = nrm(ks[15], (MLP_DIM, DIM)), nrm(ks[16], (MLP_DIM,))
    p["w2"], p["b2"] = nrm(ks[17], (DIM, MLP_DIM)), nrm(ks[18], (DIM,))
    p["fc1_w"], p["fc1_b"] = nrm(ks[19], (HID, DIM)), nrm(ks[20], (HID,))
    p["bn1_g"], p["bn1_b"] = 1.0 + nrm(ks[21], (HID,), 0.1), nrm(ks[22], (HID,), 0.1)
    p["bn1_rm"], p["bn1_rv"] = nrm(ks[23], (HID,), 0.1), uni(ks[24], (HID,))
    p["fc2_w"], p["fc2_b"] = nrm(ks[25], (NUM_CLASSES, HID)), nrm(ks[26], (NUM_CLASSES,))
    return p


# ============================ pure-JAX reference (eval) ============================
def hsinet_reference(x, p):
    y = lax.conv_general_dilated(x, p["conv_w"], (1, 1), ((PAD, PAD), (PAD, PAD)),
                                 dimension_numbers=("NCHW", "OIHW", "NCHW"))
    y = y + p["conv_b"][None, :, None, None]
    s2 = p["bn2_g"] / jnp.sqrt(p["bn2_rv"] + BN_EPS)
    y = (y - p["bn2_rm"][None, :, None, None]) * s2[None, :, None, None] \
        + p["bn2_b"][None, :, None, None]
    y = jnp.maximum(y, 0.0)
    tok = jnp.transpose(y, (0, 2, 3, 1)).reshape(B, N_PIX, DIM)   # 'b s w h -> b (w h) s'
    cls = jnp.broadcast_to(p["cls_token"], (B, 1, DIM))
    t = jnp.concatenate([cls, tok], axis=1) + p["pos_emb"] * p["pos_scale"]

    def ln(z, g, b):
        mu = z.mean(-1, keepdims=True)
        var = ((z - mu) ** 2).mean(-1, keepdims=True)
        return (z - mu) / jnp.sqrt(var + LN_EPS) * g + b

    zn = ln(t, p["ln1_g"], p["ln1_b"])
    qkv = zn @ p["wqkv"].T
    q, k, v = jnp.split(qkv, 3, axis=-1)
    split = lambda u: u.reshape(B, N_TOK, HEADS, DIM_HEADS).transpose(0, 2, 1, 3)
    q, k, v = split(q), split(k), split(v)
    dots = jnp.einsum("bhid,bhjd->bhij", q, k) * ATTN_SCALE
    attn = jax.nn.softmax(dots, axis=-1)
    o = jnp.einsum("bhij,bhjd->bhid", attn, v)
    o = o.transpose(0, 2, 1, 3).reshape(B, N_TOK, INNER)
    t = t + o @ p["wo"].T + p["bo"]

    zn2 = ln(t, p["ln2_g"], p["ln2_b"])
    h1 = zn2 @ p["w1"].T + p["b1"]
    h1 = 0.5 * h1 * (1.0 + lax.erf(h1 * SQRT1_2))
    t = t + h1 @ p["w2"].T + p["b2"]

    logit = t[:, N_TOK // 2, :]
    h = logit @ p["fc1_w"].T + p["fc1_b"]
    s1 = p["bn1_g"] / jnp.sqrt(p["bn1_rv"] + BN_EPS)
    h = (h - p["bn1_rm"]) * s1 + p["bn1_b"]
    h = jnp.maximum(h, 0.0)
    return h @ p["fc2_w"].T + p["fc2_b"]


# ===================================== main =======================================
if __name__ == "__main__":
    key = jax.random.PRNGKey(0)
    kx, kparam = jax.random.split(key)
    x = jax.random.normal(kx, (B, S, P, P), dtype=jnp.float32)   # (batch, spectral, w, h)
    params = init_params(kparam)
    kparams = prepare_kernel_params(params)

    logits, mean_left, mean_right = hsinet_forward(x, kparams)
    logits = jax.block_until_ready(logits)
    assert logits.shape == (B, NUM_CLASSES)
    assert mean_left is None and mean_right is None

    # numerical check against the pure-JAX (PyTorch-layout, eval-mode) reference
    with jax.default_matmul_precision("float32"):
        ref = hsinet_reference(x, params)
    err = float(jnp.max(jnp.abs(logits - ref)))
    assert err < 5e-3, f"kernel/reference mismatch: max abs err = {err}"
    print("KERNEL_OK")
</pallas_src>

<mosaic_0001>
module attributes {stable_mosaic.version = 11 : i64} {
  func.func @hsinet_kernel(%arg0: memref<128x8xf32, #tpu.memory_space<vmem>>, %arg1: memref<200x32xf32, #tpu.memory_space<vmem>>, %arg2: memref<1x32xf32, #tpu.memory_space<vmem>>, %arg3: memref<1x32xf32, #tpu.memory_space<vmem>>, %arg4: memref<1x32xf32, #tpu.memory_space<vmem>>, %arg5: memref<17x32xf32, #tpu.memory_space<vmem>>, %arg6: memref<1x1xf32, #tpu.memory_space<vmem>>, %arg7: memref<1x32xf32, #tpu.memory_space<vmem>>, %arg8: memref<1x32xf32, #tpu.memory_space<vmem>>, %arg9: memref<32x64xf32, #tpu.memory_space<vmem>>, %arg10: memref<32x64xf32, #tpu.memory_space<vmem>>, %arg11: memref<32x64xf32, #tpu.memory_space<vmem>>, %arg12: memref<64x32xf32, #tpu.memory_space<vmem>>, %arg13: memref<1x32xf32, #tpu.memory_space<vmem>>, %arg14: memref<1x32xf32, #tpu.memory_space<vmem>>, %arg15: memref<1x32xf32, #tpu.memory_space<vmem>>, %arg16: memref<32x8xf32, #tpu.memory_space<vmem>>, %arg17: memref<1x8xf32, #tpu.memory_space<vmem>>, %arg18: memref<8x32xf32, #tpu.memory_space<vmem>>, %arg19: memref<1x32xf32, #tpu.memory_space<vmem>>, %arg20: memref<32x64xf32, #tpu.memory_space<vmem>>, %arg21: memref<1x64xf32, #tpu.memory_space<vmem>>, %arg22: memref<1x64xf32, #tpu.memory_space<vmem>>, %arg23: memref<1x64xf32, #tpu.memory_space<vmem>>, %arg24: memref<64x8xf32, #tpu.memory_space<vmem>>, %arg25: memref<1x8xf32, #tpu.memory_space<vmem>>, %arg26: memref<2x8xf32, #tpu.memory_space<vmem>>) attributes {dimension_semantics = [], scalar_prefetch = 0 : i64, scratch_operands = 0 : i64, tpu.core_type = #tpu.core_type<tc>} {
    %c0 = arith.constant 0 : index
    %c0_0 = arith.constant 0 : index
    %0 = vector.load %arg0[%c0, %c0_0] : memref<128x8xf32, #tpu.memory_space<vmem>>, vector<128x8xf32>
    %1 = vector.extract_strided_slice %0 {offsets = [1, 0], sizes = [127, 8], strides = [1, 1]} : vector<128x8xf32> to vector<127x8xf32>
    %2 = vector.extract_strided_slice %0 {offsets = [0, 0], sizes = [1, 8], strides = [1, 1]} : vector<128x8xf32> to vector<1x8xf32>
    %3 = tpu.concatenate %1, %2 in 0 : vector<127x8xf32>, vector<1x8xf32> -> vector<128x8xf32>
    %4 = vector.extract_strided_slice %0 {offsets = [2, 0], sizes = [126, 8], strides = [1, 1]} : vector<128x8xf32> to vector<126x8xf32>
    %5 = vector.extract_strided_slice %0 {offsets = [0, 0], sizes = [2, 8], strides = [1, 1]} : vector<128x8xf32> to vector<2x8xf32>
    %6 = tpu.concatenate %4, %5 in 0 : vector<126x8xf32>, vector<2x8xf32> -> vector<128x8xf32>
    %7 = vector.extract_strided_slice %0 {offsets = [3, 0], sizes = [125, 8], strides = [1, 1]} : vector<128x8xf32> to vector<125x8xf32>
    %8 = vector.extract_strided_slice %0 {offsets = [0, 0], sizes = [3, 8], strides = [1, 1]} : vector<128x8xf32> to vector<3x8xf32>
    %9 = tpu.concatenate %7, %8 in 0 : vector<125x8xf32>, vector<3x8xf32> -> vector<128x8xf32>
    %10 = vector.extract_strided_slice %0 {offsets = [4, 0], sizes = [124, 8], strides = [1, 1]} : vector<128x8xf32> to vector<124x8xf32>
    %11 = vector.extract_strided_slice %0 {offsets = [0, 0], sizes = [4, 8], strides = [1, 1]} : vector<128x8xf32> to vector<4x8xf32>
    %12 = tpu.concatenate %10, %11 in 0 : vector<124x8xf32>, vector<4x8xf32> -> vector<128x8xf32>
    %13 = vector.extract_strided_slice %0 {offsets = [8, 0], sizes = [120, 8], strides = [1, 1]} : vector<128x8xf32> to vector<120x8xf32>
    %14 = vector.extract_strided_slice %0 {offsets = [0, 0], sizes = [8, 8], strides = [1, 1]} : vector<128x8xf32> to vector<8x8xf32>
    %15 = tpu.concatenate %13, %14 in 0 : vector<120x8xf32>, vector<8x8xf32> -> vector<128x8xf32>
    %16 = vector.extract_strided_slice %0 {offsets = [9, 0], sizes = [119, 8], strides = [1, 1]} : vector<128x8xf32> to vector<119x8xf32>
    %17 = vector.extract_strided_slice %0 {offsets = [0, 0], sizes = [9, 8], strides = [1, 1]} : vector<128x8xf32> to vector<9x8xf32>
    %18 = tpu.concatenate %16, %17 in 0 : vector<119x8xf32>, vector<9x8xf32> -> vector<128x8xf32>
    %19 = vector.extract_strided_slice %0 {offsets = [10, 0], sizes = [118, 8], strides = [1, 1]} : vector<128x8xf32> to vector<118x8xf32>
    %20 = vector.extract_strided_slice %0 {offsets = [0, 0], sizes = [10, 8], strides = [1, 1]} : vector<128x8xf32> to vector<10x8xf32>
    %21 = tpu.concatenate %19, %20 in 0 : vector<118x8xf32>, vector<10x8xf32> -> vector<128x8xf32>
    %22 = vector.extract_strided_slice %0 {offsets = [11, 0], sizes = [117, 8], strides = [1, 1]} : vector<128x8xf32> to vector<117x8xf32>
    %23 = vector.extract_strided_slice %0 {offsets = [0, 0], sizes = [11, 8], strides = [1, 1]} : vector<128x8xf32> to vector<11x8xf32>
    %24 = tpu.concatenate %22, %23 in 0 : vector<117x8xf32>, vector<11x8xf32> -> vector<128x8xf32>
    %25 = vector.extract_strided_slice %0 {offsets = [12, 0], sizes = [116, 8], strides = [1, 1]} : vector<128x8xf32> to vector<116x8xf32>
    %26 = vector.extract_strided_slice %0 {offsets = [0, 0], sizes = [12, 8], strides = [1, 1]} : vector<128x8xf32> to vector<12x8xf32>
    %27 = tpu.concatenate %25, %26 in 0 : vector<116x8xf32>, vector<12x8xf32> -> vector<128x8xf32>
    %28 = vector.extract_strided_slice %0 {offsets = [16, 0], sizes = [112, 8], strides = [1, 1]} : vector<128x8xf32> to vector<112x8xf32>
    %29 = vector.extract_strided_slice %0 {offsets = [0, 0], sizes = [16, 8], strides = [1, 1]} : vector<128x8xf32> to vector<16x8xf32>
    %30 = tpu.concatenate %28, %29 in 0 : vector<112x8xf32>, vector<16x8xf32> -> vector<128x8xf32>
    %31 = vector.extract_strided_slice %0 {offsets = [17, 0], sizes = [111, 8], strides = [1, 1]} : vector<128x8xf32> to vector<111x8xf32>
    %32 = vector.extract_strided_slice %0 {offsets = [0, 0], sizes = [17, 8], strides = [1, 1]} : vector<128x8xf32> to vector<17x8xf32>
    %33 = tpu.concatenate %31, %32 in 0 : vector<111x8xf32>, vector<17x8xf32> -> vector<128x8xf32>
    %34 = vector.extract_strided_slice %0 {offsets = [18, 0], sizes = [110, 8], strides = [1, 1]} : vector<128x8xf32> to vector<110x8xf32>
    %35 = vector.extract_strided_slice %0 {offsets = [0, 0], sizes = [18, 8], strides = [1, 1]} : vector<128x8xf32> to vector<18x8xf32>
    %36 = tpu.concatenate %34, %35 in 0 : vector<110x8xf32>, vector<18x8xf32> -> vector<128x8xf32>
    %37 = vector.extract_strided_slice %0 {offsets = [19, 0], sizes = [109, 8], strides = [1, 1]} : vector<128x8xf32> to vector<109x8xf32>
    %38 = vector.extract_strided_slice %0 {offsets = [0, 0], sizes = [19, 8], strides = [1, 1]} : vector<128x8xf32> to vector<19x8xf32>
    %39 = tpu.concatenate %37, %38 in 0 : vector<109x8xf32>, vector<19x8xf32> -> vector<128x8xf32>
    %40 = vector.extract_strided_slice %0 {offsets = [20, 0], sizes = [108, 8], strides = [1, 1]} : vector<128x8xf32> to vector<108x8xf32>
    %41 = vector.extract_strided_slice %0 {offsets = [0, 0], sizes = [20, 8], strides = [1, 1]} : vector<128x8xf32> to vector<20x8xf32>
    %42 = tpu.concatenate %40, %41 in 0 : vector<108x8xf32>, vector<20x8xf32> -> vector<128x8xf32>
    %43 = vector.extract_strided_slice %0 {offsets = [24, 0], sizes = [104, 8], strides = [1, 1]} : vector<128x8xf32> to vector<104x8xf32>
    %44 = vector.extract_strided_slice %0 {offsets = [0, 0], sizes = [24, 8], strides = [1, 1]} : vector<128x8xf32> to vector<24x8xf32>
    %45 = tpu.concatenate %43, %44 in 0 : vector<104x8xf32>, vector<24x8xf32> -> vector<128x8xf32>
    %46 = vector.extract_strided_slice %0 {offsets = [25, 0], sizes = [103, 8], strides = [1, 1]} : vector<128x8xf32> to vector<103x8xf32>
    %47 = vector.extract_strided_slice %0 {offsets = [0, 0], sizes = [25, 8], strides = [1, 1]} : vector<128x8xf32> to vector<25x8xf32>
    %48 = tpu.concatenate %46, %47 in 0 : vector<103x8xf32>, vector<25x8xf32> -> vector<128x8xf32>
    %49 = vector.extract_strided_slice %0 {offsets = [26, 0], sizes = [102, 8], strides = [1, 1]} : vector<128x8xf32> to vector<102x8xf32>
    %50 = vector.extract_strided_slice %0 {offsets = [0, 0], sizes = [26, 8], strides = [1, 1]} : vector<128x8xf32> to vector<26x8xf32>
    %51 = tpu.concatenate %49, %50 in 0 : vector<102x8xf32>, vector<26x8xf32> -> vector<128x8xf32>
    %52 = vector.extract_strided_slice %0 {offsets = [27, 0], sizes = [101, 8], strides = [1, 1]} : vector<128x8xf32> to vector<101x8xf32>
    %53 = vector.extract_strided_slice %0 {offsets = [0, 0], sizes = [27, 8], strides = [1, 1]} : vector<128x8xf32> to vector<27x8xf32>
    %54 = tpu.concatenate %52, %53 in 0 : vector<101x8xf32>, vector<27x8xf32> -> vector<128x8xf32>
    %55 = vector.extract_strided_slice %0 {offsets = [28, 0], sizes = [100, 8], strides = [1, 1]} : vector<128x8xf32> to vector<100x8xf32>
    %56 = vector.extract_strided_slice %0 {offsets = [0, 0], sizes = [28, 8], strides = [1, 1]} : vector<128x8xf32> to vector<28x8xf32>
    %57 = tpu.concatenate %55, %56 in 0 : vector<100x8xf32>, vector<28x8xf32> -> vector<128x8xf32>
    %58 = vector.extract_strided_slice %0 {offsets = [32, 0], sizes = [96, 8], strides = [1, 1]} : vector<128x8xf32> to vector<96x8xf32>
    %59 = vector.extract_strided_slice %0 {offsets = [0, 0], sizes = [32, 8], strides = [1, 1]} : vector<128x8xf32> to vector<32x8xf32>
    %60 = tpu.concatenate %58, %59 in 0 : vector<96x8xf32>, vector<32x8xf32> -> vector<128x8xf32>
    %61 = vector.extract_strided_slice %0 {offsets = [33, 0], sizes = [95, 8], strides = [1, 1]} : vector<128x8xf32> to vector<95x8xf32>
    %62 = vector.extract_strided_slice %0 {offsets = [0, 0], sizes = [33, 8], strides = [1, 1]} : vector<128x8xf32> to vector<33x8xf32>
    %63 = tpu.concatenate %61, %62 in 0 : vector<95x8xf32>, vector<33x8xf32> -> vector<128x8xf32>
    %64 = vector.extract_strided_slice %0 {offsets = [34, 0], sizes = [94, 8], strides = [1, 1]} : vector<128x8xf32> to vector<94x8xf32>
    %65 = vector.extract_strided_slice %0 {offsets = [0, 0], sizes = [34, 8], strides = [1, 1]} : vector<128x8xf32> to vector<34x8xf32>
    %66 = tpu.concatenate %64, %65 in 0 : vector<94x8xf32>, vector<34x8xf32> -> vector<128x8xf32>
    %67 = vector.extract_strided_slice %0 {offsets = [35, 0], sizes = [93, 8], strides = [1, 1]} : vector<128x8xf32> to vector<93x8xf32>
    %68 = vector.extract_strided_slice %0 {offsets = [0, 0], sizes = [35, 8], strides = [1, 1]} : vector<128x8xf32> to vector<35x8xf32>
    %69 = tpu.concatenate %67, %68 in 0 : vector<93x8xf32>, vector<35x8xf32> -> vector<128x8xf32>
    %70 = vector.extract_strided_slice %0 {offsets = [36, 0], sizes = [92, 8], strides = [1, 1]} : vector<128x8xf32> to vector<92x8xf32>
    %71 = vector.extract_strided_slice %0 {offsets = [0, 0], sizes = [36, 8], strides = [1, 1]} : vector<128x8xf32> to vector<36x8xf32>
    %72 = tpu.concatenate %70, %71 in 0 : vector<92x8xf32>, vector<36x8xf32> -> vector<128x8xf32>
    %73 = tpu.concatenate %0, %3, %6, %9, %12, %15, %18, %21, %24, %27, %30, %33, %36, %39, %42, %45 in 1 : vector<128x8xf32>, vector<128x8xf32>, vector<128x8xf32>, vector<128x8xf32>, vector<128x8xf32>, vector<128x8xf32>, vector<128x8xf32>, vector<128x8xf32>, vector<128x8xf32>, vector<128x8xf32>, vector<128x8xf32>, vector<128x8xf32>, vector<128x8xf32>, vector<128x8xf32>, vector<128x8xf32>, vector<128x8xf32> -> vector<128x128xf32>
    %74 = tpu.concatenate %48, %51, %54, %57, %60, %63, %66, %69, %72 in 1 : vector<128x8xf32>, vector<128x8xf32>, vector<128x8xf32>, vector<128x8xf32>, vector<128x8xf32>, vector<128x8xf32>, vector<128x8xf32>, vector<128x8xf32>, vector<128x8xf32> -> vector<128x72xf32>
    %75 = tpu.concatenate %73, %74 in 1 : vector<128x128xf32>, vector<128x72xf32> -> vector<128x200xf32>
    %c0_1 = arith.constant 0 : index
    %c0_2 = arith.constant 0 : index
    %76 = vector.load %arg1[%c0_1, %c0_2] : memref<200x32xf32, #tpu.memory_space<vmem>>, vector<200x32xf32>
    %cst = arith.constant dense<0.000000e+00> : vector<128x32xf32>
    %77 = tpu.matmul %75, %76, %cst {dimension_numbers = #tpu.dot_dimension_numbers<[1], [0], [0], [1], [0, 0, 1, 1], [], []>} : vector<128x200xf32>, vector<200x32xf32>, vector<128x32xf32> -> vector<128x32xf32>
    %c0_3 = arith.constant 0 : index
    %c0_4 = arith.constant 0 : index
    %78 = vector.load %arg2[%c0_3, %c0_4] : memref<1x32xf32, #tpu.memory_space<vmem>>, vector<1x32xf32>
    %79 = vector.broadcast %78 : vector<1x32xf32> to vector<128x32xf32>
    %80 = arith.mulf %77, %79 : vector<128x32xf32>
    %c0_5 = arith.constant 0 : index
    %c0_6 = arith.constant 0 : index
    %81 = vector.load %arg3[%c0_5, %c0_6] : memref<1x32xf32, #tpu.memory_space<vmem>>, vector<1x32xf32>
    %82 = vector.broadcast %81 : vector<1x32xf32> to vector<128x32xf32>
    %83 = arith.addf %80, %82 : vector<128x32xf32>
    %cst_7 = arith.constant 0.000000e+00 : f32
    %84 = vector.broadcast %cst_7 : f32 to vector<128x32xf32>
    %85 = arith.maximumf %83, %84 : vector<128x32xf32>
    %c0_8 = arith.constant 0 : index
    %c0_9 = arith.constant 0 : index
    %86 = vector.load %arg5[%c0_8, %c0_9] : memref<17x32xf32, #tpu.memory_space<vmem>>, vector<17x32xf32>
    %c0_10 = arith.constant 0 : index
    %c0_11 = arith.constant 0 : index
    %87 = vector.load %arg6[%c0_10, %c0_11] : memref<1x1xf32, #tpu.memory_space<vmem>>, vector<1x1xf32>
    %88 = vector.broadcast %87 : vector<1x1xf32> to vector<17x32xf32>
    %89 = arith.mulf %86, %88 : vector<17x32xf32>
    %c0_12 = arith.constant 0 : index
    %c0_13 = arith.constant 0 : index
    %90 = vector.load %arg4[%c0_12, %c0_13] : memref<1x32xf32, #tpu.memory_space<vmem>>, vector<1x32xf32>
    %91 = vector.extract_strided_slice %85 {offsets = [0, 0], sizes = [4, 32], strides = [1, 1]} : vector<128x32xf32> to vector<4x32xf32>
    %92 = vector.extract_strided_slice %85 {offsets = [8, 0], sizes = [4, 32], strides = [1, 1]} : vector<128x32xf32> to vector<4x32xf32>
    %93 = vector.extract_strided_slice %85 {offsets = [16, 0], sizes = [4, 32], strides = [1, 1]} : vector<128x32xf32> to vector<4x32xf32>
    %94 = vector.extract_strided_slice %85 {offsets = [24, 0], sizes = [4, 32], strides = [1, 1]} : vector<128x32xf32> to vector<4x32xf32>
    %95 = tpu.concatenate %90, %91, %92, %93, %94 in 0 : vector<1x32xf32>, vector<4x32xf32>, vector<4x32xf32>, vector<4x32xf32>, vector<4x32xf32> -> vector<17x32xf32>
    %96 = arith.addf %95, %89 : vector<17x32xf32>
    %c0_14 = arith.constant 0 : index
    %c0_15 = arith.constant 0 : index
    %97 = vector.load %arg4[%c0_14, %c0_15] : memref<1x32xf32, #tpu.memory_space<vmem>>, vector<1x32xf32>
    %98 = vector.extract_strided_slice %85 {offsets = [64, 0], sizes = [4, 32], strides = [1, 1]} : vector<128x32xf32> to vector<4x32xf32>
    %99 = vector.extract_strided_slice %85 {offsets = [72, 0], sizes = [4, 32], strides = [1, 1]} : vector<128x32xf32> to vector<4x32xf32>
    %100 = vector.extract_strided_slice %85 {offsets = [80, 0], sizes = [4, 32], strides = [1, 1]} : vector<128x32xf32> to vector<4x32xf32>
    %101 = vector.extract_strided_slice %85 {offsets = [88, 0], sizes = [4, 32], strides = [1, 1]} : vector<128x32xf32> to vector<4x32xf32>
    %102 = tpu.concatenate %97, %98, %99, %100, %101 in 0 : vector<1x32xf32>, vector<4x32xf32>, vector<4x32xf32>, vector<4x32xf32>, vector<4x32xf32> -> vector<17x32xf32>
    %103 = arith.addf %102, %89 : vector<17x32xf32>
    %104 = tpu.concatenate %96, %103 in 0 : vector<17x32xf32>, vector<17x32xf32> -> vector<34x32xf32>
    %cst_16 = arith.constant dense<0.000000e+00> : vector<34xf32>
    %105 = vector.multi_reduction <add>, %104, %cst_16 [1] : vector<34x32xf32> to vector<34xf32>
    %106 = vector.shape_cast %105 : vector<34xf32> to vector<34x1xf32>
    %cst_17 = arith.constant 3.200000e+01 : f32
    %107 = vector.broadcast %cst_17 : f32 to vector<34x1xf32>
    %108 = arith.divf %106, %107 : vector<34x1xf32>
    %109 = vector.broadcast %108 : vector<34x1xf32> to vector<34x32xf32>
    %110 = arith.subf %104, %109 : vector<34x32xf32>
    %111 = arith.mulf %110, %110 : vector<34x32xf32>
    %cst_18 = arith.constant dense<0.000000e+00> : vector<34xf32>
    %112 = vector.multi_reduction <add>, %111, %cst_18 [1] : vector<34x32xf32> to vector<34xf32>
    %113 = vector.shape_cast %112 : vector<34xf32> to vector<34x1xf32>
    %cst_19 = arith.constant 3.200000e+01 : f32
    %114 = vector.broadcast %cst_19 : f32 to vector<34x1xf32>
    %115 = arith.divf %113, %114 : vector<34x1xf32>
    %116 = vector.broadcast %108 : vector<34x1xf32> to vector<34x32xf32>
    %117 = arith.subf %104, %116 : vector<34x32xf32>
    %cst_20 = arith.constant 9.99999974E-6 : f32
    %118 = vector.broadcast %cst_20 : f32 to vector<34x1xf32>
    %119 = arith.addf %115, %118 : vector<34x1xf32>
    %120 = math.rsqrt %119 : vector<34x1xf32>
    %121 = vector.broadcast %120 : vector<34x1xf32> to vector<34x32xf32>
    %122 = arith.mulf %117, %121 : vector<34x32xf32>
    %c0_21 = arith.constant 0 : index
    %c0_22 = arith.constant 0 : index
    %123 = vector.load %arg7[%c0_21, %c0_22] : memref<1x32xf32, #tpu.memory_space<vmem>>, vector<1x32xf32>
    %124 = vector.broadcast %123 : vector<1x32xf32> to vector<34x32xf32>
    %125 = arith.mulf %122, %124 : vector<34x32xf32>
    %c0_23 = arith.constant 0 : index
    %c0_24 = arith.constant 0 : index
    %126 = vector.load %arg8[%c0_23, %c0_24] : memref<1x32xf32, #tpu.memory_space<vmem>>, vector<1x32xf32>
    %127 = vector.broadcast %126 : vector<1x32xf32> to vector<34x32xf32>
    %128 = arith.addf %125, %127 : vector<34x32xf32>
    %c0_25 = arith.constant 0 : index
    %c0_26 = arith.constant 0 : index
    %129 = vector.load %arg9[%c0_25, %c0_26] : memref<32x64xf32, #tpu.memory_space<vmem>>, vector<32x64xf32>
    %cst_27 = arith.constant dense<0.000000e+00> : vector<34x64xf32>
    %130 = tpu.matmul %128, %129, %cst_27 {dimension_numbers = #tpu.dot_dimension_numbers<[1], [0], [0], [1], [0, 0, 1, 1], [], []>} : vector<34x32xf32>, vector<32x64xf32>, vector<34x64xf32> -> vector<34x64xf32>
    %c0_28 = arith.constant 0 : index
    %c0_29 = arith.constant 0 : index
    %131 = vector.load %arg10[%c0_28, %c0_29] : memref<32x64xf32, #tpu.memory_space<vmem>>, vector<32x64xf32>
    %cst_30 = arith.constant dense<0.000000e+00> : vector<34x64xf32>
    %132 = tpu.matmul %128, %131, %cst_30 {dimension_numbers = #tpu.dot_dimension_numbers<[1], [0], [0], [1], [0, 0, 1, 1], [], []>} : vector<34x32xf32>, vector<32x64xf32>, vector<34x64xf32> -> vector<34x64xf32>
    %c0_31 = arith.constant 0 : index
    %c0_32 = arith.constant 0 : index
    %133 = vector.load %arg11[%c0_31, %c0_32] : memref<32x64xf32, #tpu.memory_space<vmem>>, vector<32x64xf32>
    %cst_33 = arith.constant dense<0.000000e+00> : vector<34x64xf32>
    %134 = tpu.matmul %128, %133, %cst_33 {dimension_numbers = #tpu.dot_dimension_numbers<[1], [0], [0], [1], [0, 0, 1, 1], [], []>} : vector<34x32xf32>, vector<32x64xf32>, vector<34x64xf32> -> vector<34x64xf32>
    %135 = vector.extract_strided_slice %130 {offsets = [0, 0], sizes = [17, 64], strides = [1, 1]} : vector<34x64xf32> to vector<17x64xf32>
    %136 = vector.extract_strided_slice %132 {offsets = [0, 0], sizes = [17, 64], strides = [1, 1]} : vector<34x64xf32> to vector<17x64xf32>
    %137 = vector.extract_strided_slice %134 {offsets = [0, 0], sizes = [17, 64], strides = [1, 1]} : vector<34x64xf32> to vector<17x64xf32>
    %138 = vector.extract_strided_slice %135 {offsets = [0, 0], sizes = [17, 32], strides = [1, 1]} : vector<17x64xf32> to vector<17x32xf32>
    %139 = vector.extract_strided_slice %136 {offsets = [0, 0], sizes = [17, 32], strides = [1, 1]} : vector<17x64xf32> to vector<17x32xf32>
    %140 = vector.extract_strided_slice %137 {offsets = [0, 0], sizes = [17, 32], strides = [1, 1]} : vector<17x64xf32> to vector<17x32xf32>
    %cst_34 = arith.constant dense<0.000000e+00> : vector<17x17xf32>
    %141 = tpu.matmul %138, %139, %cst_34 {dimension_numbers = #tpu.dot_dimension_numbers<[1], [1], [0], [0], [0, 0, 1, 0], [], []>} : vector<17x32xf32>, vector<17x32xf32>, vector<17x17xf32> -> vector<17x17xf32>
    %cst_35 = arith.constant 0.176776692 : f32
    %142 = vector.broadcast %cst_35 : f32 to vector<17x17xf32>
    %143 = arith.mulf %141, %142 : vector<17x17xf32>
    %cst_36 = arith.constant dense<0xFF800000> : vector<17xf32>
    %144 = vector.multi_reduction <maximumf>, %143, %cst_36 [1] : vector<17x17xf32> to vector<17xf32>
    %145 = vector.shape_cast %144 : vector<17xf32> to vector<17x1xf32>
    %146 = vector.broadcast %145 : vector<17x1xf32> to vector<17x17xf32>
    %147 = arith.subf %143, %146 : vector<17x17xf32>
    %148 = math.exp %147 : vector<17x17xf32>
    %cst_37 = arith.constant dense<0.000000e+00> : vector<17xf32>
    %149 = vector.multi_reduction <add>, %148, %cst_37 [1] : vector<17x17xf32> to vector<17xf32>
    %150 = vector.shape_cast %149 : vector<17xf32> to vector<17x1xf32>
    %151 = tpu.reciprocal %150 {approx = true} : vector<17x1xf32> -> vector<17x1xf32>
    %152 = vector.broadcast %151 : vector<17x1xf32> to vector<17x17xf32>
    %153 = arith.mulf %148, %152 : vector<17x17xf32>
    %cst_38 = arith.constant dense<0.000000e+00> : vector<17x32xf32>
    %154 = tpu.matmul %153, %140, %cst_38 {dimension_numbers = #tpu.dot_dimension_numbers<[1], [0], [0], [1], [0, 0, 1, 1], [], []>} : vector<17x17xf32>, vector<17x32xf32>, vector<17x32xf32> -> vector<17x32xf32>
    %155 = vector.extract_strided_slice %135 {offsets = [0, 32], sizes = [17, 32], strides = [1, 1]} : vector<17x64xf32> to vector<17x32xf32>
    %156 = vector.extract_strided_slice %136 {offsets = [0, 32], sizes = [17, 32], strides = [1, 1]} : vector<17x64xf32> to vector<17x32xf32>
    %157 = vector.extract_strided_slice %137 {offsets = [0, 32], sizes = [17, 32], strides = [1, 1]} : vector<17x64xf32> to vector<17x32xf32>
    %cst_39 = arith.constant dense<0.000000e+00> : vector<17x17xf32>
    %158 = tpu.matmul %155, %156, %cst_39 {dimension_numbers = #tpu.dot_dimension_numbers<[1], [1], [0], [0], [0, 0, 1, 0], [], []>} : vector<17x32xf32>, vector<17x32xf32>, vector<17x17xf32> -> vector<17x17xf32>
    %cst_40 = arith.constant 0.176776692 : f32
    %159 = vector.broadcast %cst_40 : f32 to vector<17x17xf32>
    %160 = arith.mulf %158, %159 : vector<17x17xf32>
    %cst_41 = arith.constant dense<0xFF800000> : vector<17xf32>
    %161 = vector.multi_reduction <maximumf>, %160, %cst_41 [1] : vector<17x17xf32> to vector<17xf32>
    %162 = vector.shape_cast %161 : vector<17xf32> to vector<17x1xf32>
    %163 = vector.broadcast %162 : vector<17x1xf32> to vector<17x17xf32>
    %164 = arith.subf %160, %163 : vector<17x17xf32>
    %165 = math.exp %164 : vector<17x17xf32>
    %cst_42 = arith.constant dense<0.000000e+00> : vector<17xf32>
    %166 = vector.multi_reduction <add>, %165, %cst_42 [1] : vector<17x17xf32> to vector<17xf32>
    %167 = vector.shape_cast %166 : vector<17xf32> to vector<17x1xf32>
    %168 = tpu.reciprocal %167 {approx = true} : vector<17x1xf32> -> vector<17x1xf32>
    %169 = vector.broadcast %168 : vector<17x1xf32> to vector<17x17xf32>
    %170 = arith.mulf %165, %169 : vector<17x17xf32>
    %cst_43 = arith.constant dense<0.000000e+00> : vector<17x32xf32>
    %171 = tpu.matmul %170, %157, %cst_43 {dimension_numbers = #tpu.dot_dimension_numbers<[1], [0], [0], [1], [0, 0, 1, 1], [], []>} : vector<17x17xf32>, vector<17x32xf32>, vector<17x32xf32> -> vector<17x32xf32>
    %172 = tpu.concatenate %154, %171 in 1 : vector<17x32xf32>, vector<17x32xf32> -> vector<17x64xf32>
    %173 = vector.extract_strided_slice %130 {offsets = [17, 0], sizes = [17, 64], strides = [1, 1]} : vector<34x64xf32> to vector<17x64xf32>
    %174 = vector.extract_strided_slice %132 {offsets = [17, 0], sizes = [17, 64], strides = [1, 1]} : vector<34x64xf32> to vector<17x64xf32>
    %175 = vector.extract_strided_slice %134 {offsets = [17, 0], sizes = [17, 64], strides = [1, 1]} : vector<34x64xf32> to vector<17x64xf32>
    %176 = vector.extract_strided_slice %173 {offsets = [0, 0], sizes = [17, 32], strides = [1, 1]} : vector<17x64xf32> to vector<17x32xf32>
    %177 = vector.extract_strided_slice %174 {offsets = [0, 0], sizes = [17, 32], strides = [1, 1]} : vector<17x64xf32> to vector<17x32xf32>
    %178 = vector.extract_strided_slice %175 {offsets = [0, 0], sizes = [17, 32], strides = [1, 1]} : vector<17x64xf32> to vector<17x32xf32>
    %cst_44 = arith.constant dense<0.000000e+00> : vector<17x17xf32>
    %179 = tpu.matmul %176, %177, %cst_44 {dimension_numbers = #tpu.dot_dimension_numbers<[1], [1], [0], [0], [0, 0, 1, 0], [], []>} : vector<17x32xf32>, vector<17x32xf32>, vector<17x17xf32> -> vector<17x17xf32>
    %cst_45 = arith.constant 0.176776692 : f32
    %180 = vector.broadcast %cst_45 : f32 to vector<17x17xf32>
    %181 = arith.mulf %179, %180 : vector<17x17xf32>
    %cst_46 = arith.constant dense<0xFF800000> : vector<17xf32>
    %182 = vector.multi_reduction <maximumf>, %181, %cst_46 [1] : vector<17x17xf32> to vector<17xf32>
    %183 = vector.shape_cast %182 : vector<17xf32> to vector<17x1xf32>
    %184 = vector.broadcast %183 : vector<17x1xf32> to vector<17x17xf32>
    %185 = arith.subf %181, %184 : vector<17x17xf32>
    %186 = math.exp %185 : vector<17x17xf32>
    %cst_47 = arith.constant dense<0.000000e+00> : vector<17xf32>
    %187 = vector.multi_reduction <add>, %186, %cst_47 [1] : vector<17x17xf32> to vector<17xf32>
    %188 = vector.shape_cast %187 : vector<17xf32> to vector<17x1xf32>
    %189 = tpu.reciprocal %188 {approx = true} : vector<17x1xf32> -> vector<17x1xf32>
    %190 = vector.broadcast %189 : vector<17x1xf32> to vector<17x17xf32>
    %191 = arith.mulf %186, %190 : vector<17x17xf32>
    %cst_48 = arith.constant dense<0.000000e+00> : vector<17x32xf32>
    %192 = tpu.matmul %191, %178, %cst_48 {dimension_numbers = #tpu.dot_dimension_numbers<[1], [0], [0], [1], [0, 0, 1, 1], [], []>} : vector<17x17xf32>, vector<17x32xf32>, vector<17x32xf32> -> vector<17x32xf32>
    %193 = vector.extract_strided_slice %173 {offsets = [0, 32], sizes = [17, 32], strides = [1, 1]} : vector<17x64xf32> to vector<17x32xf32>
    %194 = vector.extract_strided_slice %174 {offsets = [0, 32], sizes = [17, 32], strides = [1, 1]} : vector<17x64xf32> to vector<17x32xf32>
    %195 = vector.extract_strided_slice %175 {offsets = [0, 32], sizes = [17, 32], strides = [1, 1]} : vector<17x64xf32> to vector<17x32xf32>
    %cst_49 = arith.constant dense<0.000000e+00> : vector<17x17xf32>
    %196 = tpu.matmul %193, %194, %cst_49 {dimension_numbers = #tpu.dot_dimension_numbers<[1], [1], [0], [0], [0, 0, 1, 0], [], []>} : vector<17x32xf32>, vector<17x32xf32>, vector<17x17xf32> -> vector<17x17xf32>
    %cst_50 = arith.constant 0.176776692 : f32
    %197 = vector.broadcast %cst_50 : f32 to vector<17x17xf32>
    %198 = arith.mulf %196, %197 : vector<17x17xf32>
    %cst_51 = arith.constant dense<0xFF800000> : vector<17xf32>
    %199 = vector.multi_reduction <maximumf>, %198, %cst_51 [1] : vector<17x17xf32> to vector<17xf32>
    %200 = vector.shape_cast %199 : vector<17xf32> to vector<17x1xf32>
    %201 = vector.broadcast %200 : vector<17x1xf32> to vector<17x17xf32>
    %202 = arith.subf %198, %201 : vector<17x17xf32>
    %203 = math.exp %202 : vector<17x17xf32>
    %cst_52 = arith.constant dense<0.000000e+00> : vector<17xf32>
    %204 = vector.multi_reduction <add>, %203, %cst_52 [1] : vector<17x17xf32> to vector<17xf32>
    %205 = vector.shape_cast %204 : vector<17xf32> to vector<17x1xf32>
    %206 = tpu.reciprocal %205 {approx = true} : vector<17x1xf32> -> vector<17x1xf32>
    %207 = vector.broadcast %206 : vector<17x1xf32> to vector<17x17xf32>
    %208 = arith.mulf %203, %207 : vector<17x17xf32>
    %cst_53 = arith.constant dense<0.000000e+00> : vector<17x32xf32>
    %209 = tpu.matmul %208, %195, %cst_53 {dimension_numbers = #tpu.dot_dimension_numbers<[1], [0], [0], [1], [0, 0, 1, 1], [], []>} : vector<17x17xf32>, vector<17x32xf32>, vector<17x32xf32> -> vector<17x32xf32>
    %210 = tpu.concatenate %192, %209 in 1 : vector<17x32xf32>, vector<17x32xf32> -> vector<17x64xf32>
    %211 = tpu.concatenate %172, %210 in 0 : vector<17x64xf32>, vector<17x64xf32> -> vector<34x64xf32>
    %c0_54 = arith.constant 0 : index
    %c0_55 = arith.constant 0 : index
    %212 = vector.load %arg12[%c0_54, %c0_55] : memref<64x32xf32, #tpu.memory_space<vmem>>, vector<64x32xf32>
    %cst_56 = arith.constant dense<0.000000e+00> : vector<34x32xf32>
    %213 = tpu.matmul %211, %212, %cst_56 {dimension_numbers = #tpu.dot_dimension_numbers<[1], [0], [0], [1], [0, 0, 1, 1], [], []>} : vector<34x64xf32>, vector<64x32xf32>, vector<34x32xf32> -> vector<34x32xf32>
    %214 = arith.addf %104, %213 : vector<34x32xf32>
    %c0_57 = arith.constant 0 : index
    %c0_58 = arith.constant 0 : index
    %215 = vector.load %arg13[%c0_57, %c0_58] : memref<1x32xf32, #tpu.memory_space<vmem>>, vector<1x32xf32>
    %216 = vector.broadcast %215 : vector<1x32xf32> to vector<34x32xf32>
    %217 = arith.addf %214, %216 : vector<34x32xf32>
    %cst_59 = arith.constant dense<0.000000e+00> : vector<34xf32>
    %218 = vector.multi_reduction <add>, %217, %cst_59 [1] : vector<34x32xf32> to vector<34xf32>
    %219 = vector.shape_cast %218 : vector<34xf32> to vector<34x1xf32>
    %cst_60 = arith.constant 3.200000e+01 : f32
    %220 = vector.broadcast %cst_60 : f32 to vector<34x1xf32>
    %221 = arith.divf %219, %220 : vector<34x1xf32>
    %222 = vector.broadcast %221 : vector<34x1xf32> to vector<34x32xf32>
    %223 = arith.subf %217, %222 : vector<34x32xf32>
    %224 = arith.mulf %223, %223 : vector<34x32xf32>
    %cst_61 = arith.constant dense<0.000000e+00> : vector<34xf32>
    %225 = vector.multi_reduction <add>, %224, %cst_61 [1] : vector<34x32xf32> to vector<34xf32>
    %226 = vector.shape_cast %225 : vector<34xf32> to vector<34x1xf32>
    %cst_62 = arith.constant 3.200000e+01 : f32
    %227 = vector.broadcast %cst_62 : f32 to vector<34x1xf32>
    %228 = arith.divf %226, %227 : vector<34x1xf32>
    %229 = vector.broadcast %221 : vector<34x1xf32> to vector<34x32xf32>
    %230 = arith.subf %217, %229 : vector<34x32xf32>
    %cst_63 = arith.constant 9.99999974E-6 : f32
    %231 = vector.broadcast %cst_63 : f32 to vector<34x1xf32>
    %232 = arith.addf %228, %231 : vector<34x1xf32>
    %233 = math.rsqrt %232 : vector<34x1xf32>
    %234 = vector.broadcast %233 : vector<34x1xf32> to vector<34x32xf32>
    %235 = arith.mulf %230, %234 : vector<34x32xf32>
    %c0_64 = arith.constant 0 : index
    %c0_65 = arith.constant 0 : index
    %236 = vector.load %arg14[%c0_64, %c0_65] : memref<1x32xf32, #tpu.memory_space<vmem>>, vector<1x32xf32>
    %237 = vector.broadcast %236 : vector<1x32xf32> to vector<34x32xf32>
    %238 = arith.mulf %235, %237 : vector<34x32xf32>
    %c0_66 = arith.constant 0 : index
    %c0_67 = arith.constant 0 : index
    %239 = vector.load %arg15[%c0_66, %c0_67] : memref<1x32xf32, #tpu.memory_space<vmem>>, vector<1x32xf32>
    %240 = vector.broadcast %239 : vector<1x32xf32> to vector<34x32xf32>
    %241 = arith.addf %238, %240 : vector<34x32xf32>
    %c0_68 = arith.constant 0 : index
    %c0_69 = arith.constant 0 : index
    %242 = vector.load %arg16[%c0_68, %c0_69] : memref<32x8xf32, #tpu.memory_space<vmem>>, vector<32x8xf32>
    %cst_70 = arith.constant dense<0.000000e+00> : vector<34x8xf32>
    %243 = tpu.matmul %241, %242, %cst_70 {dimension_numbers = #tpu.dot_dimension_numbers<[1], [0], [0], [1], [0, 0, 1, 1], [], []>} : vector<34x32xf32>, vector<32x8xf32>, vector<34x8xf32> -> vector<34x8xf32>
    %c0_71 = arith.constant 0 : index
    %c0_72 = arith.constant 0 : index
    %244 = vector.load %arg17[%c0_71, %c0_72] : memref<1x8xf32, #tpu.memory_space<vmem>>, vector<1x8xf32>
    %245 = vector.broadcast %244 : vector<1x8xf32> to vector<34x8xf32>
    %246 = arith.addf %243, %245 : vector<34x8xf32>
    %cst_73 = arith.constant 5.000000e-01 : f32
    %247 = vector.broadcast %cst_73 : f32 to vector<34x8xf32>
    %248 = arith.mulf %247, %246 : vector<34x8xf32>
    %cst_74 = arith.constant 0.707106769 : f32
    %249 = vector.broadcast %cst_74 : f32 to vector<34x8xf32>
    %250 = arith.mulf %246, %249 : vector<34x8xf32>
    %251 = math.erf %250 : vector<34x8xf32>
    %cst_75 = arith.constant 1.000000e+00 : f32
    %252 = vector.broadcast %cst_75 : f32 to vector<34x8xf32>
    %253 = arith.addf %252, %251 : vector<34x8xf32>
    %254 = arith.mulf %248, %253 : vector<34x8xf32>
    %c0_76 = arith.constant 0 : index
    %c0_77 = arith.constant 0 : index
    %255 = vector.load %arg18[%c0_76, %c0_77] : memref<8x32xf32, #tpu.memory_space<vmem>>, vector<8x32xf32>
    %cst_78 = arith.constant dense<0.000000e+00> : vector<34x32xf32>
    %256 = tpu.matmul %254, %255, %cst_78 {dimension_numbers = #tpu.dot_dimension_numbers<[1], [0], [0], [1], [0, 0, 1, 1], [], []>} : vector<34x8xf32>, vector<8x32xf32>, vector<34x32xf32> -> vector<34x32xf32>
    %257 = arith.addf %217, %256 : vector<34x32xf32>
    %c0_79 = arith.constant 0 : index
    %c0_80 = arith.constant 0 : index
    %258 = vector.load %arg19[%c0_79, %c0_80] : memref<1x32xf32, #tpu.memory_space<vmem>>, vector<1x32xf32>
    %259 = vector.broadcast %258 : vector<1x32xf32> to vector<34x32xf32>
    %260 = arith.addf %257, %259 : vector<34x32xf32>
    %261 = vector.extract_strided_slice %260 {offsets = [8, 0], sizes = [1, 32], strides = [1, 1]} : vector<34x32xf32> to vector<1x32xf32>
    %262 = vector.extract_strided_slice %260 {offsets = [25, 0], sizes = [1, 32], strides = [1, 1]} : vector<34x32xf32> to vector<1x32xf32>
    %263 = tpu.concatenate %261, %262 in 0 : vector<1x32xf32>, vector<1x32xf32> -> vector<2x32xf32>
    %c0_81 = arith.constant 0 : index
    %c0_82 = arith.constant 0 : index
    %264 = vector.load %arg20[%c0_81, %c0_82] : memref<32x64xf32, #tpu.memory_space<vmem>>, vector<32x64xf32>
    %cst_83 = arith.constant dense<0.000000e+00> : vector<2x64xf32>
    %265 = tpu.matmul %263, %264, %cst_83 {dimension_numbers = #tpu.dot_dimension_numbers<[1], [0], [0], [1], [0, 0, 1, 1], [], []>} : vector<2x32xf32>, vector<32x64xf32>, vector<2x64xf32> -> vector<2x64xf32>
    %c0_84 = arith.constant 0 : index
    %c0_85 = arith.constant 0 : index
    %266 = vector.load %arg21[%c0_84, %c0_85] : memref<1x64xf32, #tpu.memory_space<vmem>>, vector<1x64xf32>
    %267 = vector.broadcast %266 : vector<1x64xf32> to vector<2x64xf32>
    %268 = arith.addf %265, %267 : vector<2x64xf32>
    %c0_86 = arith.constant 0 : index
    %c0_87 = arith.constant 0 : index
    %269 = vector.load %arg22[%c0_86, %c0_87] : memref<1x64xf32, #tpu.memory_space<vmem>>, vector<1x64xf32>
    %270 = vector.broadcast %269 : vector<1x64xf32> to vector<2x64xf32>
    %271 = arith.mulf %268, %270 : vector<2x64xf32>
    %c0_88 = arith.constant 0 : index
    %c0_89 = arith.constant 0 : index
    %272 = vector.load %arg23[%c0_88, %c0_89] : memref<1x64xf32, #tpu.memory_space<vmem>>, vector<1x64xf32>
    %273 = vector.broadcast %272 : vector<1x64xf32> to vector<2x64xf32>
    %274 = arith.addf %271, %273 : vector<2x64xf32>
    %cst_90 = arith.constant 0.000000e+00 : f32
    %275 = vector.broadcast %cst_90 : f32 to vector<2x64xf32>
    %276 = arith.maximumf %274, %275 : vector<2x64xf32>
    %c0_91 = arith.constant 0 : index
    %c0_92 = arith.constant 0 : index
    %277 = vector.load %arg24[%c0_91, %c0_92] : memref<64x8xf32, #tpu.memory_space<vmem>>, vector<64x8xf32>
    %cst_93 = arith.constant dense<0.000000e+00> : vector<2x8xf32>
    %278 = tpu.matmul %276, %277, %cst_93 {dimension_numbers = #tpu.dot_dimension_numbers<[1], [0], [0], [1], [0, 0, 1, 1], [], []>} : vector<2x64xf32>, vector<64x8xf32>, vector<2x8xf32> -> vector<2x8xf32>
    %c0_94 = arith.constant 0 : index
    %c0_95 = arith.constant 0 : index
    %279 = vector.load %arg25[%c0_94, %c0_95] : memref<1x8xf32, #tpu.memory_space<vmem>>, vector<1x8xf32>
    %280 = vector.broadcast %279 : vector<1x8xf32> to vector<2x8xf32>
    %281 = arith.addf %278, %280 : vector<2x8xf32>
    %c0_96 = arith.constant 0 : index
    %c0_97 = arith.constant 0 : index
    %282 = vector.load %arg26[%c0_96, %c0_97] : memref<2x8xf32, #tpu.memory_space<vmem>>, vector<2x8xf32>
    tpu.vector_store %arg26[%c0_96, %c0_97], %281 {strides = array<i32>} : memref<2x8xf32, #tpu.memory_space<vmem>>, vector<2x8xf32>,
    return
  }
}

</mosaic_0001>

<llo_original>
// kernel: hsinet_forward.1
$region0: #{hsinet_forward.1}
  #allocation0 [shape = 'u32[]', space=smem, size = 0x4, offset = 0x4, fixed_abs, tag = 'smem constant byte address 0x4 - core index']
  #allocation1 [shape = 'u32[144,128]{1,0:T(1,128)}', space=vmem, size = 0x12000, scoped, tag = 'internal scratch']
  #allocation2 [shape = 'f32[1,1]{1,0:T(1,128)S(1)}', space=vmem, size = 0x200, scoped, tag = 'scoped memory for hsinet_forward.1']
  %s0 = inlined_call_operand.vmem [shape: f32[128,8], index: 0, kind: input, shape index: {}]
  %s1 = inlined_call_operand.vmem [shape: f32[200,32], index: 1, kind: input, shape index: {}]
  %s2 = inlined_call_operand.vmem [shape: f32[1,32], index: 2, kind: input, shape index: {}]
  %s3 = inlined_call_operand.vmem [shape: f32[1,32], index: 3, kind: input, shape index: {}]
  %s4 = inlined_call_operand.vmem [shape: f32[1,32], index: 4, kind: input, shape index: {}]
  %s5 = inlined_call_operand.vmem [shape: f32[17,32], index: 5, kind: input, shape index: {}]
  %s6 = inlined_call_operand.<no memory space> [shape: f32[1,1], index: 6, kind: input, shape index: {}]
  %s7 = inlined_call_operand.vmem [shape: f32[1,32], index: 7, kind: input, shape index: {}]
  %s8 = inlined_call_operand.vmem [shape: f32[1,32], index: 8, kind: input, shape index: {}]
  %s9 = inlined_call_operand.vmem [shape: f32[32,64], index: 9, kind: input, shape index: {}]
  %s10 = inlined_call_operand.vmem [shape: f32[32,64], index: 10, kind: input, shape index: {}]
  %s11 = inlined_call_operand.vmem [shape: f32[32,64], index: 11, kind: input, shape index: {}]
  %s12 = inlined_call_operand.vmem [shape: f32[64,32], index: 12, kind: input, shape index: {}]
  %s13 = inlined_call_operand.vmem [shape: f32[1,32], index: 13, kind: input, shape index: {}]
  %s14 = inlined_call_operand.vmem [shape: f32[1,32], index: 14, kind: input, shape index: {}]
  %s15 = inlined_call_operand.vmem [shape: f32[1,32], index: 15, kind: input, shape index: {}]
  %s16 = inlined_call_operand.vmem [shape: f32[32,8], index: 16, kind: input, shape index: {}]
  %s17 = inlined_call_operand.vmem [shape: f32[1,8], index: 17, kind: input, shape index: {}]
  %s18 = inlined_call_operand.vmem [shape: f32[8,32], index: 18, kind: input, shape index: {}]
  %s19 = inlined_call_operand.vmem [shape: f32[1,32], index: 19, kind: input, shape index: {}]
  %s20 = inlined_call_operand.vmem [shape: f32[32,64], index: 20, kind: input, shape index: {}]
  %s21 = inlined_call_operand.vmem [shape: f32[1,64], index: 21, kind: input, shape index: {}]
  %s22 = inlined_call_operand.vmem [shape: f32[1,64], index: 22, kind: input, shape index: {}]
  %s23 = inlined_call_operand.vmem [shape: f32[1,64], index: 23, kind: input, shape index: {}]
  %s24 = inlined_call_operand.vmem [shape: f32[64,8], index: 24, kind: input, shape index: {}]
  %s25 = inlined_call_operand.vmem [shape: f32[1,8], index: 25, kind: input, shape index: {}]
  %s26 = inlined_call_operand.hbm [shape: f32[2,8], index: 26, kind: output, shape index: {}]
  %s27 = sld [smem:[#allocation0]]
  $region114: #{hsinet_forward.1} parent=0
    _
  %s29 = ssub.s32 1, %s27
  %s30 = scalar_select 0, %s29, %s27
  %v31 = vstv %s6
  %32 = vst [vmem:[#allocation2] sm:$0x1] %v31
  $region1: #{hsinet_forward.1} parent=0
    #allocation3 [shape = 'u8[1024]{0}', space=vmem, size = 0x400, scoped, tag = 'output window, operand 0, single buffered']
    #allocation4 [shape = 's32[1]{0}', space=sflag, size = 0x4, scoped, tag = 'scoped memory for hsinet_forward.1']
    %33 = vsyncpa [#allocation4], 0
    // Predicated region
    $region2: #{hsinet_forward.1} parent=1 // pred_check
      _
    $region3: #{hsinet_forward.1} parent=1 // pred_check_branch
      %35 = sbr.rel (0) target = $region5
    $region4: #{hsinet_forward.1} parent=1 // pred_region
      _
    $region5: #{hsinet_forward.1} parent=1 // pred_fallthru
      _
    // Predicated region
    $region6: #{hsinet_forward.1} parent=1 // pred_check
      _
    $region7: #{hsinet_forward.1} parent=1 // pred_check_branch
      %37 = sbr.rel (0) target = $region9
    $region8: #{hsinet_forward.1} parent=1 // pred_region
      _
    $region9: #{hsinet_forward.1} parent=1 // pred_fallthru
      _
    // Predicated region
    $region10: #{hsinet_forward.1} parent=1 // pred_check
      _
    $region11: #{hsinet_forward.1} parent=1 // pred_check_branch
      %39 = sbr.rel (0) target = $region13
    $region12: #{hsinet_forward.1} parent=1 // pred_region
      _
    $region13: #{hsinet_forward.1} parent=1 // pred_fallthru
      _
    // Predicated region
    $region14: #{hsinet_forward.1} parent=1 // pred_check
      _
    $region15: #{hsinet_forward.1} parent=1 // pred_check_branch
      %41 = sbr.rel (0) target = $region17
    $region16: #{hsinet_forward.1} parent=1 // pred_region
      _
    $region17: #{hsinet_forward.1} parent=1 // pred_fallthru
      _
    // Predicated region
    $region18: #{hsinet_forward.1} parent=1 // pred_check
      _
    $region19: #{hsinet_forward.1} parent=1 // pred_check_branch
      %43 = sbr.rel (0) target = $region21
    $region20: #{hsinet_forward.1} parent=1 // pred_region
      _
    $region21: #{hsinet_forward.1} parent=1 // pred_fallthru
      _
    // Predicated region
    $region22: #{hsinet_forward.1} parent=1 // pred_check
      _
    $region23: #{hsinet_forward.1} parent=1 // pred_check_branch
      %45 = sbr.rel (0) target = $region25
    $region24: #{hsinet_forward.1} parent=1 // pred_region
      _
    $region25: #{hsinet_forward.1} parent=1 // pred_fallthru
      _
    // Predicated region
    $region26: #{hsinet_forward.1} parent=1 // pred_check
      _
    $region27: #{hsinet_forward.1} parent=1 // pred_check_branch
      %47 = sbr.rel (0) target = $region29
    $region28: #{hsinet_forward.1} parent=1 // pred_region
      _
    $region29: #{hsinet_forward.1} parent=1 // pred_fallthru
      _
    // Predicated region
    $region30: #{hsinet_forward.1} parent=1 // pred_check
      _
    $region31: #{hsinet_forward.1} parent=1 // pred_check_branch
      %49 = sbr.rel (0) target = $region33
    $region32: #{hsinet_forward.1} parent=1 // pred_region
      _
    $region33: #{hsinet_forward.1} parent=1 // pred_fallthru
      _
    // Predicated region
    $region34: #{hsinet_forward.1} parent=1 // pred_check
      _
    $region35: #{hsinet_forward.1} parent=1 // pred_check_branch
      %51 = sbr.rel (0) target = $region37
    $region36: #{hsinet_forward.1} parent=1 // pred_region
      _
    $region37: #{hsinet_forward.1} parent=1 // pred_fallthru
      _
    // Predicated region
    $region38: #{hsinet_forward.1} parent=1 // pred_check
      _
    $region39: #{hsinet_forward.1} parent=1 // pred_check_branch
      %53 = sbr.rel (0) target = $region41
    $region40: #{hsinet_forward.1} parent=1 // pred_region
      _
    $region41: #{hsinet_forward.1} parent=1 // pred_fallthru
      _
    // Predicated region
    $region42: #{hsinet_forward.1} parent=1 // pred_check
      _
    $region43: #{hsinet_forward.1} parent=1 // pred_check_branch
      %55 = sbr.rel (0) target = $region45
    $region44: #{hsinet_forward.1} parent=1 // pred_region
      _
    $region45: #{hsinet_forward.1} parent=1 // pred_fallthru
      _
    // Predicated region
    $region46: #{hsinet_forward.1} parent=1 // pred_check
      _
    $region47: #{hsinet_forward.1} parent=1 // pred_check_branch
      %57 = sbr.rel (0) target = $region49
    $region48: #{hsinet_forward.1} parent=1 // pred_region
      _
    $region49: #{hsinet_forward.1} parent=1 // pred_fallthru
      _
    // Predicated region
    $region50: #{hsinet_forward.1} parent=1 // pred_check
      _
    $region51: #{hsinet_forward.1} parent=1 // pred_check_branch
      %59 = sbr.rel (0) target = $region53
    $region52: #{hsinet_forward.1} parent=1 // pred_region
      _
    $region53: #{hsinet_forward.1} parent=1 // pred_fallthru
      _
    // Predicated region
    $region54: #{hsinet_forward.1} parent=1 // pred_check
      _
    $region55: #{hsinet_forward.1} parent=1 // pred_check_branch
      %61 = sbr.rel (0) target = $region57
    $region56: #{hsinet_forward.1} parent=1 // pred_region
      _
    $region57: #{hsinet_forward.1} parent=1 // pred_fallthru
      _
    // Predicated region
    $region58: #{hsinet_forward.1} parent=1 // pred_check
      _
    $region59: #{hsinet_forward.1} parent=1 // pred_check_branch
      %63 = sbr.rel (0) target = $region61
    $region60: #{hsinet_forward.1} parent=1 // pred_region
      _
    $region61: #{hsinet_forward.1} parent=1 // pred_fallthru
      _
    // Predicated region
    $region62: #{hsinet_forward.1} parent=1 // pred_check
      _
    $region63: #{hsinet_forward.1} parent=1 // pred_check_branch
      %65 = sbr.rel (0) target = $region65
    $region64: #{hsinet_forward.1} parent=1 // pred_region
      _
    $region65: #{hsinet_forward.1} parent=1 // pred_fallthru
      _
    // Predicated region
    $region66: #{hsinet_forward.1} parent=1 // pred_check
      _
    $region67: #{hsinet_forward.1} parent=1 // pred_check_branch
      %67 = sbr.rel (0) target = $region69
    $region68: #{hsinet_forward.1} parent=1 // pred_region
      _
    $region69: #{hsinet_forward.1} parent=1 // pred_fallthru
      _
    // Predicated region
    $region70: #{hsinet_forward.1} parent=1 // pred_check
      _
    $region71: #{hsinet_forward.1} parent=1 // pred_check_branch
      %69 = sbr.rel (0) target = $region73
    $region72: #{hsinet_forward.1} parent=1 // pred_region
      _
    $region73: #{hsinet_forward.1} parent=1 // pred_fallthru
      _
    // Predicated region
    $region74: #{hsinet_forward.1} parent=1 // pred_check
      _
    $region75: #{hsinet_forward.1} parent=1 // pred_check_branch
      %71 = sbr.rel (0) target = $region77
    $region76: #{hsinet_forward.1} parent=1 // pred_region
      _
    $region77: #{hsinet_forward.1} parent=1 // pred_fallthru
      _
    // Predicated region
    $region78: #{hsinet_forward.1} parent=1 // pred_check
      _
    $region79: #{hsinet_forward.1} parent=1 // pred_check_branch
      %73 = sbr.rel (0) target = $region81
    $region80: #{hsinet_forward.1} parent=1 // pred_region
      _
    $region81: #{hsinet_forward.1} parent=1 // pred_fallthru
      _
    // Predicated region
    $region82: #{hsinet_forward.1} parent=1 // pred_check
      _
    $region83: #{hsinet_forward.1} parent=1 // pred_check_branch
      %75 = sbr.rel (0) target = $region85
    $region84: #{hsinet_forward.1} parent=1 // pred_region
      _
    $region85: #{hsinet_forward.1} parent=1 // pred_fallthru
      _
    // Predicated region
    $region86: #{hsinet_forward.1} parent=1 // pred_check
      _
    $region87: #{hsinet_forward.1} parent=1 // pred_check_branch
      %77 = sbr.rel (0) target = $region89
    $region88: #{hsinet_forward.1} parent=1 // pred_region
      _
    $region89: #{hsinet_forward.1} parent=1 // pred_fallthru
      _
    // Predicated region
    $region90: #{hsinet_forward.1} parent=1 // pred_check
      _
    $region91: #{hsinet_forward.1} parent=1 // pred_check_branch
      %79 = sbr.rel (0) target = $region93
    $region92: #{hsinet_forward.1} parent=1 // pred_region
      _
    $region93: #{hsinet_forward.1} parent=1 // pred_fallthru
      _
    // Predicated region
    $region94: #{hsinet_forward.1} parent=1 // pred_check
      _
    $region95: #{hsinet_forward.1} parent=1 // pred_check_branch
      %81 = sbr.rel (0) target = $region97
    $region96: #{hsinet_forward.1} parent=1 // pred_region
      _
    $region97: #{hsinet_forward.1} parent=1 // pred_fallthru
      _
    // Predicated region
    $region98: #{hsinet_forward.1} parent=1 // pred_check
      _
    $region99: #{hsinet_forward.1} parent=1 // pred_check_branch
      %83 = sbr.rel (0) target = $region101
    $region100: #{hsinet_forward.1} parent=1 // pred_region
      _
    $region101: #{hsinet_forward.1} parent=1 // pred_fallthru
      _
    // Predicated region
    $region102: #{hsinet_forward.1} parent=1 // pred_check
      _
    $region103: #{hsinet_forward.1} parent=1 // pred_check_branch
      %85 = sbr.rel (0) target = $region105
    $region104: #{hsinet_forward.1} parent=1 // pred_region
      _
    $region105: #{hsinet_forward.1} parent=1 // pred_fallthru
      _
    %v86 = vld [vmem:[%s0] sm:$0xff]
    %v87 = vld [vmem:[%s0 + $0x8] sm:$0xff]
    %v88 = vld [vmem:[%s0 + $0x10] sm:$0xff]
    %v89 = vld [vmem:[%s0 + $0x18] sm:$0xff]
    %v90 = vld [vmem:[%s0 + $0x20] sm:$0xff]
    %v91 = vld [vmem:[%s0 + $0x28] sm:$0xff]
    %v92 = vld [vmem:[%s0 + $0x30] sm:$0xff]
    %v93 = vld [vmem:[%s0 + $0x38] sm:$0xff]
    %v94 = vld [vmem:[%s0 + $0x40] sm:$0xff]
    %v95 = vld [vmem:[%s0 + $0x48] sm:$0xff]
    %v96 = vld [vmem:[%s0 + $0x50] sm:$0xff]
    %v97 = vld [vmem:[%s0 + $0x58] sm:$0xff]
    %v98 = vld [vmem:[%s0 + $0x60] sm:$0xff]
    %v99 = vld [vmem:[%s0 + $0x68] sm:$0xff]
    %v100 = vld [vmem:[%s0 + $0x70] sm:$0xff]
    %v101 = vld [vmem:[%s0 + $0x78] sm:$0xff]
    %vm118 = vcmask 1046528
    %v119 = vrot.slane %v86, 1
    %v120 = vrot.slane %v87, 1
    %v121 = vsel %vm118, %v119, %v120
    %v122 = vrot.slane %v88, 1
    %v123 = vsel %vm118, %v120, %v122
    %v124 = vrot.slane %v89, 1
    %v125 = vsel %vm118, %v122, %v124
    %v126 = vrot.slane %v90, 1
    %v127 = vsel %vm118, %v124, %v126
    %v128 = vrot.slane %v91, 1
    %v129 = vsel %vm118, %v126, %v128
    %v130 = vrot.slane %v92, 1
    %v131 = vsel %vm118, %v128, %v130
    %v132 = vrot.slane %v93, 1
    %v133 = vsel %vm118, %v130, %v132
    %v134 = vrot.slane %v94, 1
    %v135 = vsel %vm118, %v132, %v134
    %v136 = vrot.slane %v95, 1
    %v137 = vsel %vm118, %v134, %v136
    %v138 = vrot.slane %v96, 1
    %v139 = vsel %vm118, %v136, %v138
    %v140 = vrot.slane %v97, 1
    %v141 = vsel %vm118, %v138, %v140
    %v142 = vrot.slane %v98, 1
    %v143 = vsel %vm118, %v140, %v142
    %v144 = vrot.slane %v99, 1
    %v145 = vsel %vm118, %v142, %v144
    %v146 = vrot.slane %v100, 1
    %v147 = vsel %vm118, %v144, %v146
    %v148 = vrot.slane %v101, 1
    %v149 = vsel %vm118, %v146, %v148
    %v152 = vsel %vm118, %v148, %v119
    %vm153 = vcmask 1045504
    %v154 = vrot.slane %v86, 2
    %v155 = vrot.slane %v87, 2
    %v156 = vsel %vm153, %v154, %v155
    %v157 = vrot.slane %v88, 2
    %v158 = vsel %vm153, %v155, %v157
    %v159 = vrot.slane %v89, 2
    %v160 = vsel %vm153, %v157, %v159
    %v161 = vrot.slane %v90, 2
    %v162 = vsel %vm153, %v159, %v161
    %v163 = vrot.slane %v91, 2
    %v164 = vsel %vm153, %v161, %v163
    %v165 = vrot.slane %v92, 2
    %v166 = vsel %vm153, %v163, %v165
    %v167 = vrot.slane %v93, 2
    %v168 = vsel %vm153, %v165, %v167
    %v169 = vrot.slane %v94, 2
    %v170 = vsel %vm153, %v167, %v169
    %v171 = vrot.slane %v95, 2
    %v172 = vsel %vm153, %v169, %v171
    %v173 = vrot.slane %v96, 2
    %v174 = vsel %vm153, %v171, %v173
    %v175 = vrot.slane %v97, 2
    %v176 = vsel %vm153, %v173, %v175
    %v177 = vrot.slane %v98, 2
    %v178 = vsel %vm153, %v175, %v177
    %v179 = vrot.slane %v99, 2
    %v180 = vsel %vm153, %v177, %v179
    %v181 = vrot.slane %v100, 2
    %v182 = vsel %vm153, %v179, %v181
    %v183 = vrot.slane %v101, 2
    %v184 = vsel %vm153, %v181, %v183
    %v187 = vsel %vm153, %v183, %v154
    %vm188 = vcmask 1044480
    %v189 = vrot.slane %v86, 3
    %v190 = vrot.slane %v87, 3
    %v191 = vsel %vm188, %v189, %v190
    %v192 = vrot.slane %v88, 3
    %v193 = vsel %vm188, %v190, %v192
    %v194 = vrot.slane %v89, 3
    %v195 = vsel %vm188, %v192, %v194
    %v196 = vrot.slane %v90, 3
    %v197 = vsel %vm188, %v194, %v196
    %v198 = vrot.slane %v91, 3
    %v199 = vsel %vm188, %v196, %v198
    %v200 = vrot.slane %v92, 3
    %v201 = vsel %vm188, %v198, %v200
    %v202 = vrot.slane %v93, 3
    %v203 = vsel %vm188, %v200, %v202
    %v204 = vrot.slane %v94, 3
    %v205 = vsel %vm188, %v202, %v204
    %v206 = vrot.slane %v95, 3
    %v207 = vsel %vm188, %v204, %v206
    %v208 = vrot.slane %v96, 3
    %v209 = vsel %vm188, %v206, %v208
    %v210 = vrot.slane %v97, 3
    %v211 = vsel %vm188, %v208, %v210
    %v212 = vrot.slane %v98, 3
    %v213 = vsel %vm188, %v210, %v212
    %v214 = vrot.slane %v99, 3
    %v215 = vsel %vm188, %v212, %v214
    %v216 = vrot.slane %v100, 3
    %v217 = vsel %vm188, %v214, %v216
    %v218 = vrot.slane %v101, 3
    %v219 = vsel %vm188, %v216, %v218
    %v222 = vsel %vm188, %v218, %v189
    %vm223 = vcmask 1043456
    %v224 = vrot.slane %v86, 4
    %v225 = vrot.slane %v87, 4
    %v226 = vsel %vm223, %v224, %v225
    %v227 = vrot.slane %v88, 4
    %v228 = vsel %vm223, %v225, %v227
    %v229 = vrot.slane %v89, 4
    %v230 = vsel %vm223, %v227, %v229
    %v231 = vrot.slane %v90, 4
    %v232 = vsel %vm223, %v229, %v231
    %v233 = vrot.slane %v91, 4
    %v234 = vsel %vm223, %v231, %v233
    %v235 = vrot.slane %v92, 4
    %v236 = vsel %vm223, %v233, %v235
    %v237 = vrot.slane %v93, 4
    %v238 = vsel %vm223, %v235, %v237
    %v239 = vrot.slane %v94, 4
    %v240 = vsel %vm223, %v237, %v239
    %v241 = vrot.slane %v95, 4
    %v242 = vsel %vm223, %v239, %v241
    %v243 = vrot.slane %v96, 4
    %v244 = vsel %vm223, %v241, %v243
    %v245 = vrot.slane %v97, 4
    %v246 = vsel %vm223, %v243, %v245
    %v247 = vrot.slane %v98, 4
    %v248 = vsel %vm223, %v245, %v247
    %v249 = vrot.slane %v99, 4
    %v250 = vsel %vm223, %v247, %v249
    %v251 = vrot.slane %v100, 4
    %v252 = vsel %vm223, %v249, %v251
    %v253 = vrot.slane %v101, 4
    %v254 = vsel %vm223, %v251, %v253
    %v257 = vsel %vm223, %v253, %v224
    %274 = vrot.lane.b32.xlu0 %v121, 8
    %v275 = vpop.permute.xlu0 %274
    %276 = vrot.lane.b32.xlu0 %v123, 8
    %v277 = vpop.permute.xlu0 %276
    %278 = vrot.lane.b32.xlu0 %v125, 8
    %v279 = vpop.permute.xlu0 %278
    %280 = vrot.lane.b32.xlu0 %v127, 8
    %v281 = vpop.permute.xlu0 %280
    %282 = vrot.lane.b32.xlu0 %v129, 8
    %v283 = vpop.permute.xlu0 %282
    %284 = vrot.lane.b32.xlu0 %v131, 8
    %v285 = vpop.permute.xlu0 %284
    %286 = vrot.lane.b32.xlu0 %v133, 8
    %v287 = vpop.permute.xlu0 %286
    %288 = vrot.lane.b32.xlu0 %v135, 8
    %v289 = vpop.permute.xlu0 %288
    %290 = vrot.lane.b32.xlu0 %v137, 8
    %v291 = vpop.permute.xlu0 %290
    %292 = vrot.lane.b32.xlu0 %v139, 8
    %v293 = vpop.permute.xlu0 %292
    %294 = vrot.lane.b32.xlu0 %v141, 8
    %v295 = vpop.permute.xlu0 %294
    %296 = vrot.lane.b32.xlu0 %v143, 8
    %v297 = vpop.permute.xlu0 %296
    %298 = vrot.lane.b32.xlu0 %v145, 8
    %v299 = vpop.permute.xlu0 %298
    %300 = vrot.lane.b32.xlu0 %v147, 8
    %v301 = vpop.permute.xlu0 %300
    %302 = vrot.lane.b32.xlu0 %v149, 8
    %v303 = vpop.permute.xlu0 %302
    %304 = vrot.lane.b32.xlu0 %v152, 8
    %v305 = vpop.permute.xlu0 %304
    %323 = vrot.lane.b32.xlu0 %v156, 16
    %v324 = vpop.permute.xlu0 %323
    %325 = vrot.lane.b32.xlu0 %v158, 16
    %v326 = vpop.permute.xlu0 %325
    %327 = vrot.lane.b32.xlu0 %v160, 16
    %v328 = vpop.permute.xlu0 %327
    %329 = vrot.lane.b32.xlu0 %v162, 16
    %v330 = vpop.permute.xlu0 %329
    %331 = vrot.lane.b32.xlu0 %v164, 16
    %v332 = vpop.permute.xlu0 %331
    %333 = vrot.lane.b32.xlu0 %v166, 16
    %v334 = vpop.permute.xlu0 %333
    %335 = vrot.lane.b32.xlu0 %v168, 16
    %v336 = vpop.permute.xlu0 %335
    %337 = vrot.lane.b32.xlu0 %v170, 16
    %v338 = vpop.permute.xlu0 %337
    %339 = vrot.lane.b32.xlu0 %v172, 16
    %v340 = vpop.permute.xlu0 %339
    %341 = vrot.lane.b32.xlu0 %v174, 16
    %v342 = vpop.permute.xlu0 %341
    %343 = vrot.lane.b32.xlu0 %v176, 16
    %v344 = vpop.permute.xlu0 %343
    %345 = vrot.lane.b32.xlu0 %v178, 16
    %v346 = vpop.permute.xlu0 %345
    %347 = vrot.lane.b32.xlu0 %v180, 16
    %v348 = vpop.permute.xlu0 %347
    %349 = vrot.lane.b32.xlu0 %v182, 16
    %v350 = vpop.permute.xlu0 %349
    %351 = vrot.lane.b32.xlu0 %v184, 16
    %v352 = vpop.permute.xlu0 %351
    %353 = vrot.lane.b32.xlu0 %v187, 16
    %v354 = vpop.permute.xlu0 %353
    %372 = vrot.lane.b32.xlu0 %v191, 24
    %v373 = vpop.permute.xlu0 %372
    %374 = vrot.lane.b32.xlu0 %v193, 24
    %v375 = vpop.permute.xlu0 %374
    %376 = vrot.lane.b32.xlu0 %v195, 24
    %v377 = vpop.permute.xlu0 %376
    %378 = vrot.lane.b32.xlu0 %v197, 24
    %v379 = vpop.permute.xlu0 %378
    %380 = vrot.lane.b32.xlu0 %v199, 24
    %v381 = vpop.permute.xlu0 %380
    %382 = vrot.lane.b32.xlu0 %v201, 24
    %v383 = vpop.permute.xlu0 %382
    %384 = vrot.lane.b32.xlu0 %v203, 24
    %v385 = vpop.permute.xlu0 %384
    %386 = vrot.lane.b32.xlu0 %v205, 24
    %v387 = vpop.permute.xlu0 %386
    %388 = vrot.lane.b32.xlu0 %v207, 24
    %v389 = vpop.permute.xlu0 %388
    %390 = vrot.lane.b32.xlu0 %v209, 24
    %v391 = vpop.permute.xlu0 %390
    %392 = vrot.lane.b32.xlu0 %v211, 24
    %v393 = vpop.permute.xlu0 %392
    %394 = vrot.lane.b32.xlu0 %v213, 24
    %v395 = vpop.permute.xlu0 %394
    %396 = vrot.lane.b32.xlu0 %v215, 24
    %v397 = vpop.permute.xlu0 %396
    %398 = vrot.lane.b32.xlu0 %v217, 24
    %v399 = vpop.permute.xlu0 %398
    %400 = vrot.lane.b32.xlu0 %v219, 24
    %v401 = vpop.permute.xlu0 %400
    %402 = vrot.lane.b32.xlu0 %v222, 24
    %v403 = vpop.permute.xlu0 %402
    %421 = vrot.lane.b32.xlu0 %v226, 32
    %v422 = vpop.permute.xlu0 %421
    %423 = vrot.lane.b32.xlu0 %v228, 32
    %v424 = vpop.permute.xlu0 %423
    %425 = vrot.lane.b32.xlu0 %v230, 32
    %v426 = vpop.permute.xlu0 %425
    %427 = vrot.lane.b32.xlu0 %v232, 32
    %v428 = vpop.permute.xlu0 %427
    %429 = vrot.lane.b32.xlu0 %v234, 32
    %v430 = vpop.permute.xlu0 %429
    %431 = vrot.lane.b32.xlu0 %v236, 32
    %v432 = vpop.permute.xlu0 %431
    %433 = vrot.lane.b32.xlu0 %v238, 32
    %v434 = vpop.permute.xlu0 %433
    %435 = vrot.lane.b32.xlu0 %v240, 32
    %v436 = vpop.permute.xlu0 %435
    %437 = vrot.lane.b32.xlu0 %v242, 32
    %v438 = vpop.permute.xlu0 %437
    %439 = vrot.lane.b32.xlu0 %v244, 32
    %v440 = vpop.permute.xlu0 %439
    %441 = vrot.lane.b32.xlu0 %v246, 32
    %v442 = vpop.permute.xlu0 %441
    %443 = vrot.lane.b32.xlu0 %v248, 32
    %v444 = vpop.permute.xlu0 %443
    %445 = vrot.lane.b32.xlu0 %v250, 32
    %v446 = vpop.permute.xlu0 %445
    %447 = vrot.lane.b32.xlu0 %v252, 32
    %v448 = vpop.permute.xlu0 %447
    %449 = vrot.lane.b32.xlu0 %v254, 32
    %v450 = vpop.permute.xlu0 %449
    %451 = vrot.lane.b32.xlu0 %v257, 32
    %v452 = vpop.permute.xlu0 %451
    %469 = vrot.lane.b32.xlu0 %v87, 40
    %v470 = vpop.permute.xlu0 %469
    %471 = vrot.lane.b32.xlu0 %v88, 40
    %v472 = vpop.permute.xlu0 %471
    %473 = vrot.lane.b32.xlu0 %v89, 40
    %v474 = vpop.permute.xlu0 %473
    %475 = vrot.lane.b32.xlu0 %v90, 40
    %v476 = vpop.permute.xlu0 %475
    %477 = vrot.lane.b32.xlu0 %v91, 40
    %v478 = vpop.permute.xlu0 %477
    %479 = vrot.lane.b32.xlu0 %v92, 40
    %v480 = vpop.permute.xlu0 %479
    %481 = vrot.lane.b32.xlu0 %v93, 40
    %v482 = vpop.permute.xlu0 %481
    %483 = vrot.lane.b32.xlu0 %v94, 40
    %v484 = vpop.permute.xlu0 %483
    %485 = vrot.lane.b32.xlu0 %v95, 40
    %v486 = vpop.permute.xlu0 %485
    %487 = vrot.lane.b32.xlu0 %v96, 40
    %v488 = vpop.permute.xlu0 %487
    %489 = vrot.lane.b32.xlu0 %v97, 40
    %v490 = vpop.permute.xlu0 %489
    %491 = vrot.lane.b32.xlu0 %v98, 40
    %v492 = vpop.permute.xlu0 %491
    %493 = vrot.lane.b32.xlu0 %v99, 40
    %v494 = vpop.permute.xlu0 %493
    %495 = vrot.lane.b32.xlu0 %v100, 40
    %v496 = vpop.permute.xlu0 %495
    %497 = vrot.lane.b32.xlu0 %v101, 40
    %v498 = vpop.permute.xlu0 %497
    %499 = vrot.lane.b32.xlu0 %v86, 40
    %v500 = vpop.permute.xlu0 %499
    %517 = vrot.lane.b32.xlu0 %v123, 48
    %v518 = vpop.permute.xlu0 %517
    %519 = vrot.lane.b32.xlu0 %v125, 48
    %v520 = vpop.permute.xlu0 %519
    %521 = vrot.lane.b32.xlu0 %v127, 48
    %v522 = vpop.permute.xlu0 %521
    %523 = vrot.lane.b32.xlu0 %v129, 48
    %v524 = vpop.permute.xlu0 %523
    %525 = vrot.lane.b32.xlu0 %v131, 48
    %v526 = vpop.permute.xlu0 %525
    %527 = vrot.lane.b32.xlu0 %v133, 48
    %v528 = vpop.permute.xlu0 %527
    %529 = vrot.lane.b32.xlu0 %v135, 48
    %v530 = vpop.permute.xlu0 %529
    %531 = vrot.lane.b32.xlu0 %v137, 48
    %v532 = vpop.permute.xlu0 %531
    %533 = vrot.lane.b32.xlu0 %v139, 48
    %v534 = vpop.permute.xlu0 %533
    %535 = vrot.lane.b32.xlu0 %v141, 48
    %v536 = vpop.permute.xlu0 %535
    %537 = vrot.lane.b32.xlu0 %v143, 48
    %v538 = vpop.permute.xlu0 %537
    %539 = vrot.lane.b32.xlu0 %v145, 48
    %v540 = vpop.permute.xlu0 %539
    %541 = vrot.lane.b32.xlu0 %v147, 48
    %v542 = vpop.permute.xlu0 %541
    %543 = vrot.lane.b32.xlu0 %v149, 48
    %v544 = vpop.permute.xlu0 %543
    %545 = vrot.lane.b32.xlu0 %v152, 48
    %v546 = vpop.permute.xlu0 %545
    %547 = vrot.lane.b32.xlu0 %v121, 48
    %v548 = vpop.permute.xlu0 %547
    %565 = vrot.lane.b32.xlu0 %v158, 56
    %v566 = vpop.permute.xlu0 %565
    %567 = vrot.lane.b32.xlu0 %v160, 56
    %v568 = vpop.permute.xlu0 %567
    %569 = vrot.lane.b32.xlu0 %v162, 56
    %v570 = vpop.permute.xlu0 %569
    %571 = vrot.lane.b32.xlu0 %v164, 56
    %v572 = vpop.permute.xlu0 %571
    %573 = vrot.lane.b32.xlu0 %v166, 56
    %v574 = vpop.permute.xlu0 %573
    %575 = vrot.lane.b32.xlu0 %v168, 56
    %v576 = vpop.permute.xlu0 %575
    %577 = vrot.lane.b32.xlu0 %v170, 56
    %v578 = vpop.permute.xlu0 %577
    %579 = vrot.lane.b32.xlu0 %v172, 56
    %v580 = vpop.permute.xlu0 %579
    %581 = vrot.lane.b32.xlu0 %v174, 56
    %v582 = vpop.permute.xlu0 %581
    %583 = vrot.lane.b32.xlu0 %v176, 56
    %v584 = vpop.permute.xlu0 %583
    %585 = vrot.lane.b32.xlu0 %v178, 56
    %v586 = vpop.permute.xlu0 %585
    %587 = vrot.lane.b32.xlu0 %v180, 56
    %v588 = vpop.permute.xlu0 %587
    %589 = vrot.lane.b32.xlu0 %v182, 56
    %v590 = vpop.permute.xlu0 %589
    %591 = vrot.lane.b32.xlu0 %v184, 56
    %v592 = vpop.permute.xlu0 %591
    %593 = vrot.lane.b32.xlu0 %v187, 56
    %v594 = vpop.permute.xlu0 %593
    %595 = vrot.lane.b32.xlu0 %v156, 56
    %v596 = vpop.permute.xlu0 %595
    %613 = vrot.lane.b32.xlu0 %v193, 64
    %v614 = vpop.permute.xlu0 %613
    %615 = vrot.lane.b32.xlu0 %v195, 64
    %v616 = vpop.permute.xlu0 %615
    %617 = vrot.lane.b32.xlu0 %v197, 64
    %v618 = vpop.permute.xlu0 %617
    %619 = vrot.lane.b32.xlu0 %v199, 64
    %v620 = vpop.permute.xlu0 %619
    %621 = vrot.lane.b32.xlu0 %v201, 64
    %v622 = vpop.permute.xlu0 %621
    %623 = vrot.lane.b32.xlu0 %v203, 64
    %v624 = vpop.permute.xlu0 %623
    %625 = vrot.lane.b32.xlu0 %v205, 64
    %v626 = vpop.permute.xlu0 %625
    %627 = vrot.lane.b32.xlu0 %v207, 64
    %v628 = vpop.permute.xlu0 %627
    %629 = vrot.lane.b32.xlu0 %v209, 64
    %v630 = vpop.permute.xlu0 %629
    %631 = vrot.lane.b32.xlu0 %v211, 64
    %v632 = vpop.permute.xlu0 %631
    %633 = vrot.lane.b32.xlu0 %v213, 64
    %v634 = vpop.permute.xlu0 %633
    %635 = vrot.lane.b32.xlu0 %v215, 64
    %v636 = vpop.permute.xlu0 %635
    %637 = vrot.lane.b32.xlu0 %v217, 64
    %v638 = vpop.permute.xlu0 %637
    %639 = vrot.lane.b32.xlu0 %v219, 64
    %v640 = vpop.permute.xlu0 %639
    %641 = vrot.lane.b32.xlu0 %v222, 64
    %v642 = vpop.permute.xlu0 %641
    %643 = vrot.lane.b32.xlu0 %v191, 64
    %v644 = vpop.permute.xlu0 %643
    %661 = vrot.lane.b32.xlu0 %v228, 72
    %v662 = vpop.permute.xlu0 %661
    %663 = vrot.lane.b32.xlu0 %v230, 72
    %v664 = vpop.permute.xlu0 %663
    %665 = vrot.lane.b32.xlu0 %v232, 72
    %v666 = vpop.permute.xlu0 %665
    %667 = vrot.lane.b32.xlu0 %v234, 72
    %v668 = vpop.permute.xlu0 %667
    %669 = vrot.lane.b32.xlu0 %v236, 72
    %v670 = vpop.permute.xlu0 %669
    %671 = vrot.lane.b32.xlu0 %v238, 72
    %v672 = vpop.permute.xlu0 %671
    %673 = vrot.lane.b32.xlu0 %v240, 72
    %v674 = vpop.permute.xlu0 %673
    %675 = vrot.lane.b32.xlu0 %v242, 72
    %v676 = vpop.permute.xlu0 %675
    %677 = vrot.lane.b32.xlu0 %v244, 72
    %v678 = vpop.permute.xlu0 %677
    %679 = vrot.lane.b32.xlu0 %v246, 72
    %v680 = vpop.permute.xlu0 %679
    %681 = vrot.lane.b32.xlu0 %v248, 72
    %v682 = vpop.permute.xlu0 %681
    %683 = vrot.lane.b32.xlu0 %v250, 72
    %v684 = vpop.permute.xlu0 %683
    %685 = vrot.lane.b32.xlu0 %v252, 72
    %v686 = vpop.permute.xlu0 %685
    %687 = vrot.lane.b32.xlu0 %v254, 72
    %v688 = vpop.permute.xlu0 %687
    %689 = vrot.lane.b32.xlu0 %v257, 72
    %v690 = vpop.permute.xlu0 %689
    %691 = vrot.lane.b32.xlu0 %v226, 72
    %v692 = vpop.permute.xlu0 %691
    %709 = vrot.lane.b32.xlu0 %v88, 80
    %v710 = vpop.permute.xlu0 %709
    %711 = vrot.lane.b32.xlu0 %v89, 80
    %v712 = vpop.permute.xlu0 %711
    %713 = vrot.lane.b32.xlu0 %v90, 80
    %v714 = vpop.permute.xlu0 %713
    %715 = vrot.lane.b32.xlu0 %v91, 80
    %v716 = vpop.permute.xlu0 %715
    %717 = vrot.lane.b32.xlu0 %v92, 80
    %v718 = vpop.permute.xlu0 %717
    %719 = vrot.lane.b32.xlu0 %v93, 80
    %v720 = vpop.permute.xlu0 %719
    %721 = vrot.lane.b32.xlu0 %v94, 80
    %v722 = vpop.permute.xlu0 %721
    %723 = vrot.lane.b32.xlu0 %v95, 80
    %v724 = vpop.permute.xlu0 %723
    %725 = vrot.lane.b32.xlu0 %v96, 80
    %v726 = vpop.permute.xlu0 %725
    %727 = vrot.lane.b32.xlu0 %v97, 80
    %v728 = vpop.permute.xlu0 %727
    %729 = vrot.lane.b32.xlu0 %v98, 80
    %v730 = vpop.permute.xlu0 %729
    %731 = vrot.lane.b32.xlu0 %v99, 80
    %v732 = vpop.permute.xlu0 %731
    %733 = vrot.lane.b32.xlu0 %v100, 80
    %v734 = vpop.permute.xlu0 %733
    %735 = vrot.lane.b32.xlu0 %v101, 80
    %v736 = vpop.permute.xlu0 %735
    %737 = vrot.lane.b32.xlu0 %v86, 80
    %v738 = vpop.permute.xlu0 %737
    %739 = vrot.lane.b32.xlu0 %v87, 80
    %v740 = vpop.permute.xlu0 %739
    %757 = vrot.lane.b32.xlu0 %v125, 88
    %v758 = vpop.permute.xlu0 %757
    %759 = vrot.lane.b32.xlu0 %v127, 88
    %v760 = vpop.permute.xlu0 %759
    %761 = vrot.lane.b32.xlu0 %v129, 88
    %v762 = vpop.permute.xlu0 %761
    %763 = vrot.lane.b32.xlu0 %v131, 88
    %v764 = vpop.permute.xlu0 %763
    %765 = vrot.lane.b32.xlu0 %v133, 88
    %v766 = vpop.permute.xlu0 %765
    %767 = vrot.lane.b32.xlu0 %v135, 88
    %v768 = vpop.permute.xlu0 %767
    %769 = vrot.lane.b32.xlu0 %v137, 88
    %v770 = vpop.permute.xlu0 %769
    %771 = vrot.lane.b32.xlu0 %v139, 88
    %v772 = vpop.permute.xlu0 %771
    %773 = vrot.lane.b32.xlu0 %v141, 88
    %v774 = vpop.permute.xlu0 %773
    %775 = vrot.lane.b32.xlu0 %v143, 88
    %v776 = vpop.permute.xlu0 %775
    %777 = vrot.lane.b32.xlu0 %v145, 88
    %v778 = vpop.permute.xlu0 %777
    %779 = vrot.lane.b32.xlu0 %v147, 88
    %v780 = vpop.permute.xlu0 %779
    %781 = vrot.lane.b32.xlu0 %v149, 88
    %v782 = vpop.permute.xlu0 %781
    %783 = vrot.lane.b32.xlu0 %v152, 88
    %v784 = vpop.permute.xlu0 %783
    %785 = vrot.lane.b32.xlu0 %v121, 88
    %v786 = vpop.permute.xlu0 %785
    %787 = vrot.lane.b32.xlu0 %v123, 88
    %v788 = vpop.permute.xlu0 %787
    %805 = vrot.lane.b32.xlu0 %v160, 96
    %v806 = vpop.permute.xlu0 %805
    %807 = vrot.lane.b32.xlu0 %v162, 96
    %v808 = vpop.permute.xlu0 %807
    %809 = vrot.lane.b32.xlu0 %v164, 96
    %v810 = vpop.permute.xlu0 %809
    %811 = vrot.lane.b32.xlu0 %v166, 96
    %v812 = vpop.permute.xlu0 %811
    %813 = vrot.lane.b32.xlu0 %v168, 96
    %v814 = vpop.permute.xlu0 %813
    %815 = vrot.lane.b32.xlu0 %v170, 96
    %v816 = vpop.permute.xlu0 %815
    %817 = vrot.lane.b32.xlu0 %v172, 96
    %v818 = vpop.permute.xlu0 %817
    %819 = vrot.lane.b32.xlu0 %v174, 96
    %v820 = vpop.permute.xlu0 %819
    %821 = vrot.lane.b32.xlu0 %v176, 96
    %v822 = vpop.permute.xlu0 %821
    %823 = vrot.lane.b32.xlu0 %v178, 96
    %v824 = vpop.permute.xlu0 %823
    %825 = vrot.lane.b32.xlu0 %v180, 96
    %v826 = vpop.permute.xlu0 %825
    %827 = vrot.lane.b32.xlu0 %v182, 96
    %v828 = vpop.permute.xlu0 %827
    %829 = vrot.lane.b32.xlu0 %v184, 96
    %v830 = vpop.permute.xlu0 %829
    %831 = vrot.lane.b32.xlu0 %v187, 96
    %v832 = vpop.permute.xlu0 %831
    %833 = vrot.lane.b32.xlu0 %v156, 96
    %v834 = vpop.permute.xlu0 %833
    %835 = vrot.lane.b32.xlu0 %v158, 96
    %v836 = vpop.permute.xlu0 %835
    %853 = vrot.lane.b32.xlu0 %v195, 104
    %v854 = vpop.permute.xlu0 %853
    %855 = vrot.lane.b32.xlu0 %v197, 104
    %v856 = vpop.permute.xlu0 %855
    %857 = vrot.lane.b32.xlu0 %v199, 104
    %v858 = vpop.permute.xlu0 %857
    %859 = vrot.lane.b32.xlu0 %v201, 104
    %v860 = vpop.permute.xlu0 %859
    %861 = vrot.lane.b32.xlu0 %v203, 104
    %v862 = vpop.permute.xlu0 %861
    %863 = vrot.lane.b32.xlu0 %v205, 104
    %v864 = vpop.permute.xlu0 %863
    %865 = vrot.lane.b32.xlu0 %v207, 104
    %v866 = vpop.permute.xlu0 %865
    %867 = vrot.lane.b32.xlu0 %v209, 104
    %v868 = vpop.permute.xlu0 %867
    %869 = vrot.lane.b32.xlu0 %v211, 104
    %v870 = vpop.permute.xlu0 %869
    %871 = vrot.lane.b32.xlu0 %v213, 104
    %v872 = vpop.permute.xlu0 %871
    %873 = vrot.lane.b32.xlu0 %v215, 104
    %v874 = vpop.permute.xlu0 %873
    %875 = vrot.lane.b32.xlu0 %v217, 104
    %v876 = vpop.permute.xlu0 %875
    %877 = vrot.lane.b32.xlu0 %v219, 104
    %v878 = vpop.permute.xlu0 %877
    %879 = vrot.lane.b32.xlu0 %v222, 104
    %v880 = vpop.permute.xlu0 %879
    %881 = vrot.lane.b32.xlu0 %v191, 104
    %v882 = vpop.permute.xlu0 %881
    %883 = vrot.lane.b32.xlu0 %v193, 104
    %v884 = vpop.permute.xlu0 %883
    %901 = vrot.lane.b32.xlu0 %v230, 112
    %v902 = vpop.permute.xlu0 %901
    %903 = vrot.lane.b32.xlu0 %v232, 112
    %v904 = vpop.permute.xlu0 %903
    %905 = vrot.lane.b32.xlu0 %v234, 112
    %v906 = vpop.permute.xlu0 %905
    %907 = vrot.lane.b32.xlu0 %v236, 112
    %v908 = vpop.permute.xlu0 %907
    %909 = vrot.lane.b32.xlu0 %v238, 112
    %v910 = vpop.permute.xlu0 %909
    %911 = vrot.lane.b32.xlu0 %v240, 112
    %v912 = vpop.permute.xlu0 %911
    %913 = vrot.lane.b32.xlu0 %v242, 112
    %v914 = vpop.permute.xlu0 %913
    %915 = vrot.lane.b32.xlu0 %v244, 112
    %v916 = vpop.permute.xlu0 %915
    %917 = vrot.lane.b32.xlu0 %v246, 112
    %v918 = vpop.permute.xlu0 %917
    %919 = vrot.lane.b32.xlu0 %v248, 112
    %v920 = vpop.permute.xlu0 %919
    %921 = vrot.lane.b32.xlu0 %v250, 112
    %v922 = vpop.permute.xlu0 %921
    %923 = vrot.lane.b32.xlu0 %v252, 112
    %v924 = vpop.permute.xlu0 %923
    %925 = vrot.lane.b32.xlu0 %v254, 112
    %v926 = vpop.permute.xlu0 %925
    %927 = vrot.lane.b32.xlu0 %v257, 112
    %v928 = vpop.permute.xlu0 %927
    %929 = vrot.lane.b32.xlu0 %v226, 112
    %v930 = vpop.permute.xlu0 %929
    %931 = vrot.lane.b32.xlu0 %v228, 112
    %v932 = vpop.permute.xlu0 %931
    %949 = vrot.lane.b32.xlu0 %v89, 120
    %v950 = vpop.permute.xlu0 %949
    %951 = vrot.lane.b32.xlu0 %v90, 120
    %v952 = vpop.permute.xlu0 %951
    %953 = vrot.lane.b32.xlu0 %v91, 120
    %v954 = vpop.permute.xlu0 %953
    %955 = vrot.lane.b32.xlu0 %v92, 120
    %v956 = vpop.permute.xlu0 %955
    %957 = vrot.lane.b32.xlu0 %v93, 120
    %v958 = vpop.permute.xlu0 %957
    %959 = vrot.lane.b32.xlu0 %v94, 120
    %v960 = vpop.permute.xlu0 %959
    %961 = vrot.lane.b32.xlu0 %v95, 120
    %v962 = vpop.permute.xlu0 %961
    %963 = vrot.lane.b32.xlu0 %v96, 120
    %v964 = vpop.permute.xlu0 %963
    %965 = vrot.lane.b32.xlu0 %v97, 120
    %v966 = vpop.permute.xlu0 %965
    %967 = vrot.lane.b32.xlu0 %v98, 120
    %v968 = vpop.permute.xlu0 %967
    %969 = vrot.lane.b32.xlu0 %v99, 120
    %v970 = vpop.permute.xlu0 %969
    %971 = vrot.lane.b32.xlu0 %v100, 120
    %v972 = vpop.permute.xlu0 %971
    %973 = vrot.lane.b32.xlu0 %v101, 120
    %v974 = vpop.permute.xlu0 %973
    %975 = vrot.lane.b32.xlu0 %v86, 120
    %v976 = vpop.permute.xlu0 %975
    %977 = vrot.lane.b32.xlu0 %v87, 120
    %v978 = vpop.permute.xlu0 %977
    %979 = vrot.lane.b32.xlu0 %v88, 120
    %v980 = vpop.permute.xlu0 %979
    %vm997 = vcmask 64512
    %v998 = vsel %vm997, %v86, %v275
    %v999 = vsel %vm997, %v87, %v277
    %v1000 = vsel %vm997, %v88, %v279
    %v1001 = vsel %vm997, %v89, %v281
    %v1002 = vsel %vm997, %v90, %v283
    %v1003 = vsel %vm997, %v91, %v285
    %v1004 = vsel %vm997, %v92, %v287
    %v1005 = vsel %vm997, %v93, %v289
    %v1006 = vsel %vm997, %v94, %v291
    %v1007 = vsel %vm997, %v95, %v293
    %v1008 = vsel %vm997, %v96, %v295
    %v1009 = vsel %vm997, %v97, %v297
    %v1010 = vsel %vm997, %v98, %v299
    %v1011 = vsel %vm997, %v99, %v301
    %v1012 = vsel %vm997, %v100, %v303
    %v1013 = vsel %vm997, %v101, %v305
    %vm1014 = vcmask 130048
    %v1015 = vsel %vm1014, %v998, %v324
    %v1016 = vsel %vm1014, %v999, %v326
    %v1017 = vsel %vm1014, %v1000, %v328
    %v1018 = vsel %vm1014, %v1001, %v330
    %v1019 = vsel %vm1014, %v1002, %v332
    %v1020 = vsel %vm1014, %v1003, %v334
    %v1021 = vsel %vm1014, %v1004, %v336
    %v1022 = vsel %vm1014, %v1005, %v338
    %v1023 = vsel %vm1014, %v1006, %v340
    %v1024 = vsel %vm1014, %v1007, %v342
    %v1025 = vsel %vm1014, %v1008, %v344
    %v1026 = vsel %vm1014, %v1009, %v346
    %v1027 = vsel %vm1014, %v1010, %v348
    %v1028 = vsel %vm1014, %v1011, %v350
    %v1029 = vsel %vm1014, %v1012, %v352
    %v1030 = vsel %vm1014, %v1013, %v354
    %vm1031 = vcmask 195584
    %v1032 = vsel %vm1031, %v1015, %v373
    %v1033 = vsel %vm1031, %v1016, %v375
    %v1034 = vsel %vm1031, %v1017, %v377
    %v1035 = vsel %vm1031, %v1018, %v379
    %v1036 = vsel %vm1031, %v1019, %v381
    %v1037 = vsel %vm1031, %v1020, %v383
    %v1038 = vsel %vm1031, %v1021, %v385
    %v1039 = vsel %vm1031, %v1022, %v387
    %v1040 = vsel %vm1031, %v1023, %v389
    %v1041 = vsel %vm1031, %v1024, %v391
    %v1042 = vsel %vm1031, %v1025, %v393
    %v1043 = vsel %vm1031, %v1026, %v395
    %v1044 = vsel %vm1031, %v1027, %v397
    %v1045 = vsel %vm1031, %v1028, %v399
    %v1046 = vsel %vm1031, %v1029, %v401
    %v1047 = vsel %vm1031, %v1030, %v403
    %vm1048 = vcmask 261120
    %v1049 = vsel %vm1048, %v1032, %v422
    %v1050 = vsel %vm1048, %v1033, %v424
    %v1051 = vsel %vm1048, %v1034, %v426
    %v1052 = vsel %vm1048, %v1035, %v428
    %v1053 = vsel %vm1048, %v1036, %v430
    %v1054 = vsel %vm1048, %v1037, %v432
    %v1055 = vsel %vm1048, %v1038, %v434
    %v1056 = vsel %vm1048, %v1039, %v436
    %v1057 = vsel %vm1048, %v1040, %v438
    %v1058 = vsel %vm1048, %v1041, %v440
    %v1059 = vsel %vm1048, %v1042, %v442
    %v1060 = vsel %vm1048, %v1043, %v444
    %v1061 = vsel %vm1048, %v1044, %v446
    %v1062 = vsel %vm1048, %v1045, %v448
    %v1063 = vsel %vm1048, %v1046, %v450
    %v1064 = vsel %vm1048, %v1047, %v452
    %vm1065 = vcmask 326656
    %v1066 = vsel %vm1065, %v1049, %v470
    %v1067 = vsel %vm1065, %v1050, %v472
    %v1068 = vsel %vm1065, %v1051, %v474
    %v1069 = vsel %vm1065, %v1052, %v476
    %v1070 = vsel %vm1065, %v1053, %v478
    %v1071 = vsel %vm1065, %v1054, %v480
    %v1072 = vsel %vm1065, %v1055, %v482
    %v1073 = vsel %vm1065, %v1056, %v484
    %v1074 = vsel %vm1065, %v1057, %v486
    %v1075 = vsel %vm1065, %v1058, %v488
    %v1076 = vsel %vm1065, %v1059, %v490
    %v1077 = vsel %vm1065, %v1060, %v492
    %v1078 = vsel %vm1065, %v1061, %v494
    %v1079 = vsel %vm1065, %v1062, %v496
    %v1080 = vsel %vm1065, %v1063, %v498
    %v1081 = vsel %vm1065, %v1064, %v500
    %vm1082 = vcmask 392192
    %v1083 = vsel %vm1082, %v1066, %v518
    %v1084 = vsel %vm1082, %v1067, %v520
    %v1085 = vsel %vm1082, %v1068, %v522
    %v1086 = vsel %vm1082, %v1069, %v524
    %v1087 = vsel %vm1082, %v1070, %v526
    %v1088 = vsel %vm1082, %v1071, %v528
    %v1089 = vsel %vm1082, %v1072, %v530
    %v1090 = vsel %vm1082, %v1073, %v532
    %v1091 = vsel %vm1082, %v1074, %v534
    %v1092 = vsel %vm1082, %v1075, %v536
    %v1093 = vsel %vm1082, %v1076, %v538
    %v1094 = vsel %vm1082, %v1077, %v540
    %v1095 = vsel %vm1082, %v1078, %v542
    %v1096 = vsel %vm1082, %v1079, %v544
    %v1097 = vsel %vm1082, %v1080, %v546
    %v1098 = vsel %vm1082, %v1081, %v548
    %vm1099 = vcmask 457728
    %v1100 = vsel %vm1099, %v1083, %v566
    %v1101 = vsel %vm1099, %v1084, %v568
    %v1102 = vsel %vm1099, %v1085, %v570
    %v1103 = vsel %vm1099, %v1086, %v572
    %v1104 = vsel %vm1099, %v1087, %v574
    %v1105 = vsel %vm1099, %v1088, %v576
    %v1106 = vsel %vm1099, %v1089, %v578
    %v1107 = vsel %vm1099, %v1090, %v580
    %v1108 = vsel %vm1099, %v1091, %v582
    %v1109 = vsel %vm1099, %v1092, %v584
    %v1110 = vsel %vm1099, %v1093, %v586
    %v1111 = vsel %vm1099, %v1094, %v588
    %v1112 = vsel %vm1099, %v1095, %v590
    %v1113 = vsel %vm1099, %v1096, %v592
    %v1114 = vsel %vm1099, %v1097, %v594
    %v1115 = vsel %vm1099, %v1098, %v596
    %vm1116 = vcmask 523264
    %v1117 = vsel %vm1116, %v1100, %v614
    %v1118 = vsel %vm1116, %v1101, %v616
    %v1119 = vsel %vm1116, %v1102, %v618
    %v1120 = vsel %vm1116, %v1103, %v620
    %v1121 = vsel %vm1116, %v1104, %v622
    %v1122 = vsel %vm1116, %v1105, %v624
    %v1123 = vsel %vm1116, %v1106, %v626
    %v1124 = vsel %vm1116, %v1107, %v628
    %v1125 = vsel %vm1116, %v1108, %v630
    %v1126 = vsel %vm1116, %v1109, %v632
    %v1127 = vsel %vm1116, %v1110, %v634
    %v1128 = vsel %vm1116, %v1111, %v636
    %v1129 = vsel %vm1116, %v1112, %v638
    %v1130 = vsel %vm1116, %v1113, %v640
    %v1131 = vsel %vm1116, %v1114, %v642
    %v1132 = vsel %vm1116, %v1115, %v644
    %vm1133 = vcmask 588800
    %v1134 = vsel %vm1133, %v1117, %v662
    %v1135 = vsel %vm1133, %v1118, %v664
    %v1136 = vsel %vm1133, %v1119, %v666
    %v1137 = vsel %vm1133, %v1120, %v668
    %v1138 = vsel %vm1133, %v1121, %v670
    %v1139 = vsel %vm1133, %v1122, %v672
    %v1140 = vsel %vm1133, %v1123, %v674
    %v1141 = vsel %vm1133, %v1124, %v676
    %v1142 = vsel %vm1133, %v1125, %v678
    %v1143 = vsel %vm1133, %v1126, %v680
    %v1144 = vsel %vm1133, %v1127, %v682
    %v1145 = vsel %vm1133, %v1128, %v684
    %v1146 = vsel %vm1133, %v1129, %v686
    %v1147 = vsel %vm1133, %v1130, %v688
    %v1148 = vsel %vm1133, %v1131, %v690
    %v1149 = vsel %vm1133, %v1132, %v692
    %vm1150 = vcmask 654336
    %v1151 = vsel %vm1150, %v1134, %v710
    %v1152 = vsel %vm1150, %v1135, %v712
    %v1153 = vsel %vm1150, %v1136, %v714
    %v1154 = vsel %vm1150, %v1137, %v716
    %v1155 = vsel %vm1150, %v1138, %v718
    %v1156 = vsel %vm1150, %v1139, %v720
    %v1157 = vsel %vm1150, %v1140, %v722
    %v1158 = vsel %vm1150, %v1141, %v724
    %v1159 = vsel %vm1150, %v1142, %v726
    %v1160 = vsel %vm1150, %v1143, %v728
    %v1161 = vsel %vm1150, %v1144, %v730
    %v1162 = vsel %vm1150, %v1145, %v732
    %v1163 = vsel %vm1150, %v1146, %v734
    %v1164 = vsel %vm1150, %v1147, %v736
    %v1165 = vsel %vm1150, %v1148, %v738
    %v1166 = vsel %vm1150, %v1149, %v740
    %vm1167 = vcmask 719872
    %v1168 = vsel %vm1167, %v1151, %v758
    %v1169 = vsel %vm1167, %v1152, %v760
    %v1170 = vsel %vm1167, %v1153, %v762
    %v1171 = vsel %vm1167, %v1154, %v764
    %v1172 = vsel %vm1167, %v1155, %v766
    %v1173 = vsel %vm1167, %v1156, %v768
    %v1174 = vsel %vm1167, %v1157, %v770
    %v1175 = vsel %vm1167, %v1158, %v772
    %v1176 = vsel %vm1167, %v1159, %v774
    %v1177 = vsel %vm1167, %v1160, %v776
    %v1178 = vsel %vm1167, %v1161, %v778
    %v1179 = vsel %vm1167, %v1162, %v780
    %v1180 = vsel %vm1167, %v1163, %v782
    %v1181 = vsel %vm1167, %v1164, %v784
    %v1182 = vsel %vm1167, %v1165, %v786
    %v1183 = vsel %vm1167, %v1166, %v788
    %vm1184 = vcmask 785408
    %v1185 = vsel %vm1184, %v1168, %v806
    %v1186 = vsel %vm1184, %v1169, %v808
    %v1187 = vsel %vm1184, %v1170, %v810
    %v1188 = vsel %vm1184, %v1171, %v812
    %v1189 = vsel %vm1184, %v1172, %v814
    %v1190 = vsel %vm1184, %v1173, %v816
    %v1191 = vsel %vm1184, %v1174, %v818
    %v1192 = vsel %vm1184, %v1175, %v820
    %v1193 = vsel %vm1184, %v1176, %v822
    %v1194 = vsel %vm1184, %v1177, %v824
    %v1195 = vsel %vm1184, %v1178, %v826
    %v1196 = vsel %vm1184, %v1179, %v828
    %v1197 = vsel %vm1184, %v1180, %v830
    %v1198 = vsel %vm1184, %v1181, %v832
    %v1199 = vsel %vm1184, %v1182, %v834
    %v1200 = vsel %vm1184, %v1183, %v836
    %vm1201 = vcmask 850944
    %v1202 = vsel %vm1201, %v1185, %v854
    %v1203 = vsel %vm1201, %v1186, %v856
    %v1204 = vsel %vm1201, %v1187, %v858
    %v1205 = vsel %vm1201, %v1188, %v860
    %v1206 = vsel %vm1201, %v1189, %v862
    %v1207 = vsel %vm1201, %v1190, %v864
    %v1208 = vsel %vm1201, %v1191, %v866
    %v1209 = vsel %vm1201, %v1192, %v868
    %v1210 = vsel %vm1201, %v1193, %v870
    %v1211 = vsel %vm1201, %v1194, %v872
    %v1212 = vsel %vm1201, %v1195, %v874
    %v1213 = vsel %vm1201, %v1196, %v876
    %v1214 = vsel %vm1201, %v1197, %v878
    %v1215 = vsel %vm1201, %v1198, %v880
    %v1216 = vsel %vm1201, %v1199, %v882
    %v1217 = vsel %vm1201, %v1200, %v884
    %vm1218 = vcmask 916480
    %v1219 = vsel %vm1218, %v1202, %v902
    %v1220 = vsel %vm1218, %v1203, %v904
    %v1221 = vsel %vm1218, %v1204, %v906
    %v1222 = vsel %vm1218, %v1205, %v908
    %v1223 = vsel %vm1218, %v1206, %v910
    %v1224 = vsel %vm1218, %v1207, %v912
    %v1225 = vsel %vm1218, %v1208, %v914
    %v1226 = vsel %vm1218, %v1209, %v916
    %v1227 = vsel %vm1218, %v1210, %v918
    %v1228 = vsel %vm1218, %v1211, %v920
    %v1229 = vsel %vm1218, %v1212, %v922
    %v1230 = vsel %vm1218, %v1213, %v924
    %v1231 = vsel %vm1218, %v1214, %v926
    %v1232 = vsel %vm1218, %v1215, %v928
    %v1233 = vsel %vm1218, %v1216, %v930
    %v1234 = vsel %vm1218, %v1217, %v932
    %vm1235 = vcmask 982016
    %v1236 = vsel %vm1235, %v1219, %v950
    %v1237 = vsel %vm1235, %v1220, %v952
    %v1238 = vsel %vm1235, %v1221, %v954
    %v1239 = vsel %vm1235, %v1222, %v956
    %v1240 = vsel %vm1235, %v1223, %v958
    %v1241 = vsel %vm1235, %v1224, %v960
    %v1242 = vsel %vm1235, %v1225, %v962
    %v1243 = vsel %vm1235, %v1226, %v964
    %v1244 = vsel %vm1235, %v1227, %v966
    %v1245 = vsel %vm1235, %v1228, %v968
    %v1246 = vsel %vm1235, %v1229, %v970
    %v1247 = vsel %vm1235, %v1230, %v972
    %v1248 = vsel %vm1235, %v1231, %v974
    %v1249 = vsel %vm1235, %v1232, %v976
    %v1250 = vsel %vm1235, %v1233, %v978
    %v1251 = vsel %vm1235, %v1234, %v980
    %1252 = vrot.lane.b32.xlu0 %v162, 8
    %v1253 = vpop.permute.xlu0 %1252
    %1254 = vrot.lane.b32.xlu0 %v164, 8
    %v1255 = vpop.permute.xlu0 %1254
    %1256 = vrot.lane.b32.xlu0 %v166, 8
    %v1257 = vpop.permute.xlu0 %1256
    %1258 = vrot.lane.b32.xlu0 %v168, 8
    %v1259 = vpop.permute.xlu0 %1258
    %1260 = vrot.lane.b32.xlu0 %v170, 8
    %v1261 = vpop.permute.xlu0 %1260
    %1262 = vrot.lane.b32.xlu0 %v172, 8
    %v1263 = vpop.permute.xlu0 %1262
    %1264 = vrot.lane.b32.xlu0 %v174, 8
    %v1265 = vpop.permute.xlu0 %1264
    %1266 = vrot.lane.b32.xlu0 %v176, 8
    %v1267 = vpop.permute.xlu0 %1266
    %1268 = vrot.lane.b32.xlu0 %v178, 8
    %v1269 = vpop.permute.xlu0 %1268
    %1270 = vrot.lane.b32.xlu0 %v180, 8
    %v1271 = vpop.permute.xlu0 %1270
    %1272 = vrot.lane.b32.xlu0 %v182, 8
    %v1273 = vpop.permute.xlu0 %1272
    %1274 = vrot.lane.b32.xlu0 %v184, 8
    %v1275 = vpop.permute.xlu0 %1274
    %1276 = vrot.lane.b32.xlu0 %v187, 8
    %v1277 = vpop.permute.xlu0 %1276
    %1278 = vrot.lane.b32.xlu0 %v156, 8
    %v1279 = vpop.permute.xlu0 %1278
    %1280 = vrot.lane.b32.xlu0 %v158, 8
    %v1281 = vpop.permute.xlu0 %1280
    %1282 = vrot.lane.b32.xlu0 %v160, 8
    %v1283 = vpop.permute.xlu0 %1282
    %1300 = vrot.lane.b32.xlu0 %v197, 16
    %v1301 = vpop.permute.xlu0 %1300
    %1302 = vrot.lane.b32.xlu0 %v199, 16
    %v1303 = vpop.permute.xlu0 %1302
    %1304 = vrot.lane.b32.xlu0 %v201, 16
    %v1305 = vpop.permute.xlu0 %1304
    %1306 = vrot.lane.b32.xlu0 %v203, 16
    %v1307 = vpop.permute.xlu0 %1306
    %1308 = vrot.lane.b32.xlu0 %v205, 16
    %v1309 = vpop.permute.xlu0 %1308
    %1310 = vrot.lane.b32.xlu0 %v207, 16
    %v1311 = vpop.permute.xlu0 %1310
    %1312 = vrot.lane.b32.xlu0 %v209, 16
    %v1313 = vpop.permute.xlu0 %1312
    %1314 = vrot.lane.b32.xlu0 %v211, 16
    %v1315 = vpop.permute.xlu0 %1314
    %1316 = vrot.lane.b32.xlu0 %v213, 16
    %v1317 = vpop.permute.xlu0 %1316
    %1318 = vrot.lane.b32.xlu0 %v215, 16
    %v1319 = vpop.permute.xlu0 %1318
    %1320 = vrot.lane.b32.xlu0 %v217, 16
    %v1321 = vpop.permute.xlu0 %1320
    %1322 = vrot.lane.b32.xlu0 %v219, 16
    %v1323 = vpop.permute.xlu0 %1322
    %1324 = vrot.lane.b32.xlu0 %v222, 16
    %v1325 = vpop.permute.xlu0 %1324
    %1326 = vrot.lane.b32.xlu0 %v191, 16
    %v1327 = vpop.permute.xlu0 %1326
    %1328 = vrot.lane.b32.xlu0 %v193, 16
    %v1329 = vpop.permute.xlu0 %1328
    %1330 = vrot.lane.b32.xlu0 %v195, 16
    %v1331 = vpop.permute.xlu0 %1330
    %1348 = vrot.lane.b32.xlu0 %v232, 24
    %v1349 = vpop.permute.xlu0 %1348
    %1350 = vrot.lane.b32.xlu0 %v234, 24
    %v1351 = vpop.permute.xlu0 %1350
    %1352 = vrot.lane.b32.xlu0 %v236, 24
    %v1353 = vpop.permute.xlu0 %1352
    %1354 = vrot.lane.b32.xlu0 %v238, 24
    %v1355 = vpop.permute.xlu0 %1354
    %1356 = vrot.lane.b32.xlu0 %v240, 24
    %v1357 = vpop.permute.xlu0 %1356
    %1358 = vrot.lane.b32.xlu0 %v242, 24
    %v1359 = vpop.permute.xlu0 %1358
    %1360 = vrot.lane.b32.xlu0 %v244, 24
    %v1361 = vpop.permute.xlu0 %1360
    %1362 = vrot.lane.b32.xlu0 %v246, 24
    %v1363 = vpop.permute.xlu0 %1362
    %1364 = vrot.lane.b32.xlu0 %v248, 24
    %v1365 = vpop.permute.xlu0 %1364
    %1366 = vrot.lane.b32.xlu0 %v250, 24
    %v1367 = vpop.permute.xlu0 %1366
    %1368 = vrot.lane.b32.xlu0 %v252, 24
    %v1369 = vpop.permute.xlu0 %1368
    %1370 = vrot.lane.b32.xlu0 %v254, 24
    %v1371 = vpop.permute.xlu0 %1370
    %1372 = vrot.lane.b32.xlu0 %v257, 24
    %v1373 = vpop.permute.xlu0 %1372
    %1374 = vrot.lane.b32.xlu0 %v226, 24
    %v1375 = vpop.permute.xlu0 %1374
    %1376 = vrot.lane.b32.xlu0 %v228, 24
    %v1377 = vpop.permute.xlu0 %1376
    %1378 = vrot.lane.b32.xlu0 %v230, 24
    %v1379 = vpop.permute.xlu0 %1378
    %1396 = vrot.lane.b32.xlu0 %v90, 32
    %v1397 = vpop.permute.xlu0 %1396
    %1398 = vrot.lane.b32.xlu0 %v91, 32
    %v1399 = vpop.permute.xlu0 %1398
    %1400 = vrot.lane.b32.xlu0 %v92, 32
    %v1401 = vpop.permute.xlu0 %1400
    %1402 = vrot.lane.b32.xlu0 %v93, 32
    %v1403 = vpop.permute.xlu0 %1402
    %1404 = vrot.lane.b32.xlu0 %v94, 32
    %v1405 = vpop.permute.xlu0 %1404
    %1406 = vrot.lane.b32.xlu0 %v95, 32
    %v1407 = vpop.permute.xlu0 %1406
    %1408 = vrot.lane.b32.xlu0 %v96, 32
    %v1409 = vpop.permute.xlu0 %1408
    %1410 = vrot.lane.b32.xlu0 %v97, 32
    %v1411 = vpop.permute.xlu0 %1410
    %1412 = vrot.lane.b32.xlu0 %v98, 32
    %v1413 = vpop.permute.xlu0 %1412
    %1414 = vrot.lane.b32.xlu0 %v99, 32
    %v1415 = vpop.permute.xlu0 %1414
    %1416 = vrot.lane.b32.xlu0 %v100, 32
    %v1417 = vpop.permute.xlu0 %1416
    %1418 = vrot.lane.b32.xlu0 %v101, 32
    %v1419 = vpop.permute.xlu0 %1418
    %1420 = vrot.lane.b32.xlu0 %v86, 32
    %v1421 = vpop.permute.xlu0 %1420
    %1422 = vrot.lane.b32.xlu0 %v87, 32
    %v1423 = vpop.permute.xlu0 %1422
    %1424 = vrot.lane.b32.xlu0 %v88, 32
    %v1425 = vpop.permute.xlu0 %1424
    %1426 = vrot.lane.b32.xlu0 %v89, 32
    %v1427 = vpop.permute.xlu0 %1426
    %1444 = vrot.lane.b32.xlu0 %v129, 40
    %v1445 = vpop.permute.xlu0 %1444
    %1446 = vrot.lane.b32.xlu0 %v131, 40
    %v1447 = vpop.permute.xlu0 %1446
    %1448 = vrot.lane.b32.xlu0 %v133, 40
    %v1449 = vpop.permute.xlu0 %1448
    %1450 = vrot.lane.b32.xlu0 %v135, 40
    %v1451 = vpop.permute.xlu0 %1450
    %1452 = vrot.lane.b32.xlu0 %v137, 40
    %v1453 = vpop.permute.xlu0 %1452
    %1454 = vrot.lane.b32.xlu0 %v139, 40
    %v1455 = vpop.permute.xlu0 %1454
    %1456 = vrot.lane.b32.xlu0 %v141, 40
    %v1457 = vpop.permute.xlu0 %1456
    %1458 = vrot.lane.b32.xlu0 %v143, 40
    %v1459 = vpop.permute.xlu0 %1458
    %1460 = vrot.lane.b32.xlu0 %v145, 40
    %v1461 = vpop.permute.xlu0 %1460
    %1462 = vrot.lane.b32.xlu0 %v147, 40
    %v1463 = vpop.permute.xlu0 %1462
    %1464 = vrot.lane.b32.xlu0 %v149, 40
    %v1465 = vpop.permute.xlu0 %1464
    %1466 = vrot.lane.b32.xlu0 %v152, 40
    %v1467 = vpop.permute.xlu0 %1466
    %1468 = vrot.lane.b32.xlu0 %v121, 40
    %v1469 = vpop.permute.xlu0 %1468
    %1470 = vrot.lane.b32.xlu0 %v123, 40
    %v1471 = vpop.permute.xlu0 %1470
    %1472 = vrot.lane.b32.xlu0 %v125, 40
    %v1473 = vpop.permute.xlu0 %1472
    %1474 = vrot.lane.b32.xlu0 %v127, 40
    %v1475 = vpop.permute.xlu0 %1474
    %1492 = vrot.lane.b32.xlu0 %v164, 48
    %v1493 = vpop.permute.xlu0 %1492
    %1494 = vrot.lane.b32.xlu0 %v166, 48
    %v1495 = vpop.permute.xlu0 %1494
    %1496 = vrot.lane.b32.xlu0 %v168, 48
    %v1497 = vpop.permute.xlu0 %1496
    %1498 = vrot.lane.b32.xlu0 %v170, 48
    %v1499 = vpop.permute.xlu0 %1498
    %1500 = vrot.lane.b32.xlu0 %v172, 48
    %v1501 = vpop.permute.xlu0 %1500
    %1502 = vrot.lane.b32.xlu0 %v174, 48
    %v1503 = vpop.permute.xlu0 %1502
    %1504 = vrot.lane.b32.xlu0 %v176, 48
    %v1505 = vpop.permute.xlu0 %1504
    %1506 = vrot.lane.b32.xlu0 %v178, 48
    %v1507 = vpop.permute.xlu0 %1506
    %1508 = vrot.lane.b32.xlu0 %v180, 48
    %v1509 = vpop.permute.xlu0 %1508
    %1510 = vrot.lane.b32.xlu0 %v182, 48
    %v1511 = vpop.permute.xlu0 %1510
    %1512 = vrot.lane.b32.xlu0 %v184, 48
    %v1513 = vpop.permute.xlu0 %1512
    %1514 = vrot.lane.b32.xlu0 %v187, 48
    %v1515 = vpop.permute.xlu0 %1514
    %1516 = vrot.lane.b32.xlu0 %v156, 48
    %v1517 = vpop.permute.xlu0 %1516
    %1518 = vrot.lane.b32.xlu0 %v158, 48
    %v1519 = vpop.permute.xlu0 %1518
    %1520 = vrot.lane.b32.xlu0 %v160, 48
    %v1521 = vpop.permute.xlu0 %1520
    %1522 = vrot.lane.b32.xlu0 %v162, 48
    %v1523 = vpop.permute.xlu0 %1522
    %1540 = vrot.lane.b32.xlu0 %v199, 56
    %v1541 = vpop.permute.xlu0 %1540
    %1542 = vrot.lane.b32.xlu0 %v201, 56
    %v1543 = vpop.permute.xlu0 %1542
    %1544 = vrot.lane.b32.xlu0 %v203, 56
    %v1545 = vpop.permute.xlu0 %1544
    %1546 = vrot.lane.b32.xlu0 %v205, 56
    %v1547 = vpop.permute.xlu0 %1546
    %1548 = vrot.lane.b32.xlu0 %v207, 56
    %v1549 = vpop.permute.xlu0 %1548
    %1550 = vrot.lane.b32.xlu0 %v209, 56
    %v1551 = vpop.permute.xlu0 %1550
    %1552 = vrot.lane.b32.xlu0 %v211, 56
    %v1553 = vpop.permute.xlu0 %1552
    %1554 = vrot.lane.b32.xlu0 %v213, 56
    %v1555 = vpop.permute.xlu0 %1554
    %1556 = vrot.lane.b32.xlu0 %v215, 56
    %v1557 = vpop.permute.xlu0 %1556
    %1558 = vrot.lane.b32.xlu0 %v217, 56
    %v1559 = vpop.permute.xlu0 %1558
    %1560 = vrot.lane.b32.xlu0 %v219, 56
    %v1561 = vpop.permute.xlu0 %1560
    %1562 = vrot.lane.b32.xlu0 %v222, 56
    %v1563 = vpop.permute.xlu0 %1562
    %1564 = vrot.lane.b32.xlu0 %v191, 56
    %v1565 = vpop.permute.xlu0 %1564
    %1566 = vrot.lane.b32.xlu0 %v193, 56
    %v1567 = vpop.permute.xlu0 %1566
    %1568 = vrot.lane.b32.xlu0 %v195, 56
    %v1569 = vpop.permute.xlu0 %1568
    %1570 = vrot.lane.b32.xlu0 %v197, 56
    %v1571 = vpop.permute.xlu0 %1570
    %1588 = vrot.lane.b32.xlu0 %v234, 64
    %v1589 = vpop.permute.xlu0 %1588
    %1590 = vrot.lane.b32.xlu0 %v236, 64
    %v1591 = vpop.permute.xlu0 %1590
    %1592 = vrot.lane.b32.xlu0 %v238, 64
    %v1593 = vpop.permute.xlu0 %1592
    %1594 = vrot.lane.b32.xlu0 %v240, 64
    %v1595 = vpop.permute.xlu0 %1594
    %1596 = vrot.lane.b32.xlu0 %v242, 64
    %v1597 = vpop.permute.xlu0 %1596
    %1598 = vrot.lane.b32.xlu0 %v244, 64
    %v1599 = vpop.permute.xlu0 %1598
    %1600 = vrot.lane.b32.xlu0 %v246, 64
    %v1601 = vpop.permute.xlu0 %1600
    %1602 = vrot.lane.b32.xlu0 %v248, 64
    %v1603 = vpop.permute.xlu0 %1602
    %1604 = vrot.lane.b32.xlu0 %v250, 64
    %v1605 = vpop.permute.xlu0 %1604
    %1606 = vrot.lane.b32.xlu0 %v252, 64
    %v1607 = vpop.permute.xlu0 %1606
    %1608 = vrot.lane.b32.xlu0 %v254, 64
    %v1609 = vpop.permute.xlu0 %1608
    %1610 = vrot.lane.b32.xlu0 %v257, 64
    %v1611 = vpop.permute.xlu0 %1610
    %1612 = vrot.lane.b32.xlu0 %v226, 64
    %v1613 = vpop.permute.xlu0 %1612
    %1614 = vrot.lane.b32.xlu0 %v228, 64
    %v1615 = vpop.permute.xlu0 %1614
    %1616 = vrot.lane.b32.xlu0 %v230, 64
    %v1617 = vpop.permute.xlu0 %1616
    %1618 = vrot.lane.b32.xlu0 %v232, 64
    %v1619 = vpop.permute.xlu0 %1618
    %v1636 = vsel %vm997, %v127, %v1253
    %v1637 = vsel %vm997, %v129, %v1255
    %v1638 = vsel %vm997, %v131, %v1257
    %v1639 = vsel %vm997, %v133, %v1259
    %v1640 = vsel %vm997, %v135, %v1261
    %v1641 = vsel %vm997, %v137, %v1263
    %v1642 = vsel %vm997, %v139, %v1265
    %v1643 = vsel %vm997, %v141, %v1267
    %v1644 = vsel %vm997, %v143, %v1269
    %v1645 = vsel %vm997, %v145, %v1271
    %v1646 = vsel %vm997, %v147, %v1273
    %v1647 = vsel %vm997, %v149, %v1275
    %v1648 = vsel %vm997, %v152, %v1277
    %v1649 = vsel %vm997, %v121, %v1279
    %v1650 = vsel %vm997, %v123, %v1281
    %v1651 = vsel %vm997, %v125, %v1283
    %v1652 = vsel %vm1014, %v1636, %v1301
    %v1653 = vsel %vm1014, %v1637, %v1303
    %v1654 = vsel %vm1014, %v1638, %v1305
    %v1655 = vsel %vm1014, %v1639, %v1307
    %v1656 = vsel %vm1014, %v1640, %v1309
    %v1657 = vsel %vm1014, %v1641, %v1311
    %v1658 = vsel %vm1014, %v1642, %v1313
    %v1659 = vsel %vm1014, %v1643, %v1315
    %v1660 = vsel %vm1014, %v1644, %v1317
    %v1661 = vsel %vm1014, %v1645, %v1319
    %v1662 = vsel %vm1014, %v1646, %v1321
    %v1663 = vsel %vm1014, %v1647, %v1323
    %v1664 = vsel %vm1014, %v1648, %v1325
    %v1665 = vsel %vm1014, %v1649, %v1327
    %v1666 = vsel %vm1014, %v1650, %v1329
    %v1667 = vsel %vm1014, %v1651, %v1331
    %v1668 = vsel %vm1031, %v1652, %v1349
    %v1669 = vsel %vm1031, %v1653, %v1351
    %v1670 = vsel %vm1031, %v1654, %v1353
    %v1671 = vsel %vm1031, %v1655, %v1355
    %v1672 = vsel %vm1031, %v1656, %v1357
    %v1673 = vsel %vm1031, %v1657, %v1359
    %v1674 = vsel %vm1031, %v1658, %v1361
    %v1675 = vsel %vm1031, %v1659, %v1363
    %v1676 = vsel %vm1031, %v1660, %v1365
    %v1677 = vsel %vm1031, %v1661, %v1367
    %v1678 = vsel %vm1031, %v1662, %v1369
    %v1679 = vsel %vm1031, %v1663, %v1371
    %v1680 = vsel %vm1031, %v1664, %v1373
    %v1681 = vsel %vm1031, %v1665, %v1375
    %v1682 = vsel %vm1031, %v1666, %v1377
    %v1683 = vsel %vm1031, %v1667, %v1379
    %v1684 = vsel %vm1048, %v1668, %v1397
    %v1685 = vsel %vm1048, %v1669, %v1399
    %v1686 = vsel %vm1048, %v1670, %v1401
    %v1687 = vsel %vm1048, %v1671, %v1403
    %v1688 = vsel %vm1048, %v1672, %v1405
    %v1689 = vsel %vm1048, %v1673, %v1407
    %v1690 = vsel %vm1048, %v1674, %v1409
    %v1691 = vsel %vm1048, %v1675, %v1411
    %v1692 = vsel %vm1048, %v1676, %v1413
    %v1693 = vsel %vm1048, %v1677, %v1415
    %v1694 = vsel %vm1048, %v1678, %v1417
    %v1695 = vsel %vm1048, %v1679, %v1419
    %v1696 = vsel %vm1048, %v1680, %v1421
    %v1697 = vsel %vm1048, %v1681, %v1423
    %v1698 = vsel %vm1048, %v1682, %v1425
    %v1699 = vsel %vm1048, %v1683, %v1427
    %v1700 = vsel %vm1065, %v1684, %v1445
    %v1701 = vsel %vm1065, %v1685, %v1447
    %v1702 = vsel %vm1065, %v1686, %v1449
    %v1703 = vsel %vm1065, %v1687, %v1451
    %v1704 = vsel %vm1065, %v1688, %v1453
    %v1705 = vsel %vm1065, %v1689, %v1455
    %v1706 = vsel %vm1065, %v1690, %v1457
    %v1707 = vsel %vm1065, %v1691, %v1459
    %v1708 = vsel %vm1065, %v1692, %v1461
    %v1709 = vsel %vm1065, %v1693, %v1463
    %v1710 = vsel %vm1065, %v1694, %v1465
    %v1711 = vsel %vm1065, %v1695, %v1467
    %v1712 = vsel %vm1065, %v1696, %v1469
    %v1713 = vsel %vm1065, %v1697, %v1471
    %v1714 = vsel %vm1065, %v1698, %v1473
    %v1715 = vsel %vm1065, %v1699, %v1475
    %v1716 = vsel %vm1082, %v1700, %v1493
    %v1717 = vsel %vm1082, %v1701, %v1495
    %v1718 = vsel %vm1082, %v1702, %v1497
    %v1719 = vsel %vm1082, %v1703, %v1499
    %v1720 = vsel %vm1082, %v1704, %v1501
    %v1721 = vsel %vm1082, %v1705, %v1503
    %v1722 = vsel %vm1082, %v1706, %v1505
    %v1723 = vsel %vm1082, %v1707, %v1507
    %v1724 = vsel %vm1082, %v1708, %v1509
    %v1725 = vsel %vm1082, %v1709, %v1511
    %v1726 = vsel %vm1082, %v1710, %v1513
    %v1727 = vsel %vm1082, %v1711, %v1515
    %v1728 = vsel %vm1082, %v1712, %v1517
    %v1729 = vsel %vm1082, %v1713, %v1519
    %v1730 = vsel %vm1082, %v1714, %v1521
    %v1731 = vsel %vm1082, %v1715, %v1523
    %v1732 = vsel %vm1099, %v1716, %v1541
    %v1733 = vsel %vm1099, %v1717, %v1543
    %v1734 = vsel %vm1099, %v1718, %v1545
    %v1735 = vsel %vm1099, %v1719, %v1547
    %v1736 = vsel %vm1099, %v1720, %v1549
    %v1737 = vsel %vm1099, %v1721, %v1551
    %v1738 = vsel %vm1099, %v1722, %v1553
    %v1739 = vsel %vm1099, %v1723, %v1555
    %v1740 = vsel %vm1099, %v1724, %v1557
    %v1741 = vsel %vm1099, %v1725, %v1559
    %v1742 = vsel %vm1099, %v1726, %v1561
    %v1743 = vsel %vm1099, %v1727, %v1563
    %v1744 = vsel %vm1099, %v1728, %v1565
    %v1745 = vsel %vm1099, %v1729, %v1567
    %v1746 = vsel %vm1099, %v1730, %v1569
    %v1747 = vsel %vm1099, %v1731, %v1571
    %v1748 = vsel %vm1116, %v1732, %v1589
    %v1749 = vsel %vm1116, %v1733, %v1591
    %v1750 = vsel %vm1116, %v1734, %v1593
    %v1751 = vsel %vm1116, %v1735, %v1595
    %v1752 = vsel %vm1116, %v1736, %v1597
    %v1753 = vsel %vm1116, %v1737, %v1599
    %v1754 = vsel %vm1116, %v1738, %v1601
    %v1755 = vsel %vm1116, %v1739, %v1603
    %v1756 = vsel %vm1116, %v1740, %v1605
    %v1757 = vsel %vm1116, %v1741, %v1607
    %v1758 = vsel %vm1116, %v1742, %v1609
    %v1759 = vsel %vm1116, %v1743, %v1611
    %v1760 = vsel %vm1116, %v1744, %v1613
    %v1761 = vsel %vm1116, %v1745, %v1615
    %v1762 = vsel %vm1116, %v1746, %v1617
    %v1763 = vsel %vm1116, %v1747, %v1619
    %v1764 = vld [vmem:[%s1] sm:$0xff]
    %v1765 = vld [vmem:[%s1 + $0x8] sm:$0xff]
    %v1766 = vld [vmem:[%s1 + $0x10] sm:$0xff]
    %v1767 = vld [vmem:[%s1 + $0x18] sm:$0xff]
    %v1768 = vld [vmem:[%s1 + $0x20] sm:$0xff]
    %v1769 = vld [vmem:[%s1 + $0x28] sm:$0xff]
    %v1770 = vld [vmem:[%s1 + $0x30] sm:$0xff]
    %v1771 = vld [vmem:[%s1 + $0x38] sm:$0xff]
    %v1772 = vld [vmem:[%s1 + $0x40] sm:$0xff]
    %v1773 = vld [vmem:[%s1 + $0x48] sm:$0xff]
    %v1774 = vld [vmem:[%s1 + $0x50] sm:$0xff]
    %v1775 = vld [vmem:[%s1 + $0x58] sm:$0xff]
    %v1776 = vld [vmem:[%s1 + $0x60] sm:$0xff]
    %v1777 = vld [vmem:[%s1 + $0x68] sm:$0xff]
    %v1778 = vld [vmem:[%s1 + $0x70] sm:$0xff]
    %v1779 = vld [vmem:[%s1 + $0x78] sm:$0xff]
    %v1780 = vld [vmem:[%s1 + $0x80] sm:$0xff]
    %v1781 = vld [vmem:[%s1 + $0x88] sm:$0xff]
    %v1782 = vld [vmem:[%s1 + $0x90] sm:$0xff]
    %v1783 = vld [vmem:[%s1 + $0x98] sm:$0xff]
    %v1784 = vld [vmem:[%s1 + $0xa0] sm:$0xff]
    %v1785 = vld [vmem:[%s1 + $0xa8] sm:$0xff]
    %v1786 = vld [vmem:[%s1 + $0xb0] sm:$0xff]
    %v1787 = vld [vmem:[%s1 + $0xb8] sm:$0xff]
    %v1788 = vld [vmem:[%s1 + $0xc0] sm:$0xff]
    %v1790 = vsel %vm1133, %v1748, 0
    %v1793 = vsel %vm1133, %v1749, 0
    %v1796 = vsel %vm1133, %v1750, 0
    %v1799 = vsel %vm1133, %v1751, 0
    %v1802 = vsel %vm1133, %v1752, 0
    %v1805 = vsel %vm1133, %v1753, 0
    %v1808 = vsel %vm1133, %v1754, 0
    %v1811 = vsel %vm1133, %v1755, 0
    %v1814 = vsel %vm1133, %v1756, 0
    %v1817 = vsel %vm1133, %v1757, 0
    %v1820 = vsel %vm1133, %v1758, 0
    %v1823 = vsel %vm1133, %v1759, 0
    %v1826 = vsel %vm1133, %v1760, 0
    %v1829 = vsel %vm1133, %v1761, 0
    %v1832 = vsel %vm1133, %v1762, 0
    %v1835 = vsel %vm1133, %v1763, 0
    %1837 = vmatprep.subr.mxu0 0.0
    %1838 = vmatpush1.msra.mxu0 %v1764
    %1839 = vmatprep.subr.mxu0 0.0
    %1840 = vmatpush1.msra.mxu0 %v1765
    %1841 = vmatprep.subr.mxu0 0.0
    %1842 = vmatpush1.msra.mxu0 %v1766
    %1843 = vmatprep.subr.mxu0 0.0
    %1844 = vmatpush1.msra.mxu0 %v1767
    %1845 = vmatprep.subr.mxu0 0.0
    %1846 = vmatpush1.msra.mxu0 %v1768
    %1847 = vmatprep.subr.mxu0 0.0
    %1848 = vmatpush1.msra.mxu0 %v1769
    %1849 = vmatprep.subr.mxu0 0.0
    %1850 = vmatpush1.msra.mxu0 %v1770
    %1851 = vmatprep.subr.mxu0 0.0
    %1852 = vmatpush1.msra.mxu0 %v1771
    %1853 = vmatprep.subr.mxu0 0.0
    %1854 = vmatpush1.msra.mxu0 %v1772
    %1855 = vmatprep.subr.mxu0 0.0
    %1856 = vmatpush1.msra.mxu0 %v1773
    %1857 = vmatprep.subr.mxu0 0.0
    %1858 = vmatpush1.msra.mxu0 %v1774
    %1859 = vmatprep.subr.mxu0 0.0
    %1860 = vmatpush1.msra.mxu0 %v1775
    %1861 = vmatprep.subr.mxu0 0.0
    %1862 = vmatpush1.msra.mxu0 %v1776
    %1863 = vmatprep.subr.mxu0 0.0
    %1864 = vmatpush1.msra.mxu0 %v1777
    %1865 = vmatprep.subr.mxu0 0.0
    %1866 = vmatpush1.msra.mxu0 %v1778
    %1867 = vmatprep.subr.mxu0 0.0
    %1868 = vmatpush1.msra.mxu0 %v1779
    %1869 = vmatprep.subr.mxu0 0.0
    %1870 = vmatpush1.msra.mxu0 %v1780
    %1871 = vmatprep.subr.mxu0 0.0
    %1872 = vmatpush1.msra.mxu0 %v1781
    %1873 = vmatprep.subr.mxu0 0.0
    %1874 = vmatpush1.msra.mxu0 %v1782
    %1875 = vmatprep.subr.mxu0 0.0
    %1876 = vmatpush1.msra.mxu0 %v1783
    %1877 = vmatprep.subr.mxu0 0.0
    %1878 = vmatpush1.msra.mxu0 %v1784
    %1879 = vmatprep.subr.mxu0 0.0
    %1880 = vmatpush1.msra.mxu0 %v1785
    %1881 = vmatprep.subr.mxu0 0.0
    %1882 = vmatpush1.msra.mxu0 %v1786
    %1883 = vmatprep.subr.mxu0 0.0
    %1884 = vmatpush1.msra.mxu0 %v1787
    %1885 = vmatprep.subr.mxu0 0.0
    %1886 = vmatpush1.msra.mxu0 %v1788
    %1887 = vmatprep.subr.mxu0 0.0
    %1888 = vmatpush1.msra.mxu0 0.0
    %1889 = vmatprep.subr.mxu0 0.0
    %1890 = vmatpush1.msra.mxu0 0.0
    %1891 = vmatprep.subr.mxu0 0.0
    %1892 = vmatpush1.msra.mxu0 0.0
    %1893 = vmatprep.subr.mxu0 0.0
    %1894 = vmatpush1.msra.mxu0 0.0
    %1895 = vmatprep.subr.mxu0 0.0
    %1896 = vmatpush1.msra.mxu0 0.0
    %1897 = vmatprep.subr.mxu0 0.0
    %1898 = vmatpush1.msra.mxu0 0.0
    %1899 = vmatprep.subr.mxu0 0.0
    %1900 = vmatpush1.msra.mxu0 0.0
    %1901 = vmatprep.mubr.f32.mxu0 %v1790
    %1902 = vmatmul.mubr.f32.gmra.mrb[0].mxu0 %v1236
    %v1903 = vpop.f32.mrb[0].mxu0
    %v1904 = vadd.f32 0.0, %v1903
    %v1905 = vpop.f32.mrb[0].mxu0
    %1906 = vmatprep.mubr.f32.mxu0 %v1793
    %1907 = vmatmul.mubr.f32.gmra.mrb[0].mxu0 %v1237
    %v1908 = vpop.f32.mrb[0].mxu0
    %v1909 = vadd.f32 0.0, %v1908
    %v1910 = vpop.f32.mrb[0].mxu0
    %1911 = vmatprep.mubr.f32.mxu0 %v1796
    %1912 = vmatmul.mubr.f32.gmra.mrb[0].mxu0 %v1238
    %v1913 = vpop.f32.mrb[0].mxu0
    %v1914 = vadd.f32 0.0, %v1913
    %v1915 = vpop.f32.mrb[0].mxu0
    %1916 = vmatprep.mubr.f32.mxu0 %v1799
    %1917 = vmatmul.mubr.f32.gmra.mrb[0].mxu0 %v1239
    %v1918 = vpop.f32.mrb[0].mxu0
    %v1919 = vadd.f32 0.0, %v1918
    %v1920 = vpop.f32.mrb[0].mxu0
    %1921 = vmatprep.mubr.f32.mxu0 %v1802
    %1922 = vmatmul.mubr.f32.gmra.mrb[0].mxu0 %v1240
    %v1923 = vpop.f32.mrb[0].mxu0
    %v1924 = vpop.f32.mrb[0].mxu0
    %1925 = vmatprep.mubr.f32.mxu0 %v1805
    %1926 = vmatmul.mubr.f32.gmra.mrb[0].mxu0 %v1241
    %v1927 = vpop.f32.mrb[0].mxu0
    %v1928 = vpop.f32.mrb[0].mxu0
    %1929 = vmatprep.mubr.f32.mxu0 %v1808
    %1930 = vmatmul.mubr.f32.gmra.mrb[0].mxu0 %v1242
    %v1931 = vpop.f32.mrb[0].mxu0
    %v1932 = vpop.f32.mrb[0].mxu0
    %1933 = vmatprep.mubr.f32.mxu0 %v1811
    %1934 = vmatmul.mubr.f32.gmra.mrb[0].mxu0 %v1243
    %v1935 = vpop.f32.mrb[0].mxu0
    %v1936 = vpop.f32.mrb[0].mxu0
    %1937 = vmatprep.mubr.f32.mxu0 %v1814
    %1938 = vmatmul.mubr.f32.gmra.mrb[0].mxu0 %v1244
    %v1939 = vpop.f32.mrb[0].mxu0
    %v1940 = vadd.f32 0.0, %v1939
    %v1941 = vpop.f32.mrb[0].mxu0
    %1942 = vmatprep.mubr.f32.mxu0 %v1817
    %1943 = vmatmul.mubr.f32.gmra.mrb[0].mxu0 %v1245
    %v1944 = vpop.f32.mrb[0].mxu0
    %v1945 = vadd.f32 0.0, %v1944
    %v1946 = vpop.f32.mrb[0].mxu0
    %1947 = vmatprep.mubr.f32.mxu0 %v1820
    %1948 = vmatmul.mubr.f32.gmra.mrb[0].mxu0 %v1246
    %v1949 = vpop.f32.mrb[0].mxu0
    %v1950 = vadd.f32 0.0, %v1949
    %v1951 = vpop.f32.mrb[0].mxu0
    %1952 = vmatprep.mubr.f32.mxu0 %v1823
    %1953 = vmatmul.mubr.f32.gmra.mrb[0].mxu0 %v1247
    %v1954 = vpop.f32.mrb[0].mxu0
    %v1955 = vadd.f32 0.0, %v1954
    %v1956 = vpop.f32.mrb[0].mxu0
    %1957 = vmatprep.mubr.f32.mxu0 %v1826
    %1958 = vmatmul.mubr.f32.gmra.mrb[0].mxu0 %v1248
    %v1959 = vpop.f32.mrb[0].mxu0
    %v1960 = vpop.f32.mrb[0].mxu0
    %1961 = vmatprep.mubr.f32.mxu0 %v1829
    %1962 = vmatmul.mubr.f32.gmra.mrb[0].mxu0 %v1249
    %v1963 = vpop.f32.mrb[0].mxu0
    %v1964 = vpop.f32.mrb[0].mxu0
    %1965 = vmatprep.mubr.f32.mxu0 %v1832
    %1966 = vmatmul.mubr.f32.gmra.mrb[0].mxu0 %v1250
    %v1967 = vpop.f32.mrb[0].mxu0
    %v1968 = vpop.f32.mrb[0].mxu0
    %1969 = vmatprep.mubr.f32.mxu0 %v1835
    %1970 = vmatmul.mubr.f32.gmra.mrb[0].mxu0 %v1251
    %v1971 = vpop.f32.mrb[0].mxu0
    %v1972 = vpop.f32.mrb[0].mxu0
    %1973 = vdwg.mxu0
    %v1974 = vld [vmem:[%s2] sm:$0x1]
    %v1976 = vlaneseq
    %v1977 = vshrl.u32 %v1976, 7
    %v1978 = vsub.s32 0, %v1977
    %v1979 = vrot.slane %v1974, %v1978
    %v1981 = vmul.f32 %v1904, %v1979
    %v1982 = vmul.f32 %v1909, %v1979
    %v1983 = vmul.f32 %v1914, %v1979
    %v1984 = vmul.f32 %v1919, %v1979
    %v1985 = vmul.f32 %v1940, %v1979
    %v1986 = vmul.f32 %v1945, %v1979
    %v1987 = vmul.f32 %v1950, %v1979
    %v1988 = vmul.f32 %v1955, %v1979
    %v1989 = vld [vmem:[%s3] sm:$0x1]
    %v1991 = vlaneseq
    %v1992 = vshrl.u32 %v1991, 7
    %v1993 = vsub.s32 0, %v1992
    %v1994 = vrot.slane %v1989, %v1993
    %v1996 = vadd.f32 %v1981, %v1994
    %v1997 = vadd.f32 %v1982, %v1994
    %v1998 = vadd.f32 %v1983, %v1994
    %v1999 = vadd.f32 %v1984, %v1994
    %v2000 = vadd.f32 %v1985, %v1994
    %v2001 = vadd.f32 %v1986, %v1994
    %v2002 = vadd.f32 %v1987, %v1994
    %v2003 = vadd.f32 %v1988, %v1994
    %v2004 = vmax.f32 %v1996, 0.0
    %v2005 = vmax.f32 %v1997, 0.0
    %v2006 = vmax.f32 %v1998, 0.0
    %v2007 = vmax.f32 %v1999, 0.0
    %v2008 = vmax.f32 %v2000, 0.0
    %v2009 = vmax.f32 %v2001, 0.0
    %v2010 = vmax.f32 %v2002, 0.0
    %v2011 = vmax.f32 %v2003, 0.0
    %v2012 = vld [vmem:[%s5] sm:$0xff]
    %v2013 = vld [vmem:[%s5 + $0x8] sm:$0xff]
    %v2014 = vld [vmem:[%s5 + $0x10] sm:$0x1]
    %v2015 = vld [vmem:[#allocation2] sm:$0x1]
    %v2017 = vlaneseq
    %v2018 = vshrl.u32 %v2017, 7
    %v2019 = vsub.s32 0, %v2018
    %v2020 = vrot.slane %v2015, %v2019
    %2021 = vset.pattern.permute.xlu0 0
    %2022 = vperm.xlu0 %2021, %v2020
    %v2023 = vpop.permute.xlu0 %2022
    %v2025 = vmul.f32 %v2012, %v2023
    %v2026 = vmul.f32 %v2013, %v2023
    %v2027 = vmul.f32 %v2014, %v2023
    %v2028 = vld [vmem:[%s4] sm:$0x1]
    %v2030 = vrot.slane %v2004, 7
    %v2033 = vrot.slane %v2005, 3
    %v2036 = vrot.slane %v2006, 7
    %v2039 = vrot.slane %v2007, 3
    %vm2041 = vcmask 1040384
    %v2042 = vsel %vm2041, %v2028, %v2030
    %v2043 = vsel %vm188, %v2042, %v2033
    %v2044 = vsel %vm2041, %v2033, %v2036
    %v2045 = vsel %vm188, %v2044, %v2039
    %v2046 = vadd.f32 %v2043, %v2025
    %v2047 = vadd.f32 %v2045, %v2026
    %v2048 = vadd.f32 %v2039, %v2027
    %v2050 = vrot.slane %v2008, 7
    %v2053 = vrot.slane %v2009, 3
    %v2056 = vrot.slane %v2010, 7
    %v2059 = vrot.slane %v2011, 3
    %v2061 = vsel %vm2041, %v2028, %v2050
    %v2062 = vsel %vm188, %v2061, %v2053
    %v2063 = vsel %vm2041, %v2053, %v2056
    %v2064 = vsel %vm188, %v2063, %v2059
    %v2065 = vadd.f32 %v2062, %v2025
    %v2066 = vadd.f32 %v2064, %v2026
    %v2067 = vadd.f32 %v2059, %v2027
    %v2071 = vrot.slane %v2065, 7
    %v2072 = vrot.slane %v2066, 7
    %v2073 = vsel %vm2041, %v2071, %v2072
    %v2074 = vrot.slane %v2067, 7
    %v2075 = vsel %vm2041, %v2072, %v2074
    %v2079 = vsel %vm2041, %v2048, %v2071
    %v2080 = vsel %vm1048, %v2046, 0.0
    %2081 = vadd.xlane.f32.xlu0 %v2080
    %v2082 = vpop.xlane.xlu0 %2081
    %v2083 = vsel %vm1048, %v2047, 0.0
    %2084 = vadd.xlane.f32.xlu0 %v2083
    %v2085 = vpop.xlane.xlu0 %2084
    %v2086 = vsel %vm1048, %v2079, 0.0
    %2087 = vadd.xlane.f32.xlu0 %v2086
    %v2088 = vpop.xlane.xlu0 %2087
    %v2089 = vsel %vm1048, %v2073, 0.0
    %2090 = vadd.xlane.f32.xlu0 %v2089
    %v2091 = vpop.xlane.xlu0 %2090
    %vm2092 = vcmask 254976
    %v2093 = vsel %vm2092, %v2075, 0.0
    %2094 = vadd.xlane.f32.xlu0 %v2093
    %v2095 = vpop.xlane.xlu0 %2094
    %v2096 = vrcp.pop 32.0
    %v2097 = vmul.f32 %v2082, %v2096
    %v2098 = vmul.f32 %v2085, %v2096
    %v2099 = vmul.f32 %v2088, %v2096
    %v2100 = vmul.f32 %v2091, %v2096
    %v2101 = vmul.f32 %v2095, %v2096
    %v2102 = vsub.f32 %v2046, %v2097
    %v2103 = vsub.f32 %v2047, %v2098
    %v2104 = vsub.f32 %v2079, %v2099
    %v2105 = vsub.f32 %v2073, %v2100
    %v2106 = vsub.f32 %v2075, %v2101
    %v2107 = vmul.f32 %v2102, %v2102
    %v2108 = vmul.f32 %v2103, %v2103
    %v2109 = vmul.f32 %v2104, %v2104
    %v2110 = vmul.f32 %v2105, %v2105
    %v2111 = vmul.f32 %v2106, %v2106
    %v2112 = vsel %vm1048, %v2107, 0.0
    %2113 = vadd.xlane.f32.xlu0 %v2112
    %v2114 = vpop.xlane.xlu0 %2113
    %v2115 = vsel %vm1048, %v2108, 0.0
    %2116 = vadd.xlane.f32.xlu0 %v2115
    %v2117 = vpop.xlane.xlu0 %2116
    %v2118 = vsel %vm1048, %v2109, 0.0
    %2119 = vadd.xlane.f32.xlu0 %v2118
    %v2120 = vpop.xlane.xlu0 %2119
    %v2121 = vsel %vm1048, %v2110, 0.0
    %2122 = vadd.xlane.f32.xlu0 %v2121
    %v2123 = vpop.xlane.xlu0 %2122
    %v2124 = vsel %vm2092, %v2111, 0.0
    %2125 = vadd.xlane.f32.xlu0 %v2124
    %v2126 = vpop.xlane.xlu0 %2125
    %v2127 = vmul.f32 %v2114, %v2096
    %v2128 = vmul.f32 %v2117, %v2096
    %v2129 = vmul.f32 %v2120, %v2096
    %v2130 = vmul.f32 %v2123, %v2096
    %v2131 = vmul.f32 %v2126, %v2096
    %v2132 = vadd.f32 %v2127, 1e-05
    %v2133 = vadd.f32 %v2128, 1e-05
    %v2134 = vadd.f32 %v2129, 1e-05
    %v2135 = vadd.f32 %v2130, 1e-05
    %v2136 = vadd.f32 %v2131, 1e-05
    %v2137 = vrsqrt.pop %v2132
    %v2138 = vrsqrt.pop %v2133
    %v2139 = vrsqrt.pop %v2134
    %v2140 = vrsqrt.pop %v2135
    %v2141 = vrsqrt.pop %v2136
    %v2142 = vmul.f32 %v2102, %v2137
    %v2143 = vmul.f32 %v2103, %v2138
    %v2144 = vmul.f32 %v2104, %v2139
    %v2145 = vmul.f32 %v2105, %v2140
    %v2146 = vmul.f32 %v2106, %v2141
    %v2147 = vld [vmem:[%s7] sm:$0x1]
    %v2149 = vlaneseq
    %v2150 = vshrl.u32 %v2149, 7
    %v2151 = vsub.s32 0, %v2150
    %v2152 = vrot.slane %v2147, %v2151
    %v2154 = vmul.f32 %v2142, %v2152
    %v2155 = vmul.f32 %v2143, %v2152
    %v2156 = vmul.f32 %v2144, %v2152
    %v2157 = vmul.f32 %v2145, %v2152
    %v2158 = vmul.f32 %v2146, %v2152
    %v2159 = vld [vmem:[%s8] sm:$0x1]
    %v2161 = vlaneseq
    %v2162 = vshrl.u32 %v2161, 7
    %v2163 = vsub.s32 0, %v2162
    %v2164 = vrot.slane %v2159, %v2163
    %v2166 = vadd.f32 %v2154, %v2164
    %v2167 = vadd.f32 %v2155, %v2164
    %v2168 = vadd.f32 %v2156, %v2164
    %v2169 = vadd.f32 %v2157, %v2164
    %v2170 = vadd.f32 %v2158, %v2164
    %v2171 = vld [vmem:[%s9] sm:$0xff]
    %v2172 = vld [vmem:[%s9 + $0x8] sm:$0xff]
    %v2173 = vld [vmem:[%s9 + $0x10] sm:$0xff]
    %v2174 = vld [vmem:[%s9 + $0x18] sm:$0xff]
    %v2176 = vsel %vm1048, %v2166, 0
    %v2179 = vsel %vm1048, %v2167, 0
    %v2182 = vsel %vm1048, %v2168, 0
    %v2185 = vsel %vm1048, %v2169, 0
    %v2188 = vsel %vm1048, %v2170, 0
    %2190 = vmatprep.subr.mxu0 0.0
    %2191 = vmatpush1.msra.mxu0 %v2171
    %2192 = vmatprep.subr.mxu0 0.0
    %2193 = vmatpush1.msra.mxu0 %v2172
    %2194 = vmatprep.subr.mxu0 0.0
    %2195 = vmatpush1.msra.mxu0 %v2173
    %2196 = vmatprep.subr.mxu0 0.0
    %2197 = vmatpush1.msra.mxu0 %v2174
    %2198 = vmatprep.subr.mxu0 0.0
    %2199 = vmatpush1.msra.mxu0 0.0
    %2200 = vmatprep.subr.mxu0 0.0
    %2201 = vmatpush1.msra.mxu0 0.0
    %2202 = vmatprep.subr.mxu0 0.0
    %2203 = vmatpush1.msra.mxu0 0.0
    %2204 = vmatprep.subr.mxu0 0.0
    %2205 = vmatpush1.msra.mxu0 0.0
    %2206 = vmatprep.subr.mxu0 0.0
    %2207 = vmatpush1.msra.mxu0 0.0
    %2208 = vmatprep.subr.mxu0 0.0
    %2209 = vmatpush1.msra.mxu0 0.0
    %2210 = vmatprep.subr.mxu0 0.0
    %2211 = vmatpush1.msra.mxu0 0.0
    %2212 = vmatprep.subr.mxu0 0.0
    %2213 = vmatpush1.msra.mxu0 0.0
    %2214 = vmatprep.subr.mxu0 0.0
    %2215 = vmatpush1.msra.mxu0 0.0
    %2216 = vmatprep.subr.mxu0 0.0
    %2217 = vmatpush1.msra.mxu0 0.0
    %2218 = vmatprep.subr.mxu0 0.0
    %2219 = vmatpush1.msra.mxu0 0.0
    %2220 = vmatprep.subr.mxu0 0.0
    %2221 = vmatpush1.msra.mxu0 0.0
    %2222 = vmatprep.subr.mxu0 0.0
    %2223 = vmatpush1.msra.mxu0 0.0
    %2224 = vmatprep.subr.mxu0 0.0
    %2225 = vmatpush1.msra.mxu0 0.0
    %2226 = vmatprep.subr.mxu0 0.0
    %2227 = vmatpush1.msra.mxu0 0.0
    %2228 = vmatprep.subr.mxu0 0.0
    %2229 = vmatpush1.msra.mxu0 0.0
    %2230 = vmatprep.subr.mxu0 0.0
    %2231 = vmatpush1.msra.mxu0 0.0
    %2232 = vmatprep.subr.mxu0 0.0
    %2233 = vmatpush1.msra.mxu0 0.0
    %2234 = vmatprep.subr.mxu0 0.0
    %2235 = vmatpush1.msra.mxu0 0.0
    %2236 = vmatprep.subr.mxu0 0.0
    %2237 = vmatpush1.msra.mxu0 0.0
    %2238 = vmatprep.subr.mxu0 0.0
    %2239 = vmatpush1.msra.mxu0 0.0
    %2240 = vmatprep.subr.mxu0 0.0
    %2241 = vmatpush1.msra.mxu0 0.0
    %2242 = vmatprep.subr.mxu0 0.0
    %2243 = vmatpush1.msra.mxu0 0.0
    %2244 = vmatprep.subr.mxu0 0.0
    %2245 = vmatpush1.msra.mxu0 0.0
    %2246 = vmatprep.subr.mxu0 0.0
    %2247 = vmatpush1.msra.mxu0 0.0
    %2248 = vmatprep.subr.mxu0 0.0
    %2249 = vmatpush1.msra.mxu0 0.0
    %2250 = vmatprep.subr.mxu0 0.0
    %2251 = vmatpush1.msra.mxu0 0.0
    %2252 = vmatprep.subr.mxu0 0.0
    %2253 = vmatpush1.msra.mxu0 0.0
    %2254 = vmatprep.mubr.f32.mxu0 0.0
    %2255 = vmatmul.mubr.f32.gmra.mrb[0].mxu0 %v2176
    %v2256 = vpop.f32.mrb[0].mxu0
    %v2257 = vadd.f32 0.0, %v2256
    %v2258 = vpop.f32.mrb[0].mxu0
    %2259 = vmatprep.mubr.f32.mxu0 0.0
    %2260 = vmatmul.mubr.f32.gmra.mrb[0].mxu0 %v2179
    %v2261 = vpop.f32.mrb[0].mxu0
    %v2262 = vadd.f32 0.0, %v2261
    %v2263 = vpop.f32.mrb[0].mxu0
    %2264 = vmatprep.mubr.f32.mxu0 0.0
    %2265 = vmatmul.mubr.f32.gmra.mrb[0].mxu0 %v2182
    %v2266 = vpop.f32.mrb[0].mxu0
    %v2267 = vadd.f32 0.0, %v2266
    %v2268 = vpop.f32.mrb[0].mxu0
    %2269 = vmatprep.mubr.f32.mxu0 0.0
    %2270 = vmatmul.mubr.f32.gmra.mrb[0].mxu0 %v2185
    %v2271 = vpop.f32.mrb[0].mxu0
    %v2272 = vadd.f32 0.0, %v2271
    %v2273 = vpop.f32.mrb[0].mxu0
    %2274 = vmatprep.mubr.f32.mxu0 0.0
    %2275 = vmatmul.mubr.f32.gmra.mrb[0].mxu0 %v2188
    %v2276 = vpop.f32.mrb[0].mxu0
    %v2277 = vadd.f32 0.0, %v2276
    %v2278 = vpop.f32.mrb[0].mxu0
    %2279 = vdwg.mxu0
    %v2280 = vld [vmem:[%s10] sm:$0xff]
    %v2281 = vld [vmem:[%s10 + $0x8] sm:$0xff]
    %v2282 = vld [vmem:[%s10 + $0x10] sm:$0xff]
    %v2283 = vld [vmem:[%s10 + $0x18] sm:$0xff]
    %2284 = vmatprep.subr.mxu0 0.0
    %2285 = vmatpush1.msra.mxu0 %v2280
    %2286 = vmatprep.subr.mxu0 0.0
    %2287 = vmatpush1.msra.mxu0 %v2281
    %2288 = vmatprep.subr.mxu0 0.0
    %2289 = vmatpush1.msra.mxu0 %v2282
    %2290 = vmatprep.subr.mxu0 0.0
    %2291 = vmatpush1.msra.mxu0 %v2283
    %2292 = vmatprep.subr.mxu0 0.0
    %2293 = vmatpush1.msra.mxu0 0.0
    %2294 = vmatprep.subr.mxu0 0.0
    %2295 = vmatpush1.msra.mxu0 0.0
    %2296 = vmatprep.subr.mxu0 0.0
    %2297 = vmatpush1.msra.mxu0 0.0
    %2298 = vmatprep.subr.mxu0 0.0
    %2299 = vmatpush1.msra.mxu0 0.0
    %2300 = vmatprep.subr.mxu0 0.0
    %2301 = vmatpush1.msra.mxu0 0.0
    %2302 = vmatprep.subr.mxu0 0.0
    %2303 = vmatpush1.msra.mxu0 0.0
    %2304 = vmatprep.subr.mxu0 0.0
    %2305 = vmatpush1.msra.mxu0 0.0
    %2306 = vmatprep.subr.mxu0 0.0
    %2307 = vmatpush1.msra.mxu0 0.0
    %2308 = vmatprep.subr.mxu0 0.0
    %2309 = vmatpush1.msra.mxu0 0.0
    %2310 = vmatprep.subr.mxu0 0.0
    %2311 = vmatpush1.msra.mxu0 0.0
    %2312 = vmatprep.subr.mxu0 0.0
    %2313 = vmatpush1.msra.mxu0 0.0
    %2314 = vmatprep.subr.mxu0 0.0
    %2315 = vmatpush1.msra.mxu0 0.0
    %2316 = vmatprep.subr.mxu0 0.0
    %2317 = vmatpush1.msra.mxu0 0.0
    %2318 = vmatprep.subr.mxu0 0.0
    %2319 = vmatpush1.msra.mxu0 0.0
    %2320 = vmatprep.subr.mxu0 0.0
    %2321 = vmatpush1.msra.mxu0 0.0
    %2322 = vmatprep.subr.mxu0 0.0
    %2323 = vmatpush1.msra.mxu0 0.0
    %2324 = vmatprep.subr.mxu0 0.0
    %2325 = vmatpush1.msra.mxu0 0.0
    %2326 = vmatprep.subr.mxu0 0.0
    %2327 = vmatpush1.msra.mxu0 0.0
    %2328 = vmatprep.subr.mxu0 0.0
    %2329 = vmatpush1.msra.mxu0 0.0
    %2330 = vmatprep.subr.mxu0 0.0
    %2331 = vmatpush1.msra.mxu0 0.0
    %2332 = vmatprep.subr.mxu0 0.0
    %2333 = vmatpush1.msra.mxu0 0.0
    %2334 = vmatprep.subr.mxu0 0.0
    %2335 = vmatpush1.msra.mxu0 0.0
    %2336 = vmatprep.subr.mxu0 0.0
    %2337 = vmatpush1.msra.mxu0 0.0
    %2338 = vmatprep.subr.mxu0 0.0
    %2339 = vmatpush1.msra.mxu0 0.0
    %2340 = vmatprep.subr.mxu0 0.0
    %2341 = vmatpush1.msra.mxu0 0.0
    %2342 = vmatprep.subr.mxu0 0.0
    %2343 = vmatpush1.msra.mxu0 0.0
    %2344 = vmatprep.subr.mxu0 0.0
    %2345 = vmatpush1.msra.mxu0 0.0
    %2346 = vmatprep.subr.mxu0 0.0
    %2347 = vmatpush1.msra.mxu0 0.0
    %2348 = vmatprep.mubr.f32.mxu0 0.0
    %2349 = vmatmul.mubr.f32.gmra.mrb[0].mxu0 %v2176
    %v2350 = vpop.f32.mrb[0].mxu0
    %v2351 = vadd.f32 0.0, %v2350
    %v2352 = vpop.f32.mrb[0].mxu0
    %2353 = vmatprep.mubr.f32.mxu0 0.0
    %2354 = vmatmul.mubr.f32.gmra.mrb[0].mxu0 %v2179
    %v2355 = vpop.f32.mrb[0].mxu0
    %v2356 = vadd.f32 0.0, %v2355
    %v2357 = vpop.f32.mrb[0].mxu0
    %2358 = vmatprep.mubr.f32.mxu0 0.0
    %2359 = vmatmul.mubr.f32.gmra.mrb[0].mxu0 %v2182
    %v2360 = vpop.f32.mrb[0].mxu0
    %v2361 = vadd.f32 0.0, %v2360
    %v2362 = vpop.f32.mrb[0].mxu0
    %2363 = vmatprep.mubr.f32.mxu0 0.0
    %2364 = vmatmul.mubr.f32.gmra.mrb[0].mxu0 %v2185
    %v2365 = vpop.f32.mrb[0].mxu0
    %v2366 = vadd.f32 0.0, %v2365
    %v2367 = vpop.f32.mrb[0].mxu0
    %2368 = vmatprep.mubr.f32.mxu0 0.0
    %2369 = vmatmul.mubr.f32.gmra.mrb[0].mxu0 %v2188
    %v2370 = vpop.f32.mrb[0].mxu0
    %v2371 = vadd.f32 0.0, %v2370
    %v2372 = vpop.f32.mrb[0].mxu0
    %2373 = vdwg.mxu0
    %v2374 = vld [vmem:[%s11] sm:$0xff]
    %v2375 = vld [vmem:[%s11 + $0x8] sm:$0xff]
    %v2376 = vld [vmem:[%s11 + $0x10] sm:$0xff]
    %v2377 = vld [vmem:[%s11 + $0x18] sm:$0xff]
    %2378 = vmatprep.subr.mxu0 0.0
    %2379 = vmatpush1.msra.mxu0 %v2374
    %2380 = vmatprep.subr.mxu0 0.0
    %2381 = vmatpush1.msra.mxu0 %v2375
    %2382 = vmatprep.subr.mxu0 0.0
    %2383 = vmatpush1.msra.mxu0 %v2376
    %2384 = vmatprep.subr.mxu0 0.0
    %2385 = vmatpush1.msra.mxu0 %v2377
    %2386 = vmatprep.subr.mxu0 0.0
    %2387 = vmatpush1.msra.mxu0 0.0
    %2388 = vmatprep.subr.mxu0 0.0
    %2389 = vmatpush1.msra.mxu0 0.0
    %2390 = vmatprep.subr.mxu0 0.0
    %2391 = vmatpush1.msra.mxu0 0.0
    %2392 = vmatprep.subr.mxu0 0.0
    %2393 = vmatpush1.msra.mxu0 0.0
    %2394 = vmatprep.subr.mxu0 0.0
    %2395 = vmatpush1.msra.mxu0 0.0
    %2396 = vmatprep.subr.mxu0 0.0
    %2397 = vmatpush1.msra.mxu0 0.0
    %2398 = vmatprep.subr.mxu0 0.0
    %2399 = vmatpush1.msra.mxu0 0.0
    %2400 = vmatprep.subr.mxu0 0.0
    %2401 = vmatpush1.msra.mxu0 0.0
    %2402 = vmatprep.subr.mxu0 0.0
    %2403 = vmatpush1.msra.mxu0 0.0
    %2404 = vmatprep.subr.mxu0 0.0
    %2405 = vmatpush1.msra.mxu0 0.0
    %2406 = vmatprep.subr.mxu0 0.0
    %2407 = vmatpush1.msra.mxu0 0.0
    %2408 = vmatprep.subr.mxu0 0.0
    %2409 = vmatpush1.msra.mxu0 0.0
    %2410 = vmatprep.subr.mxu0 0.0
    %2411 = vmatpush1.msra.mxu0 0.0
    %2412 = vmatprep.subr.mxu0 0.0
    %2413 = vmatpush1.msra.mxu0 0.0
    %2414 = vmatprep.subr.mxu0 0.0
    %2415 = vmatpush1.msra.mxu0 0.0
    %2416 = vmatprep.subr.mxu0 0.0
    %2417 = vmatpush1.msra.mxu0 0.0
    %2418 = vmatprep.subr.mxu0 0.0
    %2419 = vmatpush1.msra.mxu0 0.0
    %2420 = vmatprep.subr.mxu0 0.0
    %2421 = vmatpush1.msra.mxu0 0.0
    %2422 = vmatprep.subr.mxu0 0.0
    %2423 = vmatpush1.msra.mxu0 0.0
    %2424 = vmatprep.subr.mxu0 0.0
    %2425 = vmatpush1.msra.mxu0 0.0
    %2426 = vmatprep.subr.mxu0 0.0
    %2427 = vmatpush1.msra.mxu0 0.0
    %2428 = vmatprep.subr.mxu0 0.0
    %2429 = vmatpush1.msra.mxu0 0.0
    %2430 = vmatprep.subr.mxu0 0.0
    %2431 = vmatpush1.msra.mxu0 0.0
    %2432 = vmatprep.subr.mxu0 0.0
    %2433 = vmatpush1.msra.mxu0 0.0
    %2434 = vmatprep.subr.mxu0 0.0
    %2435 = vmatpush1.msra.mxu0 0.0
    %2436 = vmatprep.subr.mxu0 0.0
    %2437 = vmatpush1.msra.mxu0 0.0
    %2438 = vmatprep.subr.mxu0 0.0
    %2439 = vmatpush1.msra.mxu0 0.0
    %2440 = vmatprep.subr.mxu0 0.0
    %2441 = vmatpush1.msra.mxu0 0.0
    %2442 = vmatprep.mubr.f32.mxu0 0.0
    %2443 = vmatmul.mubr.f32.gmra.mrb[0].mxu0 %v2176
    %v2444 = vpop.f32.mrb[0].mxu0
    %v2445 = vadd.f32 0.0, %v2444
    %v2446 = vpop.f32.mrb[0].mxu0
    %2447 = vmatprep.mubr.f32.mxu0 0.0
    %2448 = vmatmul.mubr.f32.gmra.mrb[0].mxu0 %v2179
    %v2449 = vpop.f32.mrb[0].mxu0
    %v2450 = vadd.f32 0.0, %v2449
    %v2451 = vpop.f32.mrb[0].mxu0
    %2452 = vmatprep.mubr.f32.mxu0 0.0
    %2453 = vmatmul.mubr.f32.gmra.mrb[0].mxu0 %v2182
    %v2454 = vpop.f32.mrb[0].mxu0
    %v2455 = vadd.f32 0.0, %v2454
    %v2456 = vpop.f32.mrb[0].mxu0
    %2457 = vmatprep.mubr.f32.mxu0 0.0
    %2458 = vmatmul.mubr.f32.gmra.mrb[0].mxu0 %v2185
    %v2459 = vpop.f32.mrb[0].mxu0
    %v2460 = vadd.f32 0.0, %v2459
    %v2461 = vpop.f32.mrb[0].mxu0
    %2462 = vmatprep.mubr.f32.mxu0 0.0
    %2463 = vmatmul.mubr.f32.gmra.mrb[0].mxu0 %v2188
    %v2464 = vpop.f32.mrb[0].mxu0
    %v2465 = vadd.f32 0.0, %v2464
    %v2466 = vpop.f32.mrb[0].mxu0
    %2467 = vdwg.mxu0
    %v2469 = vsel %vm1048, %v2257, 0
    %v2472 = vsel %vm1048, %v2262, 0
    %v2475 = vsel %vm1048, %v2267, 0
    %v2478 = vsel %vm1048, %v2351, 0
    %v2481 = vsel %vm1048, %v2356, 0
    %v2484 = vsel %vm1048, %v2361, 0
    %2486 = vmatprep.subr.mxu0 0.0
    %2487 = vmatpush1.xpose.msra.mxu0 %v2478
    %2488 = vmatprep.subr.mxu0 0.0
    %2489 = vmatpush1.xpose.msra.mxu0 %v2481
    %2490 = vmatprep.subr.mxu0 0.0
    %2491 = vmatpush1.xpose.msra.mxu0 %v2484
    %2492 = vmatprep.subr.mxu0 0.0
    %2493 = vmatpush1.xpose.msra.mxu0 0.0
    %2494 = vmatprep.subr.mxu0 0.0
    %2495 = vmatpush1.xpose.msra.mxu0 0.0
    %2496 = vmatprep.subr.mxu0 0.0
    %2497 = vmatpush1.xpose.msra.mxu0 0.0
    %2498 = vmatprep.subr.mxu0 0.0
    %2499 = vmatpush1.xpose.msra.mxu0 0.0
    %2500 = vmatprep.subr.mxu0 0.0
    %2501 = vmatpush1.xpose.msra.mxu0 0.0
    %2502 = vmatprep.subr.mxu0 0.0
    %2503 = vmatpush1.xpose.msra.mxu0 0.0
    %2504 = vmatprep.subr.mxu0 0.0
    %2505 = vmatpush1.xpose.msra.mxu0 0.0
    %2506 = vmatprep.subr.mxu0 0.0
    %2507 = vmatpush1.xpose.msra.mxu0 0.0
    %2508 = vmatprep.subr.mxu0 0.0
    %2509 = vmatpush1.xpose.msra.mxu0 0.0
    %2510 = vmatprep.subr.mxu0 0.0
    %2511 = vmatpush1.xpose.msra.mxu0 0.0
    %2512 = vmatprep.subr.mxu0 0.0
    %2513 = vmatpush1.xpose.msra.mxu0 0.0
    %2514 = vmatprep.subr.mxu0 0.0
    %2515 = vmatpush1.xpose.msra.mxu0 0.0
    %2516 = vmatprep.subr.mxu0 0.0
    %2517 = vmatpush1.xpose.msra.mxu0 0.0
    %2518 = vmatprep.subr.mxu0 0.0
    %2519 = vmatpush1.xpose.msra.mxu0 0.0
    %2520 = vmatprep.subr.mxu0 0.0
    %2521 = vmatpush1.xpose.msra.mxu0 0.0
    %2522 = vmatprep.subr.mxu0 0.0
    %2523 = vmatpush1.xpose.msra.mxu0 0.0
    %2524 = vmatprep.subr.mxu0 0.0
    %2525 = vmatpush1.xpose.msra.mxu0 0.0
    %2526 = vmatprep.subr.mxu0 0.0
    %2527 = vmatpush1.xpose.msra.mxu0 0.0
    %2528 = vmatprep.subr.mxu0 0.0
    %2529 = vmatpush1.xpose.msra.mxu0 0.0
    %2530 = vmatprep.subr.mxu0 0.0
    %2531 = vmatpush1.xpose.msra.mxu0 0.0
    %2532 = vmatprep.subr.mxu0 0.0
    %2533 = vmatpush1.xpose.msra.mxu0 0.0
    %2534 = vmatprep.subr.mxu0 0.0
    %2535 = vmatpush1.xpose.msra.mxu0 0.0
    %2536 = vmatprep.subr.mxu0 0.0
    %2537 = vmatpush1.xpose.msra.mxu0 0.0
    %2538 = vmatprep.subr.mxu0 0.0
    %2539 = vmatpush1.xpose.msra.mxu0 0.0
    %2540 = vmatprep.subr.mxu0 0.0
    %2541 = vmatpush1.xpose.msra.mxu0 0.0
    %2542 = vmatprep.subr.mxu0 0.0
    %2543 = vmatpush1.xpose.msra.mxu0 0.0
    %2544 = vmatprep.subr.mxu0 0.0
    %2545 = vmatpush1.xpose.msra.mxu0 0.0
    %2546 = vmatprep.subr.mxu0 0.0
    %2547 = vmatpush1.xpose.msra.mxu0 0.0
    %2548 = vmatprep.subr.mxu0 0.0
    %2549 = vmatpush1.xpose.msra.mxu0 0.0
    %2550 = vmatprep.mubr.f32.mxu0 0.0
    %2551 = vmatmul.mubr.f32.gmra.mrb[0].mxu0 %v2469
    %v2552 = vpop.f32.mrb[0].mxu0
    %v2553 = vadd.f32 0.0, %v2552
    %v2554 = vpop.f32.mrb[0].mxu0
    %2555 = vmatprep.mubr.f32.mxu0 0.0
    %2556 = vmatmul.mubr.f32.gmra.mrb[0].mxu0 %v2472
    %v2557 = vpop.f32.mrb[0].mxu0
    %v2558 = vadd.f32 0.0, %v2557
    %v2559 = vpop.f32.mrb[0].mxu0
    %2560 = vmatprep.mubr.f32.mxu0 0.0
    %2561 = vmatmul.mubr.f32.gmra.mrb[0].mxu0 %v2475
    %v2562 = vpop.f32.mrb[0].mxu0
    %v2563 = vadd.f32 0.0, %v2562
    %v2564 = vpop.f32.mrb[0].mxu0
    %2565 = vdwg.mxu0
    %v2566 = vmul.f32 %v2553, 0.17677669
    %v2567 = vmul.f32 %v2558, 0.17677669
    %v2568 = vmul.f32 %v2563, 0.17677669
    %vm2569 = vcmask 138240
    %v2570 = vsel %vm2569, %v2566, -inf
    %2571 = vmax.xlane.f32.xlu0 %v2570
    %v2572 = vpop.xlane.xlu0 %2571
    %v2573 = vsel %vm2569, %v2567, -inf
    %2574 = vmax.xlane.f32.xlu0 %v2573
    %v2575 = vpop.xlane.xlu0 %2574
    %vm2576 = vcmask 131072
    %v2577 = vsel %vm2576, %v2568, -inf
    %2578 = vmax.xlane.f32.xlu0 %v2577
    %v2579 = vpop.xlane.xlu0 %2578
    %v2580 = vsub.f32 %v2566, %v2572
    %v2581 = vsub.f32 %v2567, %v2575
    %v2582 = vsub.f32 %v2568, %v2579
    %v2583 = vmul.f32 %v2580, 1.442695
    %v2584 = vpow.pop %v2583
    %v2585 = vmul.f32 %v2581, 1.442695
    %v2586 = vpow.pop %v2585
    %v2587 = vmul.f32 %v2582, 1.442695
    %v2588 = vpow.pop %v2587
    %v2589 = vsel %vm2569, %v2584, 0.0
    %2590 = vadd.xlane.f32.xlu0 %v2589
    %v2591 = vpop.xlane.xlu0 %2590
    %v2592 = vsel %vm2569, %v2586, 0.0
    %2593 = vadd.xlane.f32.xlu0 %v2592
    %v2594 = vpop.xlane.xlu0 %2593
    %v2595 = vsel %vm2576, %v2588, 0.0
    %2596 = vadd.xlane.f32.xlu0 %v2595
    %v2597 = vpop.xlane.xlu0 %2596
    %v2598 = vrcp.pop %v2591
    %v2599 = vrcp.pop %v2594
    %v2600 = vrcp.pop %v2597
    %v2601 = vmul.f32 %v2584, %v2598
    %v2602 = vmul.f32 %v2586, %v2599
    %v2603 = vmul.f32 %v2588, %v2600
    %v2605 = vsel %vm2569, %v2601, 0
    %v2608 = vsel %vm2569, %v2602, 0
    %v2611 = vsel %vm2569, %v2603, 0
    %v2614 = vsel %vm2041, %v2455, 0
    %2616 = vmatprep.subr.mxu0 0.0
    %2617 = vmatpush1.msra.mxu0 %v2445
    %2618 = vmatprep.subr.mxu0 0.0
    %2619 = vmatpush1.msra.mxu0 %v2450
    %2620 = vmatprep.subr.mxu0 0.0
    %2621 = vmatpush1.msra.mxu0 %v2614
    %2622 = vmatprep.subr.mxu0 0.0
    %2623 = vmatpush1.msra.mxu0 0.0
    %2624 = vmatprep.subr.mxu0 0.0
    %2625 = vmatpush1.msra.mxu0 0.0
    %2626 = vmatprep.subr.mxu0 0.0
    %2627 = vmatpush1.msra.mxu0 0.0
    %2628 = vmatprep.subr.mxu0 0.0
    %2629 = vmatpush1.msra.mxu0 0.0
    %2630 = vmatprep.subr.mxu0 0.0
    %2631 = vmatpush1.msra.mxu0 0.0
    %2632 = vmatprep.subr.mxu0 0.0
    %2633 = vmatpush1.msra.mxu0 0.0
    %2634 = vmatprep.subr.mxu0 0.0
    %2635 = vmatpush1.msra.mxu0 0.0
    %2636 = vmatprep.subr.mxu0 0.0
    %2637 = vmatpush1.msra.mxu0 0.0
    %2638 = vmatprep.subr.mxu0 0.0
    %2639 = vmatpush1.msra.mxu0 0.0
    %2640 = vmatprep.subr.mxu0 0.0
    %2641 = vmatpush1.msra.mxu0 0.0
    %2642 = vmatprep.subr.mxu0 0.0
    %2643 = vmatpush1.msra.mxu0 0.0
    %2644 = vmatprep.subr.mxu0 0.0
    %2645 = vmatpush1.msra.mxu0 0.0
    %2646 = vmatprep.subr.mxu0 0.0
    %2647 = vmatpush1.msra.mxu0 0.0
    %2648 = vmatprep.subr.mxu0 0.0
    %2649 = vmatpush1.msra.mxu0 0.0
    %2650 = vmatprep.subr.mxu0 0.0
    %2651 = vmatpush1.msra.mxu0 0.0
    %2652 = vmatprep.subr.mxu0 0.0
    %2653 = vmatpush1.msra.mxu0 0.0
    %2654 = vmatprep.subr.mxu0 0.0
    %2655 = vmatpush1.msra.mxu0 0.0
    %2656 = vmatprep.subr.mxu0 0.0
    %2657 = vmatpush1.msra.mxu0 0.0
    %2658 = vmatprep.subr.mxu0 0.0
    %2659 = vmatpush1.msra.mxu0 0.0
    %2660 = vmatprep.subr.mxu0 0.0
    %2661 = vmatpush1.msra.mxu0 0.0
    %2662 = vmatprep.subr.mxu0 0.0
    %2663 = vmatpush1.msra.mxu0 0.0
    %2664 = vmatprep.subr.mxu0 0.0
    %2665 = vmatpush1.msra.mxu0 0.0
    %2666 = vmatprep.subr.mxu0 0.0
    %2667 = vmatpush1.msra.mxu0 0.0
    %2668 = vmatprep.subr.mxu0 0.0
    %2669 = vmatpush1.msra.mxu0 0.0
    %2670 = vmatprep.subr.mxu0 0.0
    %2671 = vmatpush1.msra.mxu0 0.0
    %2672 = vmatprep.subr.mxu0 0.0
    %2673 = vmatpush1.msra.mxu0 0.0
    %2674 = vmatprep.subr.mxu0 0.0
    %2675 = vmatpush1.msra.mxu0 0.0
    %2676 = vmatprep.subr.mxu0 0.0
    %2677 = vmatpush1.msra.mxu0 0.0
    %2678 = vmatprep.subr.mxu0 0.0
    %2679 = vmatpush1.msra.mxu0 0.0
    %2680 = vmatprep.mubr.f32.mxu0 0.0
    %2681 = vmatmul.mubr.f32.gmra.mrb[0].mxu0 %v2605
    %v2682 = vpop.f32.mrb[0].mxu0
    %v2683 = vadd.f32 0.0, %v2682
    %v2684 = vpop.f32.mrb[0].mxu0
    %2685 = vmatprep.mubr.f32.mxu0 0.0
    %2686 = vmatmul.mubr.f32.gmra.mrb[0].mxu0 %v2608
    %v2687 = vpop.f32.mrb[0].mxu0
    %v2688 = vadd.f32 0.0, %v2687
    %v2689 = vpop.f32.mrb[0].mxu0
    %2690 = vmatprep.mubr.f32.mxu0 0.0
    %2691 = vmatmul.mubr.f32.gmra.mrb[0].mxu0 %v2611
    %v2692 = vpop.f32.mrb[0].mxu0
    %v2693 = vadd.f32 0.0, %v2692
    %v2694 = vpop.f32.mrb[0].mxu0
    %2695 = vdwg.mxu0
    %2696 = vrot.lane.b32.xlu0 %v2257, 96
    %v2697 = vpop.permute.xlu0 %2696
    %2698 = vrot.lane.b32.xlu0 %v2262, 96
    %v2699 = vpop.permute.xlu0 %2698
    %2700 = vrot.lane.b32.xlu0 %v2267, 96
    %v2701 = vpop.permute.xlu0 %2700
    %2702 = vrot.lane.b32.xlu0 %v2351, 96
    %v2703 = vpop.permute.xlu0 %2702
    %2704 = vrot.lane.b32.xlu0 %v2356, 96
    %v2705 = vpop.permute.xlu0 %2704
    %2706 = vrot.lane.b32.xlu0 %v2361, 96
    %v2707 = vpop.permute.xlu0 %2706
    %v2708 = vsel %vm1048, %v2697, 0
    %v2710 = vsel %vm1048, %v2699, 0
    %v2712 = vsel %vm1048, %v2701, 0
    %v2714 = vsel %vm1048, %v2703, 0
    %v2716 = vsel %vm1048, %v2705, 0
    %v2718 = vsel %vm1048, %v2707, 0
    %2720 = vmatprep.subr.mxu0 0.0
    %2721 = vmatpush1.xpose.msra.mxu0 %v2714
    %2722 = vmatprep.subr.mxu0 0.0
    %2723 = vmatpush1.xpose.msra.mxu0 %v2716
    %2724 = vmatprep.subr.mxu0 0.0
    %2725 = vmatpush1.xpose.msra.mxu0 %v2718
    %2726 = vmatprep.subr.mxu0 0.0
    %2727 = vmatpush1.xpose.msra.mxu0 0.0
    %2728 = vmatprep.subr.mxu0 0.0
    %2729 = vmatpush1.xpose.msra.mxu0 0.0
    %2730 = vmatprep.subr.mxu0 0.0
    %2731 = vmatpush1.xpose.msra.mxu0 0.0
    %2732 = vmatprep.subr.mxu0 0.0
    %2733 = vmatpush1.xpose.msra.mxu0 0.0
    %2734 = vmatprep.subr.mxu0 0.0
    %2735 = vmatpush1.xpose.msra.mxu0 0.0
    %2736 = vmatprep.subr.mxu0 0.0
    %2737 = vmatpush1.xpose.msra.mxu0 0.0
    %2738 = vmatprep.subr.mxu0 0.0
    %2739 = vmatpush1.xpose.msra.mxu0 0.0
    %2740 = vmatprep.subr.mxu0 0.0
    %2741 = vmatpush1.xpose.msra.mxu0 0.0
    %2742 = vmatprep.subr.mxu0 0.0
    %2743 = vmatpush1.xpose.msra.mxu0 0.0
    %2744 = vmatprep.subr.mxu0 0.0
    %2745 = vmatpush1.xpose.msra.mxu0 0.0
    %2746 = vmatprep.subr.mxu0 0.0
    %2747 = vmatpush1.xpose.msra.mxu0 0.0
    %2748 = vmatprep.subr.mxu0 0.0
    %2749 = vmatpush1.xpose.msra.mxu0 0.0
    %2750 = vmatprep.subr.mxu0 0.0
    %2751 = vmatpush1.xpose.msra.mxu0 0.0
    %2752 = vmatprep.subr.mxu0 0.0
    %2753 = vmatpush1.xpose.msra.mxu0 0.0
    %2754 = vmatprep.subr.mxu0 0.0
    %2755 = vmatpush1.xpose.msra.mxu0 0.0
    %2756 = vmatprep.subr.mxu0 0.0
    %2757 = vmatpush1.xpose.msra.mxu0 0.0
    %2758 = vmatprep.subr.mxu0 0.0
    %2759 = vmatpush1.xpose.msra.mxu0 0.0
    %2760 = vmatprep.subr.mxu0 0.0
    %2761 = vmatpush1.xpose.msra.mxu0 0.0
    %2762 = vmatprep.subr.mxu0 0.0
    %2763 = vmatpush1.xpose.msra.mxu0 0.0
    %2764 = vmatprep.subr.mxu0 0.0
    %2765 = vmatpush1.xpose.msra.mxu0 0.0
    %2766 = vmatprep.subr.mxu0 0.0
    %2767 = vmatpush1.xpose.msra.mxu0 0.0
    %2768 = vmatprep.subr.mxu0 0.0
    %2769 = vmatpush1.xpose.msra.mxu0 0.0
    %2770 = vmatprep.subr.mxu0 0.0
    %2771 = vmatpush1.xpose.msra.mxu0 0.0
    %2772 = vmatprep.subr.mxu0 0.0
    %2773 = vmatpush1.xpose.msra.mxu0 0.0
    %2774 = vmatprep.subr.mxu0 0.0
    %2775 = vmatpush1.xpose.msra.mxu0 0.0
    %2776 = vmatprep.subr.mxu0 0.0
    %2777 = vmatpush1.xpose.msra.mxu0 0.0
    %2778 = vmatprep.subr.mxu0 0.0
    %2779 = vmatpush1.xpose.msra.mxu0 0.0
    %2780 = vmatprep.subr.mxu0 0.0
    %2781 = vmatpush1.xpose.msra.mxu0 0.0
    %2782 = vmatprep.subr.mxu0 0.0
    %2783 = vmatpush1.xpose.msra.mxu0 0.0
    %2784 = vmatprep.mubr.f32.mxu0 0.0
    %2785 = vmatmul.mubr.f32.gmra.mrb[0].mxu0 %v2708
    %v2786 = vpop.f32.mrb[0].mxu0
    %v2787 = vadd.f32 0.0, %v2786
    %v2788 = vpop.f32.mrb[0].mxu0
    %2789 = vmatprep.mubr.f32.mxu0 0.0
    %2790 = vmatmul.mubr.f32.gmra.mrb[0].mxu0 %v2710
    %v2791 = vpop.f32.mrb[0].mxu0
    %v2792 = vadd.f32 0.0, %v2791
    %v2793 = vpop.f32.mrb[0].mxu0
    %2794 = vmatprep.mubr.f32.mxu0 0.0
    %2795 = vmatmul.mubr.f32.gmra.mrb[0].mxu0 %v2712
    %v2796 = vpop.f32.mrb[0].mxu0
    %v2797 = vadd.f32 0.0, %v2796
    %v2798 = vpop.f32.mrb[0].mxu0
    %2799 = vdwg.mxu0
    %v2800 = vmul.f32 %v2787, 0.17677669
    %v2801 = vmul.f32 %v2792, 0.17677669
    %v2802 = vmul.f32 %v2797, 0.17677669
    %v2803 = vsel %vm2569, %v2800, -inf
    %2804 = vmax.xlane.f32.xlu0 %v2803
    %v2805 = vpop.xlane.xlu0 %2804
    %v2806 = vsel %vm2569, %v2801, -inf
    %2807 = vmax.xlane.f32.xlu0 %v2806
    %v2808 = vpop.xlane.xlu0 %2807
    %v2809 = vsel %vm2576, %v2802, -inf
    %2810 = vmax.xlane.f32.xlu0 %v2809
    %v2811 = vpop.xlane.xlu0 %2810
    %v2812 = vsub.f32 %v2800, %v2805
    %v2813 = vsub.f32 %v2801, %v2808
    %v2814 = vsub.f32 %v2802, %v2811
    %v2815 = vmul.f32 %v2812, 1.442695
    %v2816 = vpow.pop %v2815
    %v2817 = vmul.f32 %v2813, 1.442695
    %v2818 = vpow.pop %v2817
    %v2819 = vmul.f32 %v2814, 1.442695
    %v2820 = vpow.pop %v2819
    %v2821 = vsel %vm2569, %v2816, 0.0
    %2822 = vadd.xlane.f32.xlu0 %v2821
    %v2823 = vpop.xlane.xlu0 %2822
    %v2824 = vsel %vm2569, %v2818, 0.0
    %2825 = vadd.xlane.f32.xlu0 %v2824
    %v2826 = vpop.xlane.xlu0 %2825
    %v2827 = vsel %vm2576, %v2820, 0.0
    %2828 = vadd.xlane.f32.xlu0 %v2827
    %v2829 = vpop.xlane.xlu0 %2828
    %v2830 = vrcp.pop %v2823
    %v2831 = vrcp.pop %v2826
    %v2832 = vrcp.pop %v2829
    %v2833 = vmul.f32 %v2816, %v2830
    %v2834 = vmul.f32 %v2818, %v2831
    %v2835 = vmul.f32 %v2820, %v2832
    %2838 = vrot.lane.b32.xlu0 %v2445, 96
    %v2839 = vpop.permute.xlu0 %2838
    %2840 = vrot.lane.b32.xlu0 %v2450, 96
    %v2841 = vpop.permute.xlu0 %2840
    %2842 = vrot.lane.b32.xlu0 %v2455, 96
    %v2843 = vpop.permute.xlu0 %2842
    %v2847 = vsel %vm2569, %v2833, 0
    %v2850 = vsel %vm2569, %v2834, 0
    %v2853 = vsel %vm2569, %v2835, 0
    %v2855 = vsel %vm2041, %v2843, 0
    %2857 = vmatprep.subr.mxu0 0.0
    %2858 = vmatpush1.msra.mxu0 %v2839
    %2859 = vmatprep.subr.mxu0 0.0
    %2860 = vmatpush1.msra.mxu0 %v2841
    %2861 = vmatprep.subr.mxu0 0.0
    %2862 = vmatpush1.msra.mxu0 %v2855
    %2863 = vmatprep.subr.mxu0 0.0
    %2864 = vmatpush1.msra.mxu0 0.0
    %2865 = vmatprep.subr.mxu0 0.0
    %2866 = vmatpush1.msra.mxu0 0.0
    %2867 = vmatprep.subr.mxu0 0.0
    %2868 = vmatpush1.msra.mxu0 0.0
    %2869 = vmatprep.subr.mxu0 0.0
    %2870 = vmatpush1.msra.mxu0 0.0
    %2871 = vmatprep.subr.mxu0 0.0
    %2872 = vmatpush1.msra.mxu0 0.0
    %2873 = vmatprep.subr.mxu0 0.0
    %2874 = vmatpush1.msra.mxu0 0.0
    %2875 = vmatprep.subr.mxu0 0.0
    %2876 = vmatpush1.msra.mxu0 0.0
    %2877 = vmatprep.subr.mxu0 0.0
    %2878 = vmatpush1.msra.mxu0 0.0
    %2879 = vmatprep.subr.mxu0 0.0
    %2880 = vmatpush1.msra.mxu0 0.0
    %2881 = vmatprep.subr.mxu0 0.0
    %2882 = vmatpush1.msra.mxu0 0.0
    %2883 = vmatprep.subr.mxu0 0.0
    %2884 = vmatpush1.msra.mxu0 0.0
    %2885 = vmatprep.subr.mxu0 0.0
    %2886 = vmatpush1.msra.mxu0 0.0
    %2887 = vmatprep.subr.mxu0 0.0
    %2888 = vmatpush1.msra.mxu0 0.0
    %2889 = vmatprep.subr.mxu0 0.0
    %2890 = vmatpush1.msra.mxu0 0.0
    %2891 = vmatprep.subr.mxu0 0.0
    %2892 = vmatpush1.msra.mxu0 0.0
    %2893 = vmatprep.subr.mxu0 0.0
    %2894 = vmatpush1.msra.mxu0 0.0
    %2895 = vmatprep.subr.mxu0 0.0
    %2896 = vmatpush1.msra.mxu0 0.0
    %2897 = vmatprep.subr.mxu0 0.0
    %2898 = vmatpush1.msra.mxu0 0.0
    %2899 = vmatprep.subr.mxu0 0.0
    %2900 = vmatpush1.msra.mxu0 0.0
    %2901 = vmatprep.subr.mxu0 0.0
    %2902 = vmatpush1.msra.mxu0 0.0
    %2903 = vmatprep.subr.mxu0 0.0
    %2904 = vmatpush1.msra.mxu0 0.0
    %2905 = vmatprep.subr.mxu0 0.0
    %2906 = vmatpush1.msra.mxu0 0.0
    %2907 = vmatprep.subr.mxu0 0.0
    %2908 = vmatpush1.msra.mxu0 0.0
    %2909 = vmatprep.subr.mxu0 0.0
    %2910 = vmatpush1.msra.mxu0 0.0
    %2911 = vmatprep.subr.mxu0 0.0
    %2912 = vmatpush1.msra.mxu0 0.0
    %2913 = vmatprep.subr.mxu0 0.0
    %2914 = vmatpush1.msra.mxu0 0.0
    %2915 = vmatprep.subr.mxu0 0.0
    %2916 = vmatpush1.msra.mxu0 0.0
    %2917 = vmatprep.subr.mxu0 0.0
    %2918 = vmatpush1.msra.mxu0 0.0
    %2919 = vmatprep.subr.mxu0 0.0
    %2920 = vmatpush1.msra.mxu0 0.0
    %2921 = vmatprep.mubr.f32.mxu0 0.0
    %2922 = vmatmul.mubr.f32.gmra.mrb[0].mxu0 %v2847
    %v2923 = vpop.f32.mrb[0].mxu0
    %v2924 = vadd.f32 0.0, %v2923
    %v2925 = vpop.f32.mrb[0].mxu0
    %2926 = vmatprep.mubr.f32.mxu0 0.0
    %2927 = vmatmul.mubr.f32.gmra.mrb[0].mxu0 %v2850
    %v2928 = vpop.f32.mrb[0].mxu0
    %v2929 = vadd.f32 0.0, %v2928
    %v2930 = vpop.f32.mrb[0].mxu0
    %2931 = vmatprep.mubr.f32.mxu0 0.0
    %2932 = vmatmul.mubr.f32.gmra.mrb[0].mxu0 %v2853
    %v2933 = vpop.f32.mrb[0].mxu0
    %v2934 = vadd.f32 0.0, %v2933
    %v2935 = vpop.f32.mrb[0].mxu0
    %2936 = vdwg.mxu0
    %2940 = vrot.lane.b32.xlu0 %v2924, 32
    %v2941 = vpop.permute.xlu0 %2940
    %2942 = vrot.lane.b32.xlu0 %v2929, 32
    %v2943 = vpop.permute.xlu0 %2942
    %2944 = vrot.lane.b32.xlu0 %v2934, 32
    %v2945 = vpop.permute.xlu0 %2944
    %v2949 = vsel %vm1048, %v2683, %v2941
    %v2950 = vsel %vm1048, %v2688, %v2943
    %v2951 = vsel %vm1048, %v2693, %v2945
    %v2954 = vrot.slane %v2267, 1
    %v2955 = vrot.slane %v2272, 1
    %v2956 = vsel %vm118, %v2954, %v2955
    %v2957 = vrot.slane %v2277, 1
    %v2958 = vsel %vm118, %v2955, %v2957
    %v2961 = vrot.slane %v2361, 1
    %v2962 = vrot.slane %v2366, 1
    %v2963 = vsel %vm118, %v2961, %v2962
    %v2964 = vrot.slane %v2371, 1
    %v2965 = vsel %vm118, %v2962, %v2964
    %v2966 = vsel %vm1048, %v2956, 0
    %v2968 = vsel %vm1048, %v2958, 0
    %v2970 = vsel %vm1048, %v2957, 0
    %v2972 = vsel %vm1048, %v2963, 0
    %v2974 = vsel %vm1048, %v2965, 0
    %v2976 = vsel %vm1048, %v2964, 0
    %2978 = vmatprep.subr.mxu0 0.0
    %2979 = vmatpush1.xpose.msra.mxu0 %v2972
    %2980 = vmatprep.subr.mxu0 0.0
    %2981 = vmatpush1.xpose.msra.mxu0 %v2974
    %2982 = vmatprep.subr.mxu0 0.0
    %2983 = vmatpush1.xpose.msra.mxu0 %v2976
    %2984 = vmatprep.subr.mxu0 0.0
    %2985 = vmatpush1.xpose.msra.mxu0 0.0
    %2986 = vmatprep.subr.mxu0 0.0
    %2987 = vmatpush1.xpose.msra.mxu0 0.0
    %2988 = vmatprep.subr.mxu0 0.0
    %2989 = vmatpush1.xpose.msra.mxu0 0.0
    %2990 = vmatprep.subr.mxu0 0.0
    %2991 = vmatpush1.xpose.msra.mxu0 0.0
    %2992 = vmatprep.subr.mxu0 0.0
    %2993 = vmatpush1.xpose.msra.mxu0 0.0
    %2994 = vmatprep.subr.mxu0 0.0
    %2995 = vmatpush1.xpose.msra.mxu0 0.0
    %2996 = vmatprep.subr.mxu0 0.0
    %2997 = vmatpush1.xpose.msra.mxu0 0.0
    %2998 = vmatprep.subr.mxu0 0.0
    %2999 = vmatpush1.xpose.msra.mxu0 0.0
    %3000 = vmatprep.subr.mxu0 0.0
    %3001 = vmatpush1.xpose.msra.mxu0 0.0
    %3002 = vmatprep.subr.mxu0 0.0
    %3003 = vmatpush1.xpose.msra.mxu0 0.0
    %3004 = vmatprep.subr.mxu0 0.0
    %3005 = vmatpush1.xpose.msra.mxu0 0.0
    %3006 = vmatprep.subr.mxu0 0.0
    %3007 = vmatpush1.xpose.msra.mxu0 0.0
    %3008 = vmatprep.subr.mxu0 0.0
    %3009 = vmatpush1.xpose.msra.mxu0 0.0
    %3010 = vmatprep.subr.mxu0 0.0
    %3011 = vmatpush1.xpose.msra.mxu0 0.0
    %3012 = vmatprep.subr.mxu0 0.0
    %3013 = vmatpush1.xpose.msra.mxu0 0.0
    %3014 = vmatprep.subr.mxu0 0.0
    %3015 = vmatpush1.xpose.msra.mxu0 0.0
    %3016 = vmatprep.subr.mxu0 0.0
    %3017 = vmatpush1.xpose.msra.mxu0 0.0
    %3018 = vmatprep.subr.mxu0 0.0
    %3019 = vmatpush1.xpose.msra.mxu0 0.0
    %3020 = vmatprep.subr.mxu0 0.0
    %3021 = vmatpush1.xpose.msra.mxu0 0.0
    %3022 = vmatprep.subr.mxu0 0.0
    %3023 = vmatpush1.xpose.msra.mxu0 0.0
    %3024 = vmatprep.subr.mxu0 0.0
    %3025 = vmatpush1.xpose.msra.mxu0 0.0
    %3026 = vmatprep.subr.mxu0 0.0
    %3027 = vmatpush1.xpose.msra.mxu0 0.0
    %3028 = vmatprep.subr.mxu0 0.0
    %3029 = vmatpush1.xpose.msra.mxu0 0.0
    %3030 = vmatprep.subr.mxu0 0.0
    %3031 = vmatpush1.xpose.msra.mxu0 0.0
    %3032 = vmatprep.subr.mxu0 0.0
    %3033 = vmatpush1.xpose.msra.mxu0 0.0
    %3034 = vmatprep.subr.mxu0 0.0
    %3035 = vmatpush1.xpose.msra.mxu0 0.0
    %3036 = vmatprep.subr.mxu0 0.0
    %3037 = vmatpush1.xpose.msra.mxu0 0.0
    %3038 = vmatprep.subr.mxu0 0.0
    %3039 = vmatpush1.xpose.msra.mxu0 0.0
    %3040 = vmatprep.subr.mxu0 0.0
    %3041 = vmatpush1.xpose.msra.mxu0 0.0
    %3042 = vmatprep.mubr.f32.mxu0 0.0
    %3043 = vmatmul.mubr.f32.gmra.mrb[0].mxu0 %v2966
    %v3044 = vpop.f32.mrb[0].mxu0
    %v3045 = vadd.f32 0.0, %v3044
    %v3046 = vpop.f32.mrb[0].mxu0
    %3047 = vmatprep.mubr.f32.mxu0 0.0
    %3048 = vmatmul.mubr.f32.gmra.mrb[0].mxu0 %v2968
    %v3049 = vpop.f32.mrb[0].mxu0
    %v3050 = vadd.f32 0.0, %v3049
    %v3051 = vpop.f32.mrb[0].mxu0
    %3052 = vmatprep.mubr.f32.mxu0 0.0
    %3053 = vmatmul.mubr.f32.gmra.mrb[0].mxu0 %v2970
    %v3054 = vpop.f32.mrb[0].mxu0
    %v3055 = vadd.f32 0.0, %v3054
    %v3056 = vpop.f32.mrb[0].mxu0
    %3057 = vdwg.mxu0
    %v3058 = vmul.f32 %v3045, 0.17677669
    %v3059 = vmul.f32 %v3050, 0.17677669
    %v3060 = vmul.f32 %v3055, 0.17677669
    %v3061 = vsel %vm2569, %v3058, -inf
    %3062 = vmax.xlane.f32.xlu0 %v3061
    %v3063 = vpop.xlane.xlu0 %3062
    %v3064 = vsel %vm2569, %v3059, -inf
    %3065 = vmax.xlane.f32.xlu0 %v3064
    %v3066 = vpop.xlane.xlu0 %3065
    %v3067 = vsel %vm2576, %v3060, -inf
    %3068 = vmax.xlane.f32.xlu0 %v3067
    %v3069 = vpop.xlane.xlu0 %3068
    %v3070 = vsub.f32 %v3058, %v3063
    %v3071 = vsub.f32 %v3059, %v3066
    %v3072 = vsub.f32 %v3060, %v3069
    %v3073 = vmul.f32 %v3070, 1.442695
    %v3074 = vpow.pop %v3073
    %v3075 = vmul.f32 %v3071, 1.442695
    %v3076 = vpow.pop %v3075
    %v3077 = vmul.f32 %v3072, 1.442695
    %v3078 = vpow.pop %v3077
    %v3079 = vsel %vm2569, %v3074, 0.0
    %3080 = vadd.xlane.f32.xlu0 %v3079
    %v3081 = vpop.xlane.xlu0 %3080
    %v3082 = vsel %vm2569, %v3076, 0.0
    %3083 = vadd.xlane.f32.xlu0 %v3082
    %v3084 = vpop.xlane.xlu0 %3083
    %v3085 = vsel %vm2576, %v3078, 0.0
    %3086 = vadd.xlane.f32.xlu0 %v3085
    %v3087 = vpop.xlane.xlu0 %3086
    %v3088 = vrcp.pop %v3081
    %v3089 = vrcp.pop %v3084
    %v3090 = vrcp.pop %v3087
    %v3091 = vmul.f32 %v3074, %v3088
    %v3092 = vmul.f32 %v3076, %v3089
    %v3093 = vmul.f32 %v3078, %v3090
    %v3096 = vrot.slane %v2455, 1
    %v3097 = vrot.slane %v2460, 1
    %v3098 = vsel %vm118, %v3096, %v3097
    %v3099 = vrot.slane %v2465, 1
    %v3100 = vsel %vm118, %v3097, %v3099
    %v3104 = vsel %vm2569, %v3091, 0
    %v3107 = vsel %vm2569, %v3092, 0
    %v3110 = vsel %vm2569, %v3093, 0
    %v3112 = vsel %vm2041, %v3099, 0
    %3114 = vmatprep.subr.mxu0 0.0
    %3115 = vmatpush1.msra.mxu0 %v3098
    %3116 = vmatprep.subr.mxu0 0.0
    %3117 = vmatpush1.msra.mxu0 %v3100
    %3118 = vmatprep.subr.mxu0 0.0
    %3119 = vmatpush1.msra.mxu0 %v3112
    %3120 = vmatprep.subr.mxu0 0.0
    %3121 = vmatpush1.msra.mxu0 0.0
    %3122 = vmatprep.subr.mxu0 0.0
    %3123 = vmatpush1.msra.mxu0 0.0
    %3124 = vmatprep.subr.mxu0 0.0
    %3125 = vmatpush1.msra.mxu0 0.0
    %3126 = vmatprep.subr.mxu0 0.0
    %3127 = vmatpush1.msra.mxu0 0.0
    %3128 = vmatprep.subr.mxu0 0.0
    %3129 = vmatpush1.msra.mxu0 0.0
    %3130 = vmatprep.subr.mxu0 0.0
    %3131 = vmatpush1.msra.mxu0 0.0
    %3132 = vmatprep.subr.mxu0 0.0
    %3133 = vmatpush1.msra.mxu0 0.0
    %3134 = vmatprep.subr.mxu0 0.0
    %3135 = vmatpush1.msra.mxu0 0.0
    %3136 = vmatprep.subr.mxu0 0.0
    %3137 = vmatpush1.msra.mxu0 0.0
    %3138 = vmatprep.subr.mxu0 0.0
    %3139 = vmatpush1.msra.mxu0 0.0
    %3140 = vmatprep.subr.mxu0 0.0
    %3141 = vmatpush1.msra.mxu0 0.0
    %3142 = vmatprep.subr.mxu0 0.0
    %3143 = vmatpush1.msra.mxu0 0.0
    %3144 = vmatprep.subr.mxu0 0.0
    %3145 = vmatpush1.msra.mxu0 0.0
    %3146 = vmatprep.subr.mxu0 0.0
    %3147 = vmatpush1.msra.mxu0 0.0
    %3148 = vmatprep.subr.mxu0 0.0
    %3149 = vmatpush1.msra.mxu0 0.0
    %3150 = vmatprep.subr.mxu0 0.0
    %3151 = vmatpush1.msra.mxu0 0.0
    %3152 = vmatprep.subr.mxu0 0.0
    %3153 = vmatpush1.msra.mxu0 0.0
    %3154 = vmatprep.subr.mxu0 0.0
    %3155 = vmatpush1.msra.mxu0 0.0
    %3156 = vmatprep.subr.mxu0 0.0
    %3157 = vmatpush1.msra.mxu0 0.0
    %3158 = vmatprep.subr.mxu0 0.0
    %3159 = vmatpush1.msra.mxu0 0.0
    %3160 = vmatprep.subr.mxu0 0.0
    %3161 = vmatpush1.msra.mxu0 0.0
    %3162 = vmatprep.subr.mxu0 0.0
    %3163 = vmatpush1.msra.mxu0 0.0
    %3164 = vmatprep.subr.mxu0 0.0
    %3165 = vmatpush1.msra.mxu0 0.0
    %3166 = vmatprep.subr.mxu0 0.0
    %3167 = vmatpush1.msra.mxu0 0.0
    %3168 = vmatprep.subr.mxu0 0.0
    %3169 = vmatpush1.msra.mxu0 0.0
    %3170 = vmatprep.subr.mxu0 0.0
    %3171 = vmatpush1.msra.mxu0 0.0
    %3172 = vmatprep.subr.mxu0 0.0
    %3173 = vmatpush1.msra.mxu0 0.0
    %3174 = vmatprep.subr.mxu0 0.0
    %3175 = vmatpush1.msra.mxu0 0.0
    %3176 = vmatprep.subr.mxu0 0.0
    %3177 = vmatpush1.msra.mxu0 0.0
    %3178 = vmatprep.mubr.f32.mxu0 0.0
    %3179 = vmatmul.mubr.f32.gmra.mrb[0].mxu0 %v3104
    %v3180 = vpop.f32.mrb[0].mxu0
    %v3181 = vadd.f32 0.0, %v3180
    %v3182 = vpop.f32.mrb[0].mxu0
    %3183 = vmatprep.mubr.f32.mxu0 0.0
    %3184 = vmatmul.mubr.f32.gmra.mrb[0].mxu0 %v3107
    %v3185 = vpop.f32.mrb[0].mxu0
    %v3186 = vadd.f32 0.0, %v3185
    %v3187 = vpop.f32.mrb[0].mxu0
    %3188 = vmatprep.mubr.f32.mxu0 0.0
    %3189 = vmatmul.mubr.f32.gmra.mrb[0].mxu0 %v3110
    %v3190 = vpop.f32.mrb[0].mxu0
    %v3191 = vadd.f32 0.0, %v3190
    %v3192 = vpop.f32.mrb[0].mxu0
    %3193 = vdwg.mxu0
    %3194 = vrot.lane.b32.xlu0 %v2956, 96
    %v3195 = vpop.permute.xlu0 %3194
    %3196 = vrot.lane.b32.xlu0 %v2958, 96
    %v3197 = vpop.permute.xlu0 %3196
    %3198 = vrot.lane.b32.xlu0 %v2957, 96
    %v3199 = vpop.permute.xlu0 %3198
    %3200 = vrot.lane.b32.xlu0 %v2963, 96
    %v3201 = vpop.permute.xlu0 %3200
    %3202 = vrot.lane.b32.xlu0 %v2965, 96
    %v3203 = vpop.permute.xlu0 %3202
    %3204 = vrot.lane.b32.xlu0 %v2964, 96
    %v3205 = vpop.permute.xlu0 %3204
    %v3206 = vsel %vm1048, %v3195, 0
    %v3208 = vsel %vm1048, %v3197, 0
    %v3210 = vsel %vm1048, %v3199, 0
    %v3212 = vsel %vm1048, %v3201, 0
    %v3214 = vsel %vm1048, %v3203, 0
    %v3216 = vsel %vm1048, %v3205, 0
    %3218 = vmatprep.subr.mxu0 0.0
    %3219 = vmatpush1.xpose.msra.mxu0 %v3212
    %3220 = vmatprep.subr.mxu0 0.0
    %3221 = vmatpush1.xpose.msra.mxu0 %v3214
    %3222 = vmatprep.subr.mxu0 0.0
    %3223 = vmatpush1.xpose.msra.mxu0 %v3216
    %3224 = vmatprep.subr.mxu0 0.0
    %3225 = vmatpush1.xpose.msra.mxu0 0.0
    %3226 = vmatprep.subr.mxu0 0.0
    %3227 = vmatpush1.xpose.msra.mxu0 0.0
    %3228 = vmatprep.subr.mxu0 0.0
    %3229 = vmatpush1.xpose.msra.mxu0 0.0
    %3230 = vmatprep.subr.mxu0 0.0
    %3231 = vmatpush1.xpose.msra.mxu0 0.0
    %3232 = vmatprep.subr.mxu0 0.0
    %3233 = vmatpush1.xpose.msra.mxu0 0.0
    %3234 = vmatprep.subr.mxu0 0.0
    %3235 = vmatpush1.xpose.msra.mxu0 0.0
    %3236 = vmatprep.subr.mxu0 0.0
    %3237 = vmatpush1.xpose.msra.mxu0 0.0
    %3238 = vmatprep.subr.mxu0 0.0
    %3239 = vmatpush1.xpose.msra.mxu0 0.0
    %3240 = vmatprep.subr.mxu0 0.0
    %3241 = vmatpush1.xpose.msra.mxu0 0.0
    %3242 = vmatprep.subr.mxu0 0.0
    %3243 = vmatpush1.xpose.msra.mxu0 0.0
    %3244 = vmatprep.subr.mxu0 0.0
    %3245 = vmatpush1.xpose.msra.mxu0 0.0
    %3246 = vmatprep.subr.mxu0 0.0
    %3247 = vmatpush1.xpose.msra.mxu0 0.0
    %3248 = vmatprep.subr.mxu0 0.0
    %3249 = vmatpush1.xpose.msra.mxu0 0.0
    %3250 = vmatprep.subr.mxu0 0.0
    %3251 = vmatpush1.xpose.msra.mxu0 0.0
    %3252 = vmatprep.subr.mxu0 0.0
    %3253 = vmatpush1.xpose.msra.mxu0 0.0
    %3254 = vmatprep.subr.mxu0 0.0
    %3255 = vmatpush1.xpose.msra.mxu0 0.0
    %3256 = vmatprep.subr.mxu0 0.0
    %3257 = vmatpush1.xpose.msra.mxu0 0.0
    %3258 = vmatprep.subr.mxu0 0.0
    %3259 = vmatpush1.xpose.msra.mxu0 0.0
    %3260 = vmatprep.subr.mxu0 0.0
    %3261 = vmatpush1.xpose.msra.mxu0 0.0
    %3262 = vmatprep.subr.mxu0 0.0
    %3263 = vmatpush1.xpose.msra.mxu0 0.0
    %3264 = vmatprep.subr.mxu0 0.0
    %3265 = vmatpush1.xpose.msra.mxu0 0.0
    %3266 = vmatprep.subr.mxu0 0.0
    %3267 = vmatpush1.xpose.msra.mxu0 0.0
    %3268 = vmatprep.subr.mxu0 0.0
    %3269 = vmatpush1.xpose.msra.mxu0 0.0
    %3270 = vmatprep.subr.mxu0 0.0
    %3271 = vmatpush1.xpose.msra.mxu0 0.0
    %3272 = vmatprep.subr.mxu0 0.0
    %3273 = vmatpush1.xpose.msra.mxu0 0.0
    %3274 = vmatprep.subr.mxu0 0.0
    %3275 = vmatpush1.xpose.msra.mxu0 0.0
    %3276 = vmatprep.subr.mxu0 0.0
    %3277 = vmatpush1.xpose.msra.mxu0 0.0
    %3278 = vmatprep.subr.mxu0 0.0
    %3279 = vmatpush1.xpose.msra.mxu0 0.0
    %3280 = vmatprep.subr.mxu0 0.0
    %3281 = vmatpush1.xpose.msra.mxu0 0.0
    %3282 = vmatprep.mubr.f32.mxu0 0.0
    %3283 = vmatmul.mubr.f32.gmra.mrb[0].mxu0 %v3206
    %v3284 = vpop.f32.mrb[0].mxu0
    %v3285 = vadd.f32 0.0, %v3284
    %v3286 = vpop.f32.mrb[0].mxu0
    %3287 = vmatprep.mubr.f32.mxu0 0.0
    %3288 = vmatmul.mubr.f32.gmra.mrb[0].mxu0 %v3208
    %v3289 = vpop.f32.mrb[0].mxu0
    %v3290 = vadd.f32 0.0, %v3289
    %v3291 = vpop.f32.mrb[0].mxu0
    %3292 = vmatprep.mubr.f32.mxu0 0.0
    %3293 = vmatmul.mubr.f32.gmra.mrb[0].mxu0 %v3210
    %v3294 = vpop.f32.mrb[0].mxu0
    %v3295 = vadd.f32 0.0, %v3294
    %v3296 = vpop.f32.mrb[0].mxu0
    %3297 = vdwg.mxu0
    %v3298 = vmul.f32 %v3285, 0.17677669
    %v3299 = vmul.f32 %v3290, 0.17677669
    %v3300 = vmul.f32 %v3295, 0.17677669
    %v3301 = vsel %vm2569, %v3298, -inf
    %3302 = vmax.xlane.f32.xlu0 %v3301
    %v3303 = vpop.xlane.xlu0 %3302
    %v3304 = vsel %vm2569, %v3299, -inf
    %3305 = vmax.xlane.f32.xlu0 %v3304
    %v3306 = vpop.xlane.xlu0 %3305
    %v3307 = vsel %vm2576, %v3300, -inf
    %3308 = vmax.xlane.f32.xlu0 %v3307
    %v3309 = vpop.xlane.xlu0 %3308
    %v3310 = vsub.f32 %v3298, %v3303
    %v3311 = vsub.f32 %v3299, %v3306
    %v3312 = vsub.f32 %v3300, %v3309
    %v3313 = vmul.f32 %v3310, 1.442695
    %v3314 = vpow.pop %v3313
    %v3315 = vmul.f32 %v3311, 1.442695
    %v3316 = vpow.pop %v3315
    %v3317 = vmul.f32 %v3312, 1.442695
    %v3318 = vpow.pop %v3317
    %v3319 = vsel %vm2569, %v3314, 0.0
    %3320 = vadd.xlane.f32.xlu0 %v3319
    %v3321 = vpop.xlane.xlu0 %3320
    %v3322 = vsel %vm2569, %v3316, 0.0
    %3323 = vadd.xlane.f32.xlu0 %v3322
    %v3324 = vpop.xlane.xlu0 %3323
    %v3325 = vsel %vm2576, %v3318, 0.0
    %3326 = vadd.xlane.f32.xlu0 %v3325
    %v3327 = vpop.xlane.xlu0 %3326
    %v3328 = vrcp.pop %v3321
    %v3329 = vrcp.pop %v3324
    %v3330 = vrcp.pop %v3327
    %v3331 = vmul.f32 %v3314, %v3328
    %v3332 = vmul.f32 %v3316, %v3329
    %v3333 = vmul.f32 %v3318, %v3330
    %3334 = vrot.lane.b32.xlu0 %v3098, 96
    %v3335 = vpop.permute.xlu0 %3334
    %3336 = vrot.lane.b32.xlu0 %v3100, 96
    %v3337 = vpop.permute.xlu0 %3336
    %3338 = vrot.lane.b32.xlu0 %v3099, 96
    %v3339 = vpop.permute.xlu0 %3338
    %v3343 = vsel %vm2569, %v3331, 0
    %v3346 = vsel %vm2569, %v3332, 0
    %v3349 = vsel %vm2569, %v3333, 0
    %v3351 = vsel %vm2041, %v3339, 0
    %3353 = vmatprep.subr.mxu0 0.0
    %3354 = vmatpush1.msra.mxu0 %v3335
    %3355 = vmatprep.subr.mxu0 0.0
    %3356 = vmatpush1.msra.mxu0 %v3337
    %3357 = vmatprep.subr.mxu0 0.0
    %3358 = vmatpush1.msra.mxu0 %v3351
    %3359 = vmatprep.subr.mxu0 0.0
    %3360 = vmatpush1.msra.mxu0 0.0
    %3361 = vmatprep.subr.mxu0 0.0
    %3362 = vmatpush1.msra.mxu0 0.0
    %3363 = vmatprep.subr.mxu0 0.0
    %3364 = vmatpush1.msra.mxu0 0.0
    %3365 = vmatprep.subr.mxu0 0.0
    %3366 = vmatpush1.msra.mxu0 0.0
    %3367 = vmatprep.subr.mxu0 0.0
    %3368 = vmatpush1.msra.mxu0 0.0
    %3369 = vmatprep.subr.mxu0 0.0
    %3370 = vmatpush1.msra.mxu0 0.0
    %3371 = vmatprep.subr.mxu0 0.0
    %3372 = vmatpush1.msra.mxu0 0.0
    %3373 = vmatprep.subr.mxu0 0.0
    %3374 = vmatpush1.msra.mxu0 0.0
    %3375 = vmatprep.subr.mxu0 0.0
    %3376 = vmatpush1.msra.mxu0 0.0
    %3377 = vmatprep.subr.mxu0 0.0
    %3378 = vmatpush1.msra.mxu0 0.0
    %3379 = vmatprep.subr.mxu0 0.0
    %3380 = vmatpush1.msra.mxu0 0.0
    %3381 = vmatprep.subr.mxu0 0.0
    %3382 = vmatpush1.msra.mxu0 0.0
    %3383 = vmatprep.subr.mxu0 0.0
    %3384 = vmatpush1.msra.mxu0 0.0
    %3385 = vmatprep.subr.mxu0 0.0
    %3386 = vmatpush1.msra.mxu0 0.0
    %3387 = vmatprep.subr.mxu0 0.0
    %3388 = vmatpush1.msra.mxu0 0.0
    %3389 = vmatprep.subr.mxu0 0.0
    %3390 = vmatpush1.msra.mxu0 0.0
    %3391 = vmatprep.subr.mxu0 0.0
    %3392 = vmatpush1.msra.mxu0 0.0
    %3393 = vmatprep.subr.mxu0 0.0
    %3394 = vmatpush1.msra.mxu0 0.0
    %3395 = vmatprep.subr.mxu0 0.0
    %3396 = vmatpush1.msra.mxu0 0.0
    %3397 = vmatprep.subr.mxu0 0.0
    %3398 = vmatpush1.msra.mxu0 0.0
    %3399 = vmatprep.subr.mxu0 0.0
    %3400 = vmatpush1.msra.mxu0 0.0
    %3401 = vmatprep.subr.mxu0 0.0
    %3402 = vmatpush1.msra.mxu0 0.0
    %3403 = vmatprep.subr.mxu0 0.0
    %3404 = vmatpush1.msra.mxu0 0.0
    %3405 = vmatprep.subr.mxu0 0.0
    %3406 = vmatpush1.msra.mxu0 0.0
    %3407 = vmatprep.subr.mxu0 0.0
    %3408 = vmatpush1.msra.mxu0 0.0
    %3409 = vmatprep.subr.mxu0 0.0
    %3410 = vmatpush1.msra.mxu0 0.0
    %3411 = vmatprep.subr.mxu0 0.0
    %3412 = vmatpush1.msra.mxu0 0.0
    %3413 = vmatprep.subr.mxu0 0.0
    %3414 = vmatpush1.msra.mxu0 0.0
    %3415 = vmatprep.subr.mxu0 0.0
    %3416 = vmatpush1.msra.mxu0 0.0
    %3417 = vmatprep.mubr.f32.mxu0 0.0
    %3418 = vmatmul.mubr.f32.gmra.mrb[0].mxu0 %v3343
    %v3419 = vpop.f32.mrb[0].mxu0
    %v3420 = vadd.f32 0.0, %v3419
    %v3421 = vpop.f32.mrb[0].mxu0
    %3422 = vmatprep.mubr.f32.mxu0 0.0
    %3423 = vmatmul.mubr.f32.gmra.mrb[0].mxu0 %v3346
    %v3424 = vpop.f32.mrb[0].mxu0
    %v3425 = vadd.f32 0.0, %v3424
    %v3426 = vpop.f32.mrb[0].mxu0
    %3427 = vmatprep.mubr.f32.mxu0 0.0
    %3428 = vmatmul.mubr.f32.gmra.mrb[0].mxu0 %v3349
    %v3429 = vpop.f32.mrb[0].mxu0
    %v3430 = vadd.f32 0.0, %v3429
    %v3431 = vpop.f32.mrb[0].mxu0
    %3432 = vdwg.mxu0
    %3436 = vrot.lane.b32.xlu0 %v3420, 32
    %v3437 = vpop.permute.xlu0 %3436
    %3438 = vrot.lane.b32.xlu0 %v3425, 32
    %v3439 = vpop.permute.xlu0 %3438
    %3440 = vrot.lane.b32.xlu0 %v3430, 32
    %v3441 = vpop.permute.xlu0 %3440
    %v3445 = vsel %vm1048, %v3181, %v3437
    %v3446 = vsel %vm1048, %v3186, %v3439
    %v3447 = vsel %vm1048, %v3191, %v3441
    %v3451 = vrot.slane %v3445, 7
    %v3452 = vrot.slane %v3446, 7
    %v3453 = vsel %vm2041, %v3451, %v3452
    %v3454 = vrot.slane %v3447, 7
    %v3455 = vsel %vm2041, %v3452, %v3454
    %v3457 = vsel %vm2041, %v2951, %v3451
    %v3458 = vld [vmem:[%s12] sm:$0xff]
    %v3459 = vld [vmem:[%s12 + $0x8] sm:$0xff]
    %v3460 = vld [vmem:[%s12 + $0x10] sm:$0xff]
    %v3461 = vld [vmem:[%s12 + $0x18] sm:$0xff]
    %v3462 = vld [vmem:[%s12 + $0x20] sm:$0xff]
    %v3463 = vld [vmem:[%s12 + $0x28] sm:$0xff]
    %v3464 = vld [vmem:[%s12 + $0x30] sm:$0xff]
    %v3465 = vld [vmem:[%s12 + $0x38] sm:$0xff]
    %v3467 = vsel %vm1116, %v2949, 0
    %v3470 = vsel %vm1116, %v2950, 0
    %v3473 = vsel %vm1116, %v3457, 0
    %v3475 = vsel %vm1116, %v3453, 0
    %v3477 = vsel %vm1116, %v3455, 0
    %3479 = vmatprep.subr.mxu0 0.0
    %3480 = vmatpush1.msra.mxu0 %v3458
    %3481 = vmatprep.subr.mxu0 0.0
    %3482 = vmatpush1.msra.mxu0 %v3459
    %3483 = vmatprep.subr.mxu0 0.0
    %3484 = vmatpush1.msra.mxu0 %v3460
    %3485 = vmatprep.subr.mxu0 0.0
    %3486 = vmatpush1.msra.mxu0 %v3461
    %3487 = vmatprep.subr.mxu0 0.0
    %3488 = vmatpush1.msra.mxu0 %v3462
    %3489 = vmatprep.subr.mxu0 0.0
    %3490 = vmatpush1.msra.mxu0 %v3463
    %3491 = vmatprep.subr.mxu0 0.0
    %3492 = vmatpush1.msra.mxu0 %v3464
    %3493 = vmatprep.subr.mxu0 0.0
    %3494 = vmatpush1.msra.mxu0 %v3465
    %3495 = vmatprep.subr.mxu0 0.0
    %3496 = vmatpush1.msra.mxu0 0.0
    %3497 = vmatprep.subr.mxu0 0.0
    %3498 = vmatpush1.msra.mxu0 0.0
    %3499 = vmatprep.subr.mxu0 0.0
    %3500 = vmatpush1.msra.mxu0 0.0
    %3501 = vmatprep.subr.mxu0 0.0
    %3502 = vmatpush1.msra.mxu0 0.0
    %3503 = vmatprep.subr.mxu0 0.0
    %3504 = vmatpush1.msra.mxu0 0.0
    %3505 = vmatprep.subr.mxu0 0.0
    %3506 = vmatpush1.msra.mxu0 0.0
    %3507 = vmatprep.subr.mxu0 0.0
    %3508 = vmatpush1.msra.mxu0 0.0
    %3509 = vmatprep.subr.mxu0 0.0
    %3510 = vmatpush1.msra.mxu0 0.0
    %3511 = vmatprep.subr.mxu0 0.0
    %3512 = vmatpush1.msra.mxu0 0.0
    %3513 = vmatprep.subr.mxu0 0.0
    %3514 = vmatpush1.msra.mxu0 0.0
    %3515 = vmatprep.subr.mxu0 0.0
    %3516 = vmatpush1.msra.mxu0 0.0
    %3517 = vmatprep.subr.mxu0 0.0
    %3518 = vmatpush1.msra.mxu0 0.0
    %3519 = vmatprep.subr.mxu0 0.0
    %3520 = vmatpush1.msra.mxu0 0.0
    %3521 = vmatprep.subr.mxu0 0.0
    %3522 = vmatpush1.msra.mxu0 0.0
    %3523 = vmatprep.subr.mxu0 0.0
    %3524 = vmatpush1.msra.mxu0 0.0
    %3525 = vmatprep.subr.mxu0 0.0
    %3526 = vmatpush1.msra.mxu0 0.0
    %3527 = vmatprep.subr.mxu0 0.0
    %3528 = vmatpush1.msra.mxu0 0.0
    %3529 = vmatprep.subr.mxu0 0.0
    %3530 = vmatpush1.msra.mxu0 0.0
    %3531 = vmatprep.subr.mxu0 0.0
    %3532 = vmatpush1.msra.mxu0 0.0
    %3533 = vmatprep.subr.mxu0 0.0
    %3534 = vmatpush1.msra.mxu0 0.0
    %3535 = vmatprep.subr.mxu0 0.0
    %3536 = vmatpush1.msra.mxu0 0.0
    %3537 = vmatprep.subr.mxu0 0.0
    %3538 = vmatpush1.msra.mxu0 0.0
    %3539 = vmatprep.subr.mxu0 0.0
    %3540 = vmatpush1.msra.mxu0 0.0
    %3541 = vmatprep.subr.mxu0 0.0
    %3542 = vmatpush1.msra.mxu0 0.0
    %3543 = vmatprep.mubr.f32.mxu0 0.0
    %3544 = vmatmul.mubr.f32.gmra.mrb[0].mxu0 %v3467
    %v3545 = vpop.f32.mrb[0].mxu0
    %v3546 = vadd.f32 0.0, %v3545
    %v3547 = vpop.f32.mrb[0].mxu0
    %3548 = vmatprep.mubr.f32.mxu0 0.0
    %3549 = vmatmul.mubr.f32.gmra.mrb[0].mxu0 %v3470
    %v3550 = vpop.f32.mrb[0].mxu0
    %v3551 = vadd.f32 0.0, %v3550
    %v3552 = vpop.f32.mrb[0].mxu0
    %3553 = vmatprep.mubr.f32.mxu0 0.0
    %3554 = vmatmul.mubr.f32.gmra.mrb[0].mxu0 %v3473
    %v3555 = vpop.f32.mrb[0].mxu0
    %v3556 = vadd.f32 0.0, %v3555
    %v3557 = vpop.f32.mrb[0].mxu0
    %3558 = vmatprep.mubr.f32.mxu0 0.0
    %3559 = vmatmul.mubr.f32.gmra.mrb[0].mxu0 %v3475
    %v3560 = vpop.f32.mrb[0].mxu0
    %v3561 = vadd.f32 0.0, %v3560
    %v3562 = vpop.f32.mrb[0].mxu0
    %3563 = vmatprep.mubr.f32.mxu0 0.0
    %3564 = vmatmul.mubr.f32.gmra.mrb[0].mxu0 %v3477
    %v3565 = vpop.f32.mrb[0].mxu0
    %v3566 = vadd.f32 0.0, %v3565
    %v3567 = vpop.f32.mrb[0].mxu0
    %3568 = vdwg.mxu0
    %v3569 = vadd.f32 %v2046, %v3546
    %v3570 = vadd.f32 %v2047, %v3551
    %v3571 = vadd.f32 %v2079, %v3556
    %v3572 = vadd.f32 %v2073, %v3561
    %v3573 = vadd.f32 %v2075, %v3566
    %v3574 = vld [vmem:[%s13] sm:$0x1]
    %v3576 = vlaneseq
    %v3577 = vshrl.u32 %v3576, 7
    %v3578 = vsub.s32 0, %v3577
    %v3579 = vrot.slane %v3574, %v3578
    %v3581 = vadd.f32 %v3569, %v3579
    %v3582 = vadd.f32 %v3570, %v3579
    %v3583 = vadd.f32 %v3571, %v3579
    %v3584 = vadd.f32 %v3572, %v3579
    %v3585 = vadd.f32 %v3573, %v3579
    %v3586 = vsel %vm1048, %v3581, 0.0
    %3587 = vadd.xlane.f32.xlu0 %v3586
    %v3588 = vpop.xlane.xlu0 %3587
    %v3589 = vsel %vm1048, %v3582, 0.0
    %3590 = vadd.xlane.f32.xlu0 %v3589
    %v3591 = vpop.xlane.xlu0 %3590
    %v3592 = vsel %vm1048, %v3583, 0.0
    %3593 = vadd.xlane.f32.xlu0 %v3592
    %v3594 = vpop.xlane.xlu0 %3593
    %v3595 = vsel %vm1048, %v3584, 0.0
    %3596 = vadd.xlane.f32.xlu0 %v3595
    %v3597 = vpop.xlane.xlu0 %3596
    %v3598 = vsel %vm2092, %v3585, 0.0
    %3599 = vadd.xlane.f32.xlu0 %v3598
    %v3600 = vpop.xlane.xlu0 %3599
    %v3601 = vmul.f32 %v3588, %v2096
    %v3602 = vmul.f32 %v3591, %v2096
    %v3603 = vmul.f32 %v3594, %v2096
    %v3604 = vmul.f32 %v3597, %v2096
    %v3605 = vmul.f32 %v3600, %v2096
    %v3606 = vsub.f32 %v3581, %v3601
    %v3607 = vsub.f32 %v3582, %v3602
    %v3608 = vsub.f32 %v3583, %v3603
    %v3609 = vsub.f32 %v3584, %v3604
    %v3610 = vsub.f32 %v3585, %v3605
    %v3611 = vmul.f32 %v3606, %v3606
    %v3612 = vmul.f32 %v3607, %v3607
    %v3613 = vmul.f32 %v3608, %v3608
    %v3614 = vmul.f32 %v3609, %v3609
    %v3615 = vmul.f32 %v3610, %v3610
    %v3616 = vsel %vm1048, %v3611, 0.0
    %3617 = vadd.xlane.f32.xlu0 %v3616
    %v3618 = vpop.xlane.xlu0 %3617
    %v3619 = vsel %vm1048, %v3612, 0.0
    %3620 = vadd.xlane.f32.xlu0 %v3619
    %v3621 = vpop.xlane.xlu0 %3620
    %v3622 = vsel %vm1048, %v3613, 0.0
    %3623 = vadd.xlane.f32.xlu0 %v3622
    %v3624 = vpop.xlane.xlu0 %3623
    %v3625 = vsel %vm1048, %v3614, 0.0
    %3626 = vadd.xlane.f32.xlu0 %v3625
    %v3627 = vpop.xlane.xlu0 %3626
    %v3628 = vsel %vm2092, %v3615, 0.0
    %3629 = vadd.xlane.f32.xlu0 %v3628
    %v3630 = vpop.xlane.xlu0 %3629
    %v3631 = vmul.f32 %v3618, %v2096
    %v3632 = vmul.f32 %v3621, %v2096
    %v3633 = vmul.f32 %v3624, %v2096
    %v3634 = vmul.f32 %v3627, %v2096
    %v3635 = vmul.f32 %v3630, %v2096
    %v3636 = vadd.f32 %v3631, 1e-05
    %v3637 = vadd.f32 %v3632, 1e-05
    %v3638 = vadd.f32 %v3633, 1e-05
    %v3639 = vadd.f32 %v3634, 1e-05
    %v3640 = vadd.f32 %v3635, 1e-05
    %v3641 = vrsqrt.pop %v3636
    %v3642 = vrsqrt.pop %v3637
    %v3643 = vrsqrt.pop %v3638
    %v3644 = vrsqrt.pop %v3639
    %v3645 = vrsqrt.pop %v3640
    %v3646 = vmul.f32 %v3606, %v3641
    %v3647 = vmul.f32 %v3607, %v3642
    %v3648 = vmul.f32 %v3608, %v3643
    %v3649 = vmul.f32 %v3609, %v3644
    %v3650 = vmul.f32 %v3610, %v3645
    %v3651 = vld [vmem:[%s14] sm:$0x1]
    %v3653 = vlaneseq
    %v3654 = vshrl.u32 %v3653, 7
    %v3655 = vsub.s32 0, %v3654
    %v3656 = vrot.slane %v3651, %v3655
    %v3658 = vmul.f32 %v3646, %v3656
    %v3659 = vmul.f32 %v3647, %v3656
    %v3660 = vmul.f32 %v3648, %v3656
    %v3661 = vmul.f32 %v3649, %v3656
    %v3662 = vmul.f32 %v3650, %v3656
    %v3663 = vld [vmem:[%s15] sm:$0x1]
    %v3665 = vlaneseq
    %v3666 = vshrl.u32 %v3665, 7
    %v3667 = vsub.s32 0, %v3666
    %v3668 = vrot.slane %v3663, %v3667
    %v3670 = vadd.f32 %v3658, %v3668
    %v3671 = vadd.f32 %v3659, %v3668
    %v3672 = vadd.f32 %v3660, %v3668
    %v3673 = vadd.f32 %v3661, %v3668
    %v3674 = vadd.f32 %v3662, %v3668
    %v3675 = vld [vmem:[%s16] sm:$0xff]
    %v3676 = vld [vmem:[%s16 + $0x8] sm:$0xff]
    %v3677 = vld [vmem:[%s16 + $0x10] sm:$0xff]
    %v3678 = vld [vmem:[%s16 + $0x18] sm:$0xff]
    %v3679 = vld [vmem:[%s17] sm:$0x1]
    %v3681 = vlaneseq
    %v3682 = vshrl.u32 %v3681, 7
    %v3683 = vsub.s32 0, %v3682
    %v3684 = vrot.slane %v3679, %v3683
    %v3687 = vsel %vm1048, %v3670, 0
    %v3690 = vsel %vm1048, %v3671, 0
    %v3693 = vsel %vm1048, %v3672, 0
    %v3696 = vsel %vm1048, %v3673, 0
    %v3699 = vsel %vm1048, %v3674, 0
    %3701 = vmatprep.subr.mxu0 0.0
    %3702 = vmatpush1.msra.mxu0 %v3675
    %3703 = vmatprep.subr.mxu0 0.0
    %3704 = vmatpush1.msra.mxu0 %v3676
    %3705 = vmatprep.subr.mxu0 0.0
    %3706 = vmatpush1.msra.mxu0 %v3677
    %3707 = vmatprep.subr.mxu0 0.0
    %3708 = vmatpush1.msra.mxu0 %v3678
    %3709 = vmatprep.subr.mxu0 0.0
    %3710 = vmatpush1.msra.mxu0 0.0
    %3711 = vmatprep.subr.mxu0 0.0
    %3712 = vmatpush1.msra.mxu0 0.0
    %3713 = vmatprep.subr.mxu0 0.0
    %3714 = vmatpush1.msra.mxu0 0.0
    %3715 = vmatprep.subr.mxu0 0.0
    %3716 = vmatpush1.msra.mxu0 0.0
    %3717 = vmatprep.subr.mxu0 0.0
    %3718 = vmatpush1.msra.mxu0 0.0
    %3719 = vmatprep.subr.mxu0 0.0
    %3720 = vmatpush1.msra.mxu0 0.0
    %3721 = vmatprep.subr.mxu0 0.0
    %3722 = vmatpush1.msra.mxu0 0.0
    %3723 = vmatprep.subr.mxu0 0.0
    %3724 = vmatpush1.msra.mxu0 0.0
    %3725 = vmatprep.subr.mxu0 0.0
    %3726 = vmatpush1.msra.mxu0 0.0
    %3727 = vmatprep.subr.mxu0 0.0
    %3728 = vmatpush1.msra.mxu0 0.0
    %3729 = vmatprep.subr.mxu0 0.0
    %3730 = vmatpush1.msra.mxu0 0.0
    %3731 = vmatprep.subr.mxu0 0.0
    %3732 = vmatpush1.msra.mxu0 0.0
    %3733 = vmatprep.subr.mxu0 0.0
    %3734 = vmatpush1.msra.mxu0 0.0
    %3735 = vmatprep.subr.mxu0 0.0
    %3736 = vmatpush1.msra.mxu0 0.0
    %3737 = vmatprep.subr.mxu0 0.0
    %3738 = vmatpush1.msra.mxu0 0.0
    %3739 = vmatprep.subr.mxu0 0.0
    %3740 = vmatpush1.msra.mxu0 0.0
    %3741 = vmatprep.subr.mxu0 0.0
    %3742 = vmatpush1.msra.mxu0 0.0
    %3743 = vmatprep.subr.mxu0 0.0
    %3744 = vmatpush1.msra.mxu0 0.0
    %3745 = vmatprep.subr.mxu0 0.0
    %3746 = vmatpush1.msra.mxu0 0.0
    %3747 = vmatprep.subr.mxu0 0.0
    %3748 = vmatpush1.msra.mxu0 0.0
    %3749 = vmatprep.subr.mxu0 0.0
    %3750 = vmatpush1.msra.mxu0 0.0
    %3751 = vmatprep.subr.mxu0 0.0
    %3752 = vmatpush1.msra.mxu0 0.0
    %3753 = vmatprep.subr.mxu0 0.0
    %3754 = vmatpush1.msra.mxu0 0.0
    %3755 = vmatprep.subr.mxu0 0.0
    %3756 = vmatpush1.msra.mxu0 0.0
    %3757 = vmatprep.subr.mxu0 0.0
    %3758 = vmatpush1.msra.mxu0 0.0
    %3759 = vmatprep.subr.mxu0 0.0
    %3760 = vmatpush1.msra.mxu0 0.0
    %3761 = vmatprep.subr.mxu0 0.0
    %3762 = vmatpush1.msra.mxu0 0.0
    %3763 = vmatprep.subr.mxu0 0.0
    %3764 = vmatpush1.msra.mxu0 0.0
    %3765 = vmatprep.mubr.f32.mxu0 0.0
    %3766 = vmatmul.mubr.f32.gmra.mrb[0].mxu0 %v3687
    %v3767 = vpop.f32.mrb[0].mxu0
    %v3768 = vadd.f32 %v3684, %v3767
    %v3769 = vpop.f32.mrb[0].mxu0
    %3770 = vmatprep.mubr.f32.mxu0 0.0
    %3771 = vmatmul.mubr.f32.gmra.mrb[0].mxu0 %v3690
    %v3772 = vpop.f32.mrb[0].mxu0
    %v3773 = vadd.f32 %v3684, %v3772
    %v3774 = vpop.f32.mrb[0].mxu0
    %3775 = vmatprep.mubr.f32.mxu0 0.0
    %3776 = vmatmul.mubr.f32.gmra.mrb[0].mxu0 %v3693
    %v3777 = vpop.f32.mrb[0].mxu0
    %v3778 = vadd.f32 %v3684, %v3777
    %v3779 = vpop.f32.mrb[0].mxu0
    %3780 = vmatprep.mubr.f32.mxu0 0.0
    %3781 = vmatmul.mubr.f32.gmra.mrb[0].mxu0 %v3696
    %v3782 = vpop.f32.mrb[0].mxu0
    %v3783 = vadd.f32 %v3684, %v3782
    %v3784 = vpop.f32.mrb[0].mxu0
    %3785 = vmatprep.mubr.f32.mxu0 0.0
    %3786 = vmatmul.mubr.f32.gmra.mrb[0].mxu0 %v3699
    %v3787 = vpop.f32.mrb[0].mxu0
    %v3788 = vadd.f32 %v3684, %v3787
    %v3789 = vpop.f32.mrb[0].mxu0
    %3790 = vdwg.mxu0
    %v3791 = vmul.f32 %v3768, 0.5
    %v3792 = vmul.f32 %v3773, 0.5
    %v3793 = vmul.f32 %v3778, 0.5
    %v3794 = vmul.f32 %v3783, 0.5
    %v3795 = vmul.f32 %v3788, 0.5
    %v3796 = vmul.f32 %v3768, 0.70710677
    %v3797 = vmul.f32 %v3773, 0.70710677
    %v3798 = vmul.f32 %v3778, 0.70710677
    %v3799 = vmul.f32 %v3783, 0.70710677
    %v3800 = vmul.f32 %v3788, 0.70710677
    %v3801 = verf.f32.pop %v3796
    %v3802 = verf.f32.pop %v3797
    %v3803 = verf.f32.pop %v3798
    %v3804 = verf.f32.pop %v3799
    %v3805 = verf.f32.pop %v3800
    %v3806 = vadd.f32 %v3801, 1.0
    %v3807 = vadd.f32 %v3802, 1.0
    %v3808 = vadd.f32 %v3803, 1.0
    %v3809 = vadd.f32 %v3804, 1.0
    %v3810 = vadd.f32 %v3805, 1.0
    %v3811 = vmul.f32 %v3791, %v3806
    %v3812 = vmul.f32 %v3792, %v3807
    %v3813 = vmul.f32 %v3793, %v3808
    %v3814 = vmul.f32 %v3794, %v3809
    %v3815 = vmul.f32 %v3795, %v3810
    %v3816 = vld [vmem:[%s18] sm:$0xff]
    %v3818 = vsel %vm997, %v3811, 0
    %v3821 = vsel %vm997, %v3812, 0
    %v3824 = vsel %vm997, %v3813, 0
    %v3827 = vsel %vm997, %v3814, 0
    %v3830 = vsel %vm997, %v3815, 0
    %3832 = vmatprep.subr.mxu0 0.0
    %3833 = vmatpush1.msra.mxu0 %v3816
    %3834 = vmatprep.subr.mxu0 0.0
    %3835 = vmatpush1.msra.mxu0 0.0
    %3836 = vmatprep.subr.mxu0 0.0
    %3837 = vmatpush1.msra.mxu0 0.0
    %3838 = vmatprep.subr.mxu0 0.0
    %3839 = vmatpush1.msra.mxu0 0.0
    %3840 = vmatprep.subr.mxu0 0.0
    %3841 = vmatpush1.msra.mxu0 0.0
    %3842 = vmatprep.subr.mxu0 0.0
    %3843 = vmatpush1.msra.mxu0 0.0
    %3844 = vmatprep.subr.mxu0 0.0
    %3845 = vmatpush1.msra.mxu0 0.0
    %3846 = vmatprep.subr.mxu0 0.0
    %3847 = vmatpush1.msra.mxu0 0.0
    %3848 = vmatprep.subr.mxu0 0.0
    %3849 = vmatpush1.msra.mxu0 0.0
    %3850 = vmatprep.subr.mxu0 0.0
    %3851 = vmatpush1.msra.mxu0 0.0
    %3852 = vmatprep.subr.mxu0 0.0
    %3853 = vmatpush1.msra.mxu0 0.0
    %3854 = vmatprep.subr.mxu0 0.0
    %3855 = vmatpush1.msra.mxu0 0.0
    %3856 = vmatprep.subr.mxu0 0.0
    %3857 = vmatpush1.msra.mxu0 0.0
    %3858 = vmatprep.subr.mxu0 0.0
    %3859 = vmatpush1.msra.mxu0 0.0
    %3860 = vmatprep.subr.mxu0 0.0
    %3861 = vmatpush1.msra.mxu0 0.0
    %3862 = vmatprep.subr.mxu0 0.0
    %3863 = vmatpush1.msra.mxu0 0.0
    %3864 = vmatprep.subr.mxu0 0.0
    %3865 = vmatpush1.msra.mxu0 0.0
    %3866 = vmatprep.subr.mxu0 0.0
    %3867 = vmatpush1.msra.mxu0 0.0
    %3868 = vmatprep.subr.mxu0 0.0
    %3869 = vmatpush1.msra.mxu0 0.0
    %3870 = vmatprep.subr.mxu0 0.0
    %3871 = vmatpush1.msra.mxu0 0.0
    %3872 = vmatprep.subr.mxu0 0.0
    %3873 = vmatpush1.msra.mxu0 0.0
    %3874 = vmatprep.subr.mxu0 0.0
    %3875 = vmatpush1.msra.mxu0 0.0
    %3876 = vmatprep.subr.mxu0 0.0
    %3877 = vmatpush1.msra.mxu0 0.0
    %3878 = vmatprep.subr.mxu0 0.0
    %3879 = vmatpush1.msra.mxu0 0.0
    %3880 = vmatprep.subr.mxu0 0.0
    %3881 = vmatpush1.msra.mxu0 0.0
    %3882 = vmatprep.subr.mxu0 0.0
    %3883 = vmatpush1.msra.mxu0 0.0
    %3884 = vmatprep.subr.mxu0 0.0
    %3885 = vmatpush1.msra.mxu0 0.0
    %3886 = vmatprep.subr.mxu0 0.0
    %3887 = vmatpush1.msra.mxu0 0.0
    %3888 = vmatprep.subr.mxu0 0.0
    %3889 = vmatpush1.msra.mxu0 0.0
    %3890 = vmatprep.subr.mxu0 0.0
    %3891 = vmatpush1.msra.mxu0 0.0
    %3892 = vmatprep.subr.mxu0 0.0
    %3893 = vmatpush1.msra.mxu0 0.0
    %3894 = vmatprep.subr.mxu0 0.0
    %3895 = vmatpush1.msra.mxu0 0.0
    %3896 = vmatprep.mubr.f32.mxu0 0.0
    %3897 = vmatmul.mubr.f32.gmra.mrb[0].mxu0 %v3818
    %v3898 = vpop.f32.mrb[0].mxu0
    %v3899 = vpop.f32.mrb[0].mxu0
    %3900 = vmatprep.mubr.f32.mxu0 0.0
    %3901 = vmatmul.mubr.f32.gmra.mrb[0].mxu0 %v3821
    %v3902 = vpop.f32.mrb[0].mxu0
    %v3903 = vadd.f32 0.0, %v3902
    %v3904 = vpop.f32.mrb[0].mxu0
    %3905 = vmatprep.mubr.f32.mxu0 0.0
    %3906 = vmatmul.mubr.f32.gmra.mrb[0].mxu0 %v3824
    %v3907 = vpop.f32.mrb[0].mxu0
    %v3908 = vpop.f32.mrb[0].mxu0
    %3909 = vmatprep.mubr.f32.mxu0 0.0
    %3910 = vmatmul.mubr.f32.gmra.mrb[0].mxu0 %v3827
    %v3911 = vpop.f32.mrb[0].mxu0
    %v3912 = vadd.f32 0.0, %v3911
    %v3913 = vpop.f32.mrb[0].mxu0
    %3914 = vmatprep.mubr.f32.mxu0 0.0
    %3915 = vmatmul.mubr.f32.gmra.mrb[0].mxu0 %v3830
    %v3916 = vpop.f32.mrb[0].mxu0
    %v3917 = vpop.f32.mrb[0].mxu0
    %3918 = vdwg.mxu0
    %v3919 = vadd.f32 %v3582, %v3903
    %v3920 = vadd.f32 %v3584, %v3912
    %v3921 = vld [vmem:[%s19] sm:$0x1]
    %v3923 = vlaneseq
    %v3924 = vshrl.u32 %v3923, 7
    %v3925 = vsub.s32 0, %v3924
    %v3926 = vrot.slane %v3921, %v3925
    %v3928 = vadd.f32 %v3919, %v3926
    %v3929 = vadd.f32 %v3920, %v3926
    %v3930 = vsel %vm2041, %v3928, %v3929
    %v3931 = vld [vmem:[%s20] sm:$0xff]
    %v3932 = vld [vmem:[%s20 + $0x8] sm:$0xff]
    %v3933 = vld [vmem:[%s20 + $0x10] sm:$0xff]
    %v3934 = vld [vmem:[%s20 + $0x18] sm:$0xff]
    %v3935 = vld [vmem:[%s21] sm:$0x1]
    %v3937 = vlaneseq
    %v3938 = vshrl.u32 %v3937, 7
    %v3939 = vsub.s32 0, %v3938
    %v3940 = vrot.slane %v3935, %v3939
    %v3943 = vsel %vm1048, %v3930, 0
    %3945 = vmatprep.subr.mxu0 0.0
    %3946 = vmatpush1.msra.mxu0 %v3931
    %3947 = vmatprep.subr.mxu0 0.0
    %3948 = vmatpush1.msra.mxu0 %v3932
    %3949 = vmatprep.subr.mxu0 0.0
    %3950 = vmatpush1.msra.mxu0 %v3933
    %3951 = vmatprep.subr.mxu0 0.0
    %3952 = vmatpush1.msra.mxu0 %v3934
    %3953 = vmatprep.subr.mxu0 0.0
    %3954 = vmatpush1.msra.mxu0 0.0
    %3955 = vmatprep.subr.mxu0 0.0
    %3956 = vmatpush1.msra.mxu0 0.0
    %3957 = vmatprep.subr.mxu0 0.0
    %3958 = vmatpush1.msra.mxu0 0.0
    %3959 = vmatprep.subr.mxu0 0.0
    %3960 = vmatpush1.msra.mxu0 0.0
    %3961 = vmatprep.subr.mxu0 0.0
    %3962 = vmatpush1.msra.mxu0 0.0
    %3963 = vmatprep.subr.mxu0 0.0
    %3964 = vmatpush1.msra.mxu0 0.0
    %3965 = vmatprep.subr.mxu0 0.0
    %3966 = vmatpush1.msra.mxu0 0.0
    %3967 = vmatprep.subr.mxu0 0.0
    %3968 = vmatpush1.msra.mxu0 0.0
    %3969 = vmatprep.subr.mxu0 0.0
    %3970 = vmatpush1.msra.mxu0 0.0
    %3971 = vmatprep.subr.mxu0 0.0
    %3972 = vmatpush1.msra.mxu0 0.0
    %3973 = vmatprep.subr.mxu0 0.0
    %3974 = vmatpush1.msra.mxu0 0.0
    %3975 = vmatprep.subr.mxu0 0.0
    %3976 = vmatpush1.msra.mxu0 0.0
    %3977 = vmatprep.subr.mxu0 0.0
    %3978 = vmatpush1.msra.mxu0 0.0
    %3979 = vmatprep.subr.mxu0 0.0
    %3980 = vmatpush1.msra.mxu0 0.0
    %3981 = vmatprep.subr.mxu0 0.0
    %3982 = vmatpush1.msra.mxu0 0.0
    %3983 = vmatprep.subr.mxu0 0.0
    %3984 = vmatpush1.msra.mxu0 0.0
    %3985 = vmatprep.subr.mxu0 0.0
    %3986 = vmatpush1.msra.mxu0 0.0
    %3987 = vmatprep.subr.mxu0 0.0
    %3988 = vmatpush1.msra.mxu0 0.0
    %3989 = vmatprep.subr.mxu0 0.0
    %3990 = vmatpush1.msra.mxu0 0.0
    %3991 = vmatprep.subr.mxu0 0.0
    %3992 = vmatpush1.msra.mxu0 0.0
    %3993 = vmatprep.subr.mxu0 0.0
    %3994 = vmatpush1.msra.mxu0 0.0
    %3995 = vmatprep.subr.mxu0 0.0
    %3996 = vmatpush1.msra.mxu0 0.0
    %3997 = vmatprep.subr.mxu0 0.0
    %3998 = vmatpush1.msra.mxu0 0.0
    %3999 = vmatprep.subr.mxu0 0.0
    %4000 = vmatpush1.msra.mxu0 0.0
    %4001 = vmatprep.subr.mxu0 0.0
    %4002 = vmatpush1.msra.mxu0 0.0
    %4003 = vmatprep.subr.mxu0 0.0
    %4004 = vmatpush1.msra.mxu0 0.0
    %4005 = vmatprep.subr.mxu0 0.0
    %4006 = vmatpush1.msra.mxu0 0.0
    %4007 = vmatprep.subr.mxu0 0.0
    %4008 = vmatpush1.msra.mxu0 0.0
    %4009 = vmatprep.mubr.f32.mxu0 0.0
    %4010 = vmatmul.mubr.f32.gmra.mrb[0].mxu0 %v3943
    %v4011 = vpop.f32.mrb[0].mxu0
    %v4012 = vadd.f32 %v3940, %v4011
    %v4013 = vpop.f32.mrb[0].mxu0
    %4014 = vdwg.mxu0
    %v4015 = vld [vmem:[%s22] sm:$0x1]
    %v4017 = vlaneseq
    %v4018 = vshrl.u32 %v4017, 7
    %v4019 = vsub.s32 0, %v4018
    %v4020 = vrot.slane %v4015, %v4019
    %v4022 = vmul.f32 %v4012, %v4020
    %v4023 = vld [vmem:[%s23] sm:$0x1]
    %v4025 = vlaneseq
    %v4026 = vshrl.u32 %v4025, 7
    %v4027 = vsub.s32 0, %v4026
    %v4028 = vrot.slane %v4023, %v4027
    %v4030 = vadd.f32 %v4022, %v4028
    %v4031 = vmax.f32 %v4030, 0.0
    %v4032 = vld [vmem:[%s24] sm:$0xff]
    %v4033 = vld [vmem:[%s24 + $0x8] sm:$0xff]
    %v4034 = vld [vmem:[%s24 + $0x10] sm:$0xff]
    %v4035 = vld [vmem:[%s24 + $0x18] sm:$0xff]
    %v4036 = vld [vmem:[%s24 + $0x20] sm:$0xff]
    %v4037 = vld [vmem:[%s24 + $0x28] sm:$0xff]
    %v4038 = vld [vmem:[%s24 + $0x30] sm:$0xff]
    %v4039 = vld [vmem:[%s24 + $0x38] sm:$0xff]
    %v4040 = vld [vmem:[%s25] sm:$0x1]
    %v4042 = vlaneseq
    %v4043 = vshrl.u32 %v4042, 7
    %v4044 = vsub.s32 0, %v4043
    %v4045 = vrot.slane %v4040, %v4044
    %v4048 = vsel %vm1116, %v4031, 0
    %4050 = vmatprep.subr.mxu0 0.0
    %4051 = vmatpush1.msra.mxu0 %v4032
    %4052 = vmatprep.subr.mxu0 0.0
    %4053 = vmatpush1.msra.mxu0 %v4033
    %4054 = vmatprep.subr.mxu0 0.0
    %4055 = vmatpush1.msra.mxu0 %v4034
    %4056 = vmatprep.subr.mxu0 0.0
    %4057 = vmatpush1.msra.mxu0 %v4035
    %4058 = vmatprep.subr.mxu0 0.0
    %4059 = vmatpush1.msra.mxu0 %v4036
    %4060 = vmatprep.subr.mxu0 0.0
    %4061 = vmatpush1.msra.mxu0 %v4037
    %4062 = vmatprep.subr.mxu0 0.0
    %4063 = vmatpush1.msra.mxu0 %v4038
    %4064 = vmatprep.subr.mxu0 0.0
    %4065 = vmatpush1.msra.mxu0 %v4039
    %4066 = vmatprep.subr.mxu0 0.0
    %4067 = vmatpush1.msra.mxu0 0.0
    %4068 = vmatprep.subr.mxu0 0.0
    %4069 = vmatpush1.msra.mxu0 0.0
    %4070 = vmatprep.subr.mxu0 0.0
    %4071 = vmatpush1.msra.mxu0 0.0
    %4072 = vmatprep.subr.mxu0 0.0
    %4073 = vmatpush1.msra.mxu0 0.0
    %4074 = vmatprep.subr.mxu0 0.0
    %4075 = vmatpush1.msra.mxu0 0.0
    %4076 = vmatprep.subr.mxu0 0.0
    %4077 = vmatpush1.msra.mxu0 0.0
    %4078 = vmatprep.subr.mxu0 0.0
    %4079 = vmatpush1.msra.mxu0 0.0
    %4080 = vmatprep.subr.mxu0 0.0
    %4081 = vmatpush1.msra.mxu0 0.0
    %4082 = vmatprep.subr.mxu0 0.0
    %4083 = vmatpush1.msra.mxu0 0.0
    %4084 = vmatprep.subr.mxu0 0.0
    %4085 = vmatpush1.msra.mxu0 0.0
    %4086 = vmatprep.subr.mxu0 0.0
    %4087 = vmatpush1.msra.mxu0 0.0
    %4088 = vmatprep.subr.mxu0 0.0
    %4089 = vmatpush1.msra.mxu0 0.0
    %4090 = vmatprep.subr.mxu0 0.0
    %4091 = vmatpush1.msra.mxu0 0.0
    %4092 = vmatprep.subr.mxu0 0.0
    %4093 = vmatpush1.msra.mxu0 0.0
    %4094 = vmatprep.subr.mxu0 0.0
    %4095 = vmatpush1.msra.mxu0 0.0
    %4096 = vmatprep.subr.mxu0 0.0
    %4097 = vmatpush1.msra.mxu0 0.0
    %4098 = vmatprep.subr.mxu0 0.0
    %4099 = vmatpush1.msra.mxu0 0.0
    %4100 = vmatprep.subr.mxu0 0.0
    %4101 = vmatpush1.msra.mxu0 0.0
    %4102 = vmatprep.subr.mxu0 0.0
    %4103 = vmatpush1.msra.mxu0 0.0
    %4104 = vmatprep.subr.mxu0 0.0
    %4105 = vmatpush1.msra.mxu0 0.0
    %4106 = vmatprep.subr.mxu0 0.0
    %4107 = vmatpush1.msra.mxu0 0.0
    %4108 = vmatprep.subr.mxu0 0.0
    %4109 = vmatpush1.msra.mxu0 0.0
    %4110 = vmatprep.subr.mxu0 0.0
    %4111 = vmatpush1.msra.mxu0 0.0
    %4112 = vmatprep.subr.mxu0 0.0
    %4113 = vmatpush1.msra.mxu0 0.0
    %4114 = vmatprep.mubr.f32.mxu0 0.0
    %4115 = vmatmul.mubr.f32.gmra.mrb[0].mxu0 %v4048
    %v4116 = vpop.f32.mrb[0].mxu0
    %v4117 = vadd.f32 %v4045, %v4116
    %v4118 = vpop.f32.mrb[0].mxu0
    %4119 = vdwg.mxu0
    %vm4120 = vcmask 58368
    %4121 = vst.msk [vmem:[#allocation3] sm:$0x3] %vm4120, %v4117
    // Predicated region
    $region106: #{hsinet_forward.1} parent=1 // pred_check
      _
    $region107: #{hsinet_forward.1} parent=1 // pred_check_branch
      %4123 = sbr.rel (0) target = $region109
    $region108: #{hsinet_forward.1} parent=1 // pred_region
      %s4125 = ssub.s32 32, 32
      %4126 = vsyncadd [#allocation4], %s4125
      %s4128 = sshll.u32 [#allocation3], 4
      %s4129 = int_to_ptr.vmem [resolvable:$true] %s4128
      %4131 = dma.vmem_to_hbm [thread:$0]  %s4129, 32, %s26, [#allocation4]
    $region109: #{hsinet_forward.1} parent=1 // pred_fallthru
      _
    // Predicated region
    $region110: #{hsinet_forward.1} parent=1 // pred_check
      _
    $region111: #{hsinet_forward.1} parent=1 // pred_check_branch
      %4133 = sbr.rel (0) target = $region113
    $region112: #{hsinet_forward.1} parent=1 // pred_region
      %4134 = dma.done [#allocation4], 32
    $region113: #{hsinet_forward.1} parent=1 // pred_fallthru
      _
    %4135 = vsyncpa [#allocation4], 1

</llo_original>
